<compile_context>
chip_gen: v7x
topology: tpu7x:2x2x1
jax: 0.10.0
libtpu: 0.0.40
codegen_flags: <defaults>
</compile_context>

<pallas_src>
import functools

import jax
import jax.numpy as jnp
import numpy as np
from jax.experimental import pallas as pl
from jax.experimental.pallas import tpu as pltpu


def gate_kernel(x_ref, wcat_ref, bcat_ref, out_ref, max_acc, sum_acc,
                *, top_k, num_experts, hw):
    """Grid = (batch blocks ["parallel"], spatial chunks ["arbitrary"])."""
    k = pl.program_id(1)
    TB, C, T_HW = x_ref.shape

    # ---- init lane-resident running max / running sum on the first chunk -------
    @pl.when(k == 0)
    def _init():
        max_acc[...] = jnp.full(max_acc.shape, -jnp.inf, dtype=max_acc.dtype)
        sum_acc[...] = jnp.zeros(sum_acc.shape, dtype=sum_acc.dtype)

    # ---- consume this chunk in 128-lane slices: VPU-only accumulation ----------
    # (upcast fused per slice -> no full-chunk f32 temp for bf16 inputs; the XLU
    #  cross-lane reduce is deferred to the epilogue.)
    masked_tail = (hw % T_HW) != 0          # static: only when grid uses cdiv
    base = k * T_HW

    def _accum(off, width):
        xg = x_ref[:, :, off:off + width].astype(jnp.float32)   # (TB, C, width)
        if masked_tail:
            lane = jax.lax.broadcasted_iota(jnp.int32, xg.shape, 2)
            valid = (base + off + lane) < hw
            xg_max = jnp.where(valid, xg, -jnp.inf)
            xg_sum = jnp.where(valid, xg, 0.0)
        else:
            xg_max = xg
            xg_sum = xg
        max_acc[:, :, :width] = jnp.maximum(max_acc[:, :, :width], xg_max)
        sum_acc[:, :, :width] = sum_acc[:, :, :width] + xg_sum

    n_full, rem = divmod(T_HW, 128)
    for g in range(n_full):                 # static unrolled loop over vreg groups
        _accum(g * 128, 128)
    if rem:
        _accum(n_full * 128, rem)

    # ---- epilogue on the last chunk (tiny & unhideable -> keep it short) -------
    @pl.when(k == pl.num_programs(1) - 1)
    def _finalize():
        E = num_experts
        # AdaptiveMaxPool2d(1) + AdaptiveAvgPool2d(1): single cross-lane reduce.
        pooled = (jnp.max(max_acc[...], axis=-1)
                  + jnp.sum(sum_acc[...], axis=-1) * (1.0 / hw))          # (TB, C)

        # fused fc1|fc0: one (TB,C)@(C,2E) MXU matmul instead of two
        z = jnp.dot(pooled, wcat_ref[...],
                    preferred_element_type=jnp.float32) + bcat_ref[...]   # (TB, 2E)
        raw = z[:, :E]                                                    # fc1 pre-act
        pre = z[:, E:]                                                    # fc0 pre-act

        logits = jnp.where(raw >= 0.0, raw, 0.2 * raw)                    # LeakyReLU(0.2)
        noise = jnp.maximum(pre, 0.0) + jnp.log1p(jnp.exp(-jnp.abs(pre)))  # Softplus

        # normalize noise across experts (torch.std default: unbiased, /(E-1)).
        # NOTE: like the PyTorch reference, no epsilon -> NaN if noise is constant.
        n_mean = jnp.mean(noise, axis=1, keepdims=True)
        diff = noise - n_mean
        n_var = jnp.sum(diff * diff, axis=1, keepdims=True) * (1.0 / (E - 1))
        norm_noise = diff * jax.lax.rsqrt(n_var)                          # EUP rsqrt

        # top-k selection on logits + norm_noise via ranks (ties -> lower index;
        # keeps exactly top_k entries, matching topk+scatter mask).  E is tiny,
        # so the unrolled compare loop is a handful of VPU ops in epilogue slack.
        scores = logits + norm_noise
        col_idx = jax.lax.broadcasted_iota(jnp.int32, scores.shape, 1)
        rank = jnp.zeros_like(scores)
        for j in range(E):
            col = scores[:, j:j + 1]
            beats = (col > scores) | ((col == scores) & (j < col_idx))
            rank = rank + beats.astype(jnp.float32)
        keep = rank < float(top_k)

        # mask non-top-k (LeakyReLU'd) logits with -inf, then softmax over experts.
        # Exact division (not approx reciprocal): runs once per batch block, and
        # approx=True left rows summing to ~1.002.
        masked = jnp.where(keep, logits, -jnp.inf)
        m = jnp.max(masked, axis=1, keepdims=True)
        e = jnp.exp(masked - m)
        denom = jnp.sum(e, axis=1, keepdims=True)
        out_ref[...] = e / denom


def _choose_hw_tile(tb, c, hw, itemsize, x_budget_bytes, min_block_bytes):
    """Pick the spatial tile T_HW:
       * whole HW if the double-buffered x block fits the budget,
       * else the largest 128-lane multiple within the budget (preferring one
         that divides HW so no masked tail chunk is needed),
       * never below a per-step floor (tiny tiles fall off the HBM roofline)."""
    per_lane = 2 * tb * c * itemsize            # double-buffered x bytes per lane of T_HW
    cap = max(int(x_budget_bytes // per_lane), 1)
    floor = max(int(min_block_bytes // per_lane), 1)
    cap = max(cap, floor)
    if hw <= cap:
        return hw                               # whole spatial extent in one block
    t = (cap // 128) * 128
    if t < 128:
        return min(hw, 128)                     # smallest legal 128-lane tile
    td = t
    while td >= 128:                            # prefer a tile dividing HW (no tail mask)
        if hw % td == 0:
            return td
        td -= 128
    return t                                    # cdiv grid + masked tail chunk


def gate_network(x_nchw, w1, b1, w0, b0, top_k,
                 *, x_block_budget_bytes=24 * 1024 * 1024,
                 min_block_bytes=4 * 1024 * 1024,
                 vmem_limit_bytes=None):
    """GateNetwork forward.

    x_nchw : (B, C, H, W), float32 or bfloat16 (bf16 halves the HBM read; the
             kernel upcasts per 128-lane slice and accumulates in f32).
    w1, w0 : (E, C) fc1 / fc0 weights (PyTorch layout);  b1, b0 : (E,).
    Returns (B, E) float32 gating coefficients.

    Generation tuning: on v5e/v6e (128 MiB VMEM) raise x_block_budget_bytes to
    ~48-64 MiB for large H*W; on v7x (64 MiB VMEM) keep the total <= ~48 MiB.
    """
    B, C, H, W = x_nchw.shape
    E = w1.shape[0]
    HW = H * W
    x3 = x_nchw.reshape(B, C, HW)                      # free reshape (NCHW -> B,C,HW)

    # Fused weights: one (C, 2E) matmul instead of two (C, E) ones.
    wcat = jnp.concatenate([w1.T, w0.T], axis=1).astype(jnp.float32)        # (C, 2E)
    bcat = jnp.concatenate([b1, b0], axis=0).reshape(1, 2 * E).astype(jnp.float32)

    # Batch tiling -> "parallel" grid axis. Keep nb >= 2 when B allows so both
    # v7x TensorCores split the (memory-bound) x read; no-op on v5e/v6e.
    if B % 8 == 0 and B >= 16:
        TB = 8
    else:
        TB = B
    assert B % TB == 0
    nb = B // TB

    # Spatial tiling -> "arbitrary" reduction axis, double-buffered by BlockSpec.
    T_HW = _choose_hw_tile(TB, C, HW, x3.dtype.itemsize,
                           x_block_budget_bytes, min_block_bytes)
    nk = pl.cdiv(HW, T_HW)

    # Explicit scoped-VMEM limit derived from the actual footprint:
    # double-buffered x block + two (TB,C,128) f32 scratch buffers + weights.
    if vmem_limit_bytes is None:
        x_bytes = 2 * TB * C * T_HW * x3.dtype.itemsize
        scratch_bytes = 2 * TB * C * 128 * 4
        w_bytes = 2 * (C + 1) * 2 * E * 4
        vmem_limit_bytes = min(max(x_bytes + scratch_bytes + w_bytes + (8 << 20),
                                   32 << 20),
                               96 << 20)

    kernel = functools.partial(gate_kernel, top_k=int(top_k),
                               num_experts=int(E), hw=int(HW))

    return pl.pallas_call(
        kernel,
        out_shape=jax.ShapeDtypeStruct((B, E), jnp.float32),
        grid_spec=pltpu.PrefetchScalarGridSpec(
            num_scalar_prefetch=0,
            grid=(nb, nk),
            in_specs=[
                pl.BlockSpec((TB, C, T_HW), lambda b, k: (b, 0, k)),    # x chunk
                pl.BlockSpec((C, 2 * E), lambda b, k: (0, 0)),          # fused weight
                pl.BlockSpec((1, 2 * E), lambda b, k: (0, 0)),          # fused bias
            ],
            out_specs=pl.BlockSpec((TB, E), lambda b, k: (b, 0)),
            scratch_shapes=[
                pltpu.VMEM((TB, C, 128), jnp.float32),   # lane-resident running max
                pltpu.VMEM((TB, C, 128), jnp.float32),   # lane-resident running sum
            ],
        ),
        compiler_params=pltpu.CompilerParams(
            # batch axis parallel (megacore on v7x); spatial axis is the reduction.
            dimension_semantics=("parallel", "arbitrary"),
            vmem_limit_bytes=int(vmem_limit_bytes),
        ),
    )(x3, wcat, bcat)


def gate_reference(x_nchw, w1, b1, w0, b0, top_k):
    """Pure-JAX reference of GateNetwork.forward. Returns (gating, scores)."""
    B, C, H, W = x_nchw.shape
    x3 = x_nchw.astype(jnp.float32).reshape(B, C, H * W)
    pooled = jnp.max(x3, axis=-1) + jnp.mean(x3, axis=-1)
    logits = pooled @ w1.T + b1
    logits = jnp.where(logits >= 0, logits, 0.2 * logits)
    noise = jax.nn.softplus(pooled @ w0.T + b0)
    n_mean = jnp.mean(noise, axis=1, keepdims=True)
    n_std = jnp.std(noise, axis=1, keepdims=True, ddof=1)
    scores = logits + (noise - n_mean) / n_std
    idx = jnp.argsort(-scores, axis=1)[:, :top_k]
    mask = jnp.zeros_like(scores).at[jnp.arange(B)[:, None], idx].set(1.0)
    masked = jnp.where(mask > 0, logits, -jnp.inf)
    return jax.nn.softmax(masked, axis=1), scores


def _check(tag, out, ref_out, ref_scores, top_k):
    out = np.asarray(out)
    ref_out = np.asarray(ref_out)
    scores = np.asarray(ref_scores)
    assert np.all(np.isfinite(out)), f"{tag}: non-finite gating coefficients"
    np.testing.assert_allclose(out.sum(axis=1), 1.0, atol=1e-3,
                               err_msg=f"{tag}: rows do not sum to 1")
    nnz = (out > 0).sum(axis=1)
    assert np.all(nnz == top_k), f"{tag}: expected exactly top_k nonzeros, got {nnz}"
    # Elementwise check on rows whose top-k boundary is unambiguous (reference vs
    # kernel matmul precision can legitimately flip near-exact score ties).
    s = np.sort(scores, axis=1)[:, ::-1]
    stable = (s[:, top_k - 1] - s[:, top_k]) > 5e-2
    np.testing.assert_allclose(out[stable], ref_out[stable], atol=2e-3, rtol=2e-3,
                               err_msg=f"{tag}: mismatch on well-separated rows")


if __name__ == "__main__":
    # Shapes consistent with GateNetwork(channels, num_experts, k) inside Decoder.
    B, C, H, W = 16, 64, 16, 16           # input_size = C = 64
    E, TOP_K = 16, 4                      # num_experts = 16, top_k = 4

    key = jax.random.PRNGKey(0)
    kx, kb1, kw0, kb0 = jax.random.split(key, 4)

    x = jax.random.normal(kx, (B, C, H, W), dtype=jnp.float32)
    w1 = jnp.zeros((E, C), jnp.float32)                       # init.zeros_(fc1.weight)
    b1 = jax.random.uniform(kb1, (E,), jnp.float32, -0.5, 0.5)
    w0 = jax.random.normal(kw0, (E, C), jnp.float32) * 0.05
    b0 = jax.random.uniform(kb0, (E,), jnp.float32, -0.5, 0.5)

    ref_out, ref_scores = gate_reference(x, w1, b1, w0, b0, TOP_K)

    # 1) default tiling (whole spatial extent fits the budget -> one chunk, 2 batch blocks)
    out1 = gate_network(x, w1, b1, w0, b0, TOP_K)
    jax.block_until_ready(out1)
    _check("default-tiling", out1, ref_out, ref_scores, TOP_K)

    # 2) small VMEM budget -> multi-chunk spatial reduction (pipelined accumulator path)
    out2 = gate_network(x, w1, b1, w0, b0, TOP_K,
                        x_block_budget_bytes=512 * 1024, min_block_bytes=0)
    jax.block_until_ready(out2)
    _check("multi-chunk", out2, ref_out, ref_scores, TOP_K)

    # 3) bf16 input, multi-chunk (halves the HBM read; kernel upcasts per 128-lane slice)
    x_bf16 = x.astype(jnp.bfloat16)
    ref_out_bf, ref_scores_bf = gate_reference(x_bf16, w1, b1, w0, b0, TOP_K)
    out3 = gate_network(x_bf16, w1, b1, w0, b0, TOP_K,
                        x_block_budget_bytes=256 * 1024, min_block_bytes=0)
    jax.block_until_ready(out3)
    _check("bf16-input", out3, ref_out_bf, ref_scores_bf, TOP_K)

    print("KERNEL_OK")
</pallas_src>

<mosaic_0001>
module attributes {stable_mosaic.version = 11 : i64} {
  func.func @gate_kernel(%arg0: i32, %arg1: i32, %arg2: memref<8x64x256xf32, #tpu.memory_space<vmem>>, %arg3: memref<64x32xf32, #tpu.memory_space<vmem>>, %arg4: memref<1x32xf32, #tpu.memory_space<vmem>>, %arg5: memref<8x16xf32, #tpu.memory_space<vmem>>, %arg6: memref<8x64x128xf32, #tpu.memory_space<vmem>>, %arg7: memref<8x64x128xf32, #tpu.memory_space<vmem>>) attributes {dimension_semantics = [#tpu.dimension_semantics<parallel>, #tpu.dimension_semantics<arbitrary>], iteration_bounds = array<i64: 2, 1>, scalar_prefetch = 0 : i64, scratch_operands = 2 : i64, tpu.core_type = #tpu.core_type<tc>, window_params = [{transform_indices = @transform_0, window_bounds = array<i64: 8, 64, 256>}, {pipeline_mode = #tpu.pipeline_mode<synchronous>, transform_indices = @transform_1, window_bounds = array<i64: 64, 32>}, {pipeline_mode = #tpu.pipeline_mode<synchronous>, transform_indices = @transform_2, window_bounds = array<i64: 1, 32>}, {transform_indices = @transform_3, window_bounds = array<i64: 8, 16>}]} {
    %c0_i32 = arith.constant 0 : i32
    %0 = arith.cmpi eq, %arg1, %c0_i32 : i32
    %1 = arith.extui %0 : i1 to i32
    %c0_i32_0 = arith.constant 0 : i32
    %2 = arith.cmpi ne, %1, %c0_i32_0 : i32
    scf.if %2 {
      %cst = arith.constant 0xFF800000 : f32
      %20 = vector.broadcast %cst : f32 to vector<8x64x128xf32>
      %c0_31 = arith.constant 0 : index
      %c0_32 = arith.constant 0 : index
      %c0_33 = arith.constant 0 : index
      %21 = vector.load %arg6[%c0_31, %c0_32, %c0_33] : memref<8x64x128xf32, #tpu.memory_space<vmem>>, vector<8x64x128xf32>
      tpu.vector_store %arg6[%c0_31, %c0_32, %c0_33], %20 {strides = array<i32>} : memref<8x64x128xf32, #tpu.memory_space<vmem>>, vector<8x64x128xf32>,
      %cst_34 = arith.constant 0.000000e+00 : f32
      %22 = vector.broadcast %cst_34 : f32 to vector<8x64x128xf32>
      %c0_35 = arith.constant 0 : index
      %c0_36 = arith.constant 0 : index
      %c0_37 = arith.constant 0 : index
      %23 = vector.load %arg7[%c0_35, %c0_36, %c0_37] : memref<8x64x128xf32, #tpu.memory_space<vmem>>, vector<8x64x128xf32>
      tpu.vector_store %arg7[%c0_35, %c0_36, %c0_37], %22 {strides = array<i32>} : memref<8x64x128xf32, #tpu.memory_space<vmem>>, vector<8x64x128xf32>,
    } else {
    }
    %c0 = arith.constant 0 : index
    %c0_1 = arith.constant 0 : index
    %c0_2 = arith.constant 0 : index
    %3 = vector.load %arg2[%c0, %c0_1, %c0_2] : memref<8x64x256xf32, #tpu.memory_space<vmem>>, vector<8x64x128xf32>
    %c0_3 = arith.constant 0 : index
    %c0_4 = arith.constant 0 : index
    %c0_5 = arith.constant 0 : index
    %4 = vector.load %arg6[%c0_3, %c0_4, %c0_5] : memref<8x64x128xf32, #tpu.memory_space<vmem>>, vector<8x64x128xf32>
    %5 = arith.maximumf %4, %3 : vector<8x64x128xf32>
    %c0_6 = arith.constant 0 : index
    %c0_7 = arith.constant 0 : index
    %c0_8 = arith.constant 0 : index
    %6 = vector.load %arg6[%c0_6, %c0_7, %c0_8] : memref<8x64x128xf32, #tpu.memory_space<vmem>>, vector<8x64x128xf32>
    tpu.vector_store %arg6[%c0_6, %c0_7, %c0_8], %5 {strides = array<i32>} : memref<8x64x128xf32, #tpu.memory_space<vmem>>, vector<8x64x128xf32>,
    %c0_9 = arith.constant 0 : index
    %c0_10 = arith.constant 0 : index
    %c0_11 = arith.constant 0 : index
    %7 = vector.load %arg7[%c0_9, %c0_10, %c0_11] : memref<8x64x128xf32, #tpu.memory_space<vmem>>, vector<8x64x128xf32>
    %8 = arith.addf %7, %3 : vector<8x64x128xf32>
    %c0_12 = arith.constant 0 : index
    %c0_13 = arith.constant 0 : index
    %c0_14 = arith.constant 0 : index
    %9 = vector.load %arg7[%c0_12, %c0_13, %c0_14] : memref<8x64x128xf32, #tpu.memory_space<vmem>>, vector<8x64x128xf32>
    tpu.vector_store %arg7[%c0_12, %c0_13, %c0_14], %8 {strides = array<i32>} : memref<8x64x128xf32, #tpu.memory_space<vmem>>, vector<8x64x128xf32>,
    %c0_15 = arith.constant 0 : index
    %c0_16 = arith.constant 0 : index
    %c128 = arith.constant 128 : index
    %10 = vector.load %arg2[%c0_15, %c0_16, %c128] : memref<8x64x256xf32, #tpu.memory_space<vmem>>, vector<8x64x128xf32>
    %c0_17 = arith.constant 0 : index
    %c0_18 = arith.constant 0 : index
    %c0_19 = arith.constant 0 : index
    %11 = vector.load %arg6[%c0_17, %c0_18, %c0_19] : memref<8x64x128xf32, #tpu.memory_space<vmem>>, vector<8x64x128xf32>
    %12 = arith.maximumf %11, %10 : vector<8x64x128xf32>
    %c0_20 = arith.constant 0 : index
    %c0_21 = arith.constant 0 : index
    %c0_22 = arith.constant 0 : index
    %13 = vector.load %arg6[%c0_20, %c0_21, %c0_22] : memref<8x64x128xf32, #tpu.memory_space<vmem>>, vector<8x64x128xf32>
    tpu.vector_store %arg6[%c0_20, %c0_21, %c0_22], %12 {strides = array<i32>} : memref<8x64x128xf32, #tpu.memory_space<vmem>>, vector<8x64x128xf32>,
    %c0_23 = arith.constant 0 : index
    %c0_24 = arith.constant 0 : index
    %c0_25 = arith.constant 0 : index
    %14 = vector.load %arg7[%c0_23, %c0_24, %c0_25] : memref<8x64x128xf32, #tpu.memory_space<vmem>>, vector<8x64x128xf32>
    %15 = arith.addf %14, %10 : vector<8x64x128xf32>
    %c0_26 = arith.constant 0 : index
    %c0_27 = arith.constant 0 : index
    %c0_28 = arith.constant 0 : index
    %16 = vector.load %arg7[%c0_26, %c0_27, %c0_28] : memref<8x64x128xf32, #tpu.memory_space<vmem>>, vector<8x64x128xf32>
    tpu.vector_store %arg7[%c0_26, %c0_27, %c0_28], %15 {strides = array<i32>} : memref<8x64x128xf32, #tpu.memory_space<vmem>>, vector<8x64x128xf32>,
    %c0_i32_29 = arith.constant 0 : i32
    %17 = arith.cmpi eq, %arg1, %c0_i32_29 : i32
    %18 = arith.extui %17 : i1 to i32
    %c0_i32_30 = arith.constant 0 : i32
    %19 = arith.cmpi ne, %18, %c0_i32_30 : i32
    scf.if %19 {
      %c0_31 = arith.constant 0 : index
      %c0_32 = arith.constant 0 : index
      %c0_33 = arith.constant 0 : index
      %20 = vector.load %arg6[%c0_31, %c0_32, %c0_33] : memref<8x64x128xf32, #tpu.memory_space<vmem>>, vector<8x64x128xf32>
      %cst = arith.constant dense<0xFF800000> : vector<8x64xf32>
      %21 = vector.multi_reduction <maximumf>, %20, %cst [2] : vector<8x64x128xf32> to vector<8x64xf32>
      %c0_34 = arith.constant 0 : index
      %c0_35 = arith.constant 0 : index
      %c0_36 = arith.constant 0 : index
      %22 = vector.load %arg7[%c0_34, %c0_35, %c0_36] : memref<8x64x128xf32, #tpu.memory_space<vmem>>, vector<8x64x128xf32>
      %cst_37 = arith.constant dense<0.000000e+00> : vector<8x64xf32>
      %23 = vector.multi_reduction <add>, %22, %cst_37 [2] : vector<8x64x128xf32> to vector<8x64xf32>
      %cst_38 = arith.constant 3.906250e-03 : f32
      %24 = vector.broadcast %cst_38 : f32 to vector<8x64xf32>
      %25 = arith.mulf %23, %24 : vector<8x64xf32>
      %26 = arith.addf %21, %25 : vector<8x64xf32>
      %c0_39 = arith.constant 0 : index
      %c0_40 = arith.constant 0 : index
      %27 = vector.load %arg3[%c0_39, %c0_40] : memref<64x32xf32, #tpu.memory_space<vmem>>, vector<64x32xf32>
      %cst_41 = arith.constant dense<0.000000e+00> : vector<8x32xf32>
      %28 = tpu.matmul %26, %27, %cst_41 {dimension_numbers = #tpu.dot_dimension_numbers<[1], [0], [0], [1], [0, 0, 1, 1], [], []>} : vector<8x64xf32>, vector<64x32xf32>, vector<8x32xf32> -> vector<8x32xf32>
      %c0_42 = arith.constant 0 : index
      %c0_43 = arith.constant 0 : index
      %29 = vector.load %arg4[%c0_42, %c0_43] : memref<1x32xf32, #tpu.memory_space<vmem>>, vector<1x32xf32>
      %30 = vector.broadcast %29 : vector<1x32xf32> to vector<8x32xf32>
      %31 = arith.addf %28, %30 : vector<8x32xf32>
      %32 = vector.extract_strided_slice %31 {offsets = [0, 0], sizes = [8, 16], strides = [1, 1]} : vector<8x32xf32> to vector<8x16xf32>
      %33 = vector.extract_strided_slice %31 {offsets = [0, 16], sizes = [8, 16], strides = [1, 1]} : vector<8x32xf32> to vector<8x16xf32>
      %cst_44 = arith.constant 0.000000e+00 : f32
      %34 = vector.broadcast %cst_44 : f32 to vector<8x16xf32>
      %35 = arith.cmpf oge, %32, %34 : vector<8x16xf32>
      %cst_45 = arith.constant 2.000000e-01 : f32
      %36 = vector.broadcast %cst_45 : f32 to vector<8x16xf32>
      %37 = arith.mulf %36, %32 : vector<8x16xf32>
      %38 = arith.select %35, %32, %37 : vector<8x16xi1>, vector<8x16xf32>
      %cst_46 = arith.constant 0.000000e+00 : f32
      %39 = vector.broadcast %cst_46 : f32 to vector<8x16xf32>
      %40 = arith.maximumf %33, %39 : vector<8x16xf32>
      %41 = math.absf %33 : vector<8x16xf32>
      %cst_47 = arith.constant 0.000000e+00 : f32
      %42 = vector.broadcast %cst_47 : f32 to vector<8x16xf32>
      %43 = arith.subf %42, %41 : vector<8x16xf32>
      %44 = math.exp %43 : vector<8x16xf32>
      %45 = math.log1p %44 : vector<8x16xf32>
      %46 = arith.addf %40, %45 : vector<8x16xf32>
      %cst_48 = arith.constant dense<0.000000e+00> : vector<8xf32>
      %47 = vector.multi_reduction <add>, %46, %cst_48 [1] : vector<8x16xf32> to vector<8xf32>
      %48 = vector.shape_cast %47 : vector<8xf32> to vector<8x1xf32>
      %cst_49 = arith.constant 1.600000e+01 : f32
      %49 = vector.broadcast %cst_49 : f32 to vector<8x1xf32>
      %50 = arith.divf %48, %49 : vector<8x1xf32>
      %51 = vector.broadcast %50 : vector<8x1xf32> to vector<8x16xf32>
      %52 = arith.subf %46, %51 : vector<8x16xf32>
      %53 = arith.mulf %52, %52 : vector<8x16xf32>
      %cst_50 = arith.constant dense<0.000000e+00> : vector<8xf32>
      %54 = vector.multi_reduction <add>, %53, %cst_50 [1] : vector<8x16xf32> to vector<8xf32>
      %55 = vector.shape_cast %54 : vector<8xf32> to vector<8x1xf32>
      %cst_51 = arith.constant 0.0666666701 : f32
      %56 = vector.broadcast %cst_51 : f32 to vector<8x1xf32>
      %57 = arith.mulf %55, %56 : vector<8x1xf32>
      %58 = math.rsqrt %57 : vector<8x1xf32>
      %59 = vector.broadcast %58 : vector<8x1xf32> to vector<8x16xf32>
      %60 = arith.mulf %52, %59 : vector<8x16xf32>
      %61 = arith.addf %38, %60 : vector<8x16xf32>
      %62 = tpu.iota {dimensions = array<i32: 1>} : vector<8x16xi32>
      %cst_52 = arith.constant 0.000000e+00 : f32
      %63 = vector.broadcast %cst_52 : f32 to vector<8x16xf32>
      %64 = vector.extract_strided_slice %61 {offsets = [0, 0], sizes = [8, 1], strides = [1, 1]} : vector<8x16xf32> to vector<8x1xf32>
      %65 = vector.broadcast %64 : vector<8x1xf32> to vector<8x16xf32>
      %66 = arith.cmpf ogt, %65, %61 : vector<8x16xf32>
      %67 = vector.broadcast %64 : vector<8x1xf32> to vector<8x16xf32>
      %68 = arith.cmpf oeq, %67, %61 : vector<8x16xf32>
      %c0_i32_53 = arith.constant 0 : i32
      %69 = vector.broadcast %c0_i32_53 : i32 to vector<8x16xi32>
      %70 = arith.cmpi sgt, %62, %69 : vector<8x16xi32>
      %71 = arith.andi %68, %70 : vector<8x16xi1>
      %72 = arith.ori %66, %71 : vector<8x16xi1>
      %73 = arith.extui %72 : vector<8x16xi1> to vector<8x16xi32>
      %74 = arith.sitofp %73 : vector<8x16xi32> to vector<8x16xf32>
      %75 = arith.addf %63, %74 : vector<8x16xf32>
      %76 = vector.extract_strided_slice %61 {offsets = [0, 1], sizes = [8, 1], strides = [1, 1]} : vector<8x16xf32> to vector<8x1xf32>
      %77 = vector.broadcast %76 : vector<8x1xf32> to vector<8x16xf32>
      %78 = arith.cmpf ogt, %77, %61 : vector<8x16xf32>
      %79 = vector.broadcast %76 : vector<8x1xf32> to vector<8x16xf32>
      %80 = arith.cmpf oeq, %79, %61 : vector<8x16xf32>
      %c1_i32 = arith.constant 1 : i32
      %81 = vector.broadcast %c1_i32 : i32 to vector<8x16xi32>
      %82 = arith.cmpi sgt, %62, %81 : vector<8x16xi32>
      %83 = arith.andi %80, %82 : vector<8x16xi1>
      %84 = arith.ori %78, %83 : vector<8x16xi1>
      %85 = arith.extui %84 : vector<8x16xi1> to vector<8x16xi32>
      %86 = arith.sitofp %85 : vector<8x16xi32> to vector<8x16xf32>
      %87 = arith.addf %75, %86 : vector<8x16xf32>
      %88 = vector.extract_strided_slice %61 {offsets = [0, 2], sizes = [8, 1], strides = [1, 1]} : vector<8x16xf32> to vector<8x1xf32>
      %89 = vector.broadcast %88 : vector<8x1xf32> to vector<8x16xf32>
      %90 = arith.cmpf ogt, %89, %61 : vector<8x16xf32>
      %91 = vector.broadcast %88 : vector<8x1xf32> to vector<8x16xf32>
      %92 = arith.cmpf oeq, %91, %61 : vector<8x16xf32>
      %c2_i32 = arith.constant 2 : i32
      %93 = vector.broadcast %c2_i32 : i32 to vector<8x16xi32>
      %94 = arith.cmpi sgt, %62, %93 : vector<8x16xi32>
      %95 = arith.andi %92, %94 : vector<8x16xi1>
      %96 = arith.ori %90, %95 : vector<8x16xi1>
      %97 = arith.extui %96 : vector<8x16xi1> to vector<8x16xi32>
      %98 = arith.sitofp %97 : vector<8x16xi32> to vector<8x16xf32>
      %99 = arith.addf %87, %98 : vector<8x16xf32>
      %100 = vector.extract_strided_slice %61 {offsets = [0, 3], sizes = [8, 1], strides = [1, 1]} : vector<8x16xf32> to vector<8x1xf32>
      %101 = vector.broadcast %100 : vector<8x1xf32> to vector<8x16xf32>
      %102 = arith.cmpf ogt, %101, %61 : vector<8x16xf32>
      %103 = vector.broadcast %100 : vector<8x1xf32> to vector<8x16xf32>
      %104 = arith.cmpf oeq, %103, %61 : vector<8x16xf32>
      %c3_i32 = arith.constant 3 : i32
      %105 = vector.broadcast %c3_i32 : i32 to vector<8x16xi32>
      %106 = arith.cmpi sgt, %62, %105 : vector<8x16xi32>
      %107 = arith.andi %104, %106 : vector<8x16xi1>
      %108 = arith.ori %102, %107 : vector<8x16xi1>
      %109 = arith.extui %108 : vector<8x16xi1> to vector<8x16xi32>
      %110 = arith.sitofp %109 : vector<8x16xi32> to vector<8x16xf32>
      %111 = arith.addf %99, %110 : vector<8x16xf32>
      %112 = vector.extract_strided_slice %61 {offsets = [0, 4], sizes = [8, 1], strides = [1, 1]} : vector<8x16xf32> to vector<8x1xf32>
      %113 = vector.broadcast %112 : vector<8x1xf32> to vector<8x16xf32>
      %114 = arith.cmpf ogt, %113, %61 : vector<8x16xf32>
      %115 = vector.broadcast %112 : vector<8x1xf32> to vector<8x16xf32>
      %116 = arith.cmpf oeq, %115, %61 : vector<8x16xf32>
      %c4_i32 = arith.constant 4 : i32
      %117 = vector.broadcast %c4_i32 : i32 to vector<8x16xi32>
      %118 = arith.cmpi sgt, %62, %117 : vector<8x16xi32>
      %119 = arith.andi %116, %118 : vector<8x16xi1>
      %120 = arith.ori %114, %119 : vector<8x16xi1>
      %121 = arith.extui %120 : vector<8x16xi1> to vector<8x16xi32>
      %122 = arith.sitofp %121 : vector<8x16xi32> to vector<8x16xf32>
      %123 = arith.addf %111, %122 : vector<8x16xf32>
      %124 = vector.extract_strided_slice %61 {offsets = [0, 5], sizes = [8, 1], strides = [1, 1]} : vector<8x16xf32> to vector<8x1xf32>
      %125 = vector.broadcast %124 : vector<8x1xf32> to vector<8x16xf32>
      %126 = arith.cmpf ogt, %125, %61 : vector<8x16xf32>
      %127 = vector.broadcast %124 : vector<8x1xf32> to vector<8x16xf32>
      %128 = arith.cmpf oeq, %127, %61 : vector<8x16xf32>
      %c5_i32 = arith.constant 5 : i32
      %129 = vector.broadcast %c5_i32 : i32 to vector<8x16xi32>
      %130 = arith.cmpi sgt, %62, %129 : vector<8x16xi32>
      %131 = arith.andi %128, %130 : vector<8x16xi1>
      %132 = arith.ori %126, %131 : vector<8x16xi1>
      %133 = arith.extui %132 : vector<8x16xi1> to vector<8x16xi32>
      %134 = arith.sitofp %133 : vector<8x16xi32> to vector<8x16xf32>
      %135 = arith.addf %123, %134 : vector<8x16xf32>
      %136 = vector.extract_strided_slice %61 {offsets = [0, 6], sizes = [8, 1], strides = [1, 1]} : vector<8x16xf32> to vector<8x1xf32>
      %137 = vector.broadcast %136 : vector<8x1xf32> to vector<8x16xf32>
      %138 = arith.cmpf ogt, %137, %61 : vector<8x16xf32>
      %139 = vector.broadcast %136 : vector<8x1xf32> to vector<8x16xf32>
      %140 = arith.cmpf oeq, %139, %61 : vector<8x16xf32>
      %c6_i32 = arith.constant 6 : i32
      %141 = vector.broadcast %c6_i32 : i32 to vector<8x16xi32>
      %142 = arith.cmpi sgt, %62, %141 : vector<8x16xi32>
      %143 = arith.andi %140, %142 : vector<8x16xi1>
      %144 = arith.ori %138, %143 : vector<8x16xi1>
      %145 = arith.extui %144 : vector<8x16xi1> to vector<8x16xi32>
      %146 = arith.sitofp %145 : vector<8x16xi32> to vector<8x16xf32>
      %147 = arith.addf %135, %146 : vector<8x16xf32>
      %148 = vector.extract_strided_slice %61 {offsets = [0, 7], sizes = [8, 1], strides = [1, 1]} : vector<8x16xf32> to vector<8x1xf32>
      %149 = vector.broadcast %148 : vector<8x1xf32> to vector<8x16xf32>
      %150 = arith.cmpf ogt, %149, %61 : vector<8x16xf32>
      %151 = vector.broadcast %148 : vector<8x1xf32> to vector<8x16xf32>
      %152 = arith.cmpf oeq, %151, %61 : vector<8x16xf32>
      %c7_i32 = arith.constant 7 : i32
      %153 = vector.broadcast %c7_i32 : i32 to vector<8x16xi32>
      %154 = arith.cmpi sgt, %62, %153 : vector<8x16xi32>
      %155 = arith.andi %152, %154 : vector<8x16xi1>
      %156 = arith.ori %150, %155 : vector<8x16xi1>
      %157 = arith.extui %156 : vector<8x16xi1> to vector<8x16xi32>
      %158 = arith.sitofp %157 : vector<8x16xi32> to vector<8x16xf32>
      %159 = arith.addf %147, %158 : vector<8x16xf32>
      %160 = vector.extract_strided_slice %61 {offsets = [0, 8], sizes = [8, 1], strides = [1, 1]} : vector<8x16xf32> to vector<8x1xf32>
      %161 = vector.broadcast %160 : vector<8x1xf32> to vector<8x16xf32>
      %162 = arith.cmpf ogt, %161, %61 : vector<8x16xf32>
      %163 = vector.broadcast %160 : vector<8x1xf32> to vector<8x16xf32>
      %164 = arith.cmpf oeq, %163, %61 : vector<8x16xf32>
      %c8_i32 = arith.constant 8 : i32
      %165 = vector.broadcast %c8_i32 : i32 to vector<8x16xi32>
      %166 = arith.cmpi sgt, %62, %165 : vector<8x16xi32>
      %167 = arith.andi %164, %166 : vector<8x16xi1>
      %168 = arith.ori %162, %167 : vector<8x16xi1>
      %169 = arith.extui %168 : vector<8x16xi1> to vector<8x16xi32>
      %170 = arith.sitofp %169 : vector<8x16xi32> to vector<8x16xf32>
      %171 = arith.addf %159, %170 : vector<8x16xf32>
      %172 = vector.extract_strided_slice %61 {offsets = [0, 9], sizes = [8, 1], strides = [1, 1]} : vector<8x16xf32> to vector<8x1xf32>
      %173 = vector.broadcast %172 : vector<8x1xf32> to vector<8x16xf32>
      %174 = arith.cmpf ogt, %173, %61 : vector<8x16xf32>
      %175 = vector.broadcast %172 : vector<8x1xf32> to vector<8x16xf32>
      %176 = arith.cmpf oeq, %175, %61 : vector<8x16xf32>
      %c9_i32 = arith.constant 9 : i32
      %177 = vector.broadcast %c9_i32 : i32 to vector<8x16xi32>
      %178 = arith.cmpi sgt, %62, %177 : vector<8x16xi32>
      %179 = arith.andi %176, %178 : vector<8x16xi1>
      %180 = arith.ori %174, %179 : vector<8x16xi1>
      %181 = arith.extui %180 : vector<8x16xi1> to vector<8x16xi32>
      %182 = arith.sitofp %181 : vector<8x16xi32> to vector<8x16xf32>
      %183 = arith.addf %171, %182 : vector<8x16xf32>
      %184 = vector.extract_strided_slice %61 {offsets = [0, 10], sizes = [8, 1], strides = [1, 1]} : vector<8x16xf32> to vector<8x1xf32>
      %185 = vector.broadcast %184 : vector<8x1xf32> to vector<8x16xf32>
      %186 = arith.cmpf ogt, %185, %61 : vector<8x16xf32>
      %187 = vector.broadcast %184 : vector<8x1xf32> to vector<8x16xf32>
      %188 = arith.cmpf oeq, %187, %61 : vector<8x16xf32>
      %c10_i32 = arith.constant 10 : i32
      %189 = vector.broadcast %c10_i32 : i32 to vector<8x16xi32>
      %190 = arith.cmpi sgt, %62, %189 : vector<8x16xi32>
      %191 = arith.andi %188, %190 : vector<8x16xi1>
      %192 = arith.ori %186, %191 : vector<8x16xi1>
      %193 = arith.extui %192 : vector<8x16xi1> to vector<8x16xi32>
      %194 = arith.sitofp %193 : vector<8x16xi32> to vector<8x16xf32>
      %195 = arith.addf %183, %194 : vector<8x16xf32>
      %196 = vector.extract_strided_slice %61 {offsets = [0, 11], sizes = [8, 1], strides = [1, 1]} : vector<8x16xf32> to vector<8x1xf32>
      %197 = vector.broadcast %196 : vector<8x1xf32> to vector<8x16xf32>
      %198 = arith.cmpf ogt, %197, %61 : vector<8x16xf32>
      %199 = vector.broadcast %196 : vector<8x1xf32> to vector<8x16xf32>
      %200 = arith.cmpf oeq, %199, %61 : vector<8x16xf32>
      %c11_i32 = arith.constant 11 : i32
      %201 = vector.broadcast %c11_i32 : i32 to vector<8x16xi32>
      %202 = arith.cmpi sgt, %62, %201 : vector<8x16xi32>
      %203 = arith.andi %200, %202 : vector<8x16xi1>
      %204 = arith.ori %198, %203 : vector<8x16xi1>
      %205 = arith.extui %204 : vector<8x16xi1> to vector<8x16xi32>
      %206 = arith.sitofp %205 : vector<8x16xi32> to vector<8x16xf32>
      %207 = arith.addf %195, %206 : vector<8x16xf32>
      %208 = vector.extract_strided_slice %61 {offsets = [0, 12], sizes = [8, 1], strides = [1, 1]} : vector<8x16xf32> to vector<8x1xf32>
      %209 = vector.broadcast %208 : vector<8x1xf32> to vector<8x16xf32>
      %210 = arith.cmpf ogt, %209, %61 : vector<8x16xf32>
      %211 = vector.broadcast %208 : vector<8x1xf32> to vector<8x16xf32>
      %212 = arith.cmpf oeq, %211, %61 : vector<8x16xf32>
      %c12_i32 = arith.constant 12 : i32
      %213 = vector.broadcast %c12_i32 : i32 to vector<8x16xi32>
      %214 = arith.cmpi sgt, %62, %213 : vector<8x16xi32>
      %215 = arith.andi %212, %214 : vector<8x16xi1>
      %216 = arith.ori %210, %215 : vector<8x16xi1>
      %217 = arith.extui %216 : vector<8x16xi1> to vector<8x16xi32>
      %218 = arith.sitofp %217 : vector<8x16xi32> to vector<8x16xf32>
      %219 = arith.addf %207, %218 : vector<8x16xf32>
      %220 = vector.extract_strided_slice %61 {offsets = [0, 13], sizes = [8, 1], strides = [1, 1]} : vector<8x16xf32> to vector<8x1xf32>
      %221 = vector.broadcast %220 : vector<8x1xf32> to vector<8x16xf32>
      %222 = arith.cmpf ogt, %221, %61 : vector<8x16xf32>
      %223 = vector.broadcast %220 : vector<8x1xf32> to vector<8x16xf32>
      %224 = arith.cmpf oeq, %223, %61 : vector<8x16xf32>
      %c13_i32 = arith.constant 13 : i32
      %225 = vector.broadcast %c13_i32 : i32 to vector<8x16xi32>
      %226 = arith.cmpi sgt, %62, %225 : vector<8x16xi32>
      %227 = arith.andi %224, %226 : vector<8x16xi1>
      %228 = arith.ori %222, %227 : vector<8x16xi1>
      %229 = arith.extui %228 : vector<8x16xi1> to vector<8x16xi32>
      %230 = arith.sitofp %229 : vector<8x16xi32> to vector<8x16xf32>
      %231 = arith.addf %219, %230 : vector<8x16xf32>
      %232 = vector.extract_strided_slice %61 {offsets = [0, 14], sizes = [8, 1], strides = [1, 1]} : vector<8x16xf32> to vector<8x1xf32>
      %233 = vector.broadcast %232 : vector<8x1xf32> to vector<8x16xf32>
      %234 = arith.cmpf ogt, %233, %61 : vector<8x16xf32>
      %235 = vector.broadcast %232 : vector<8x1xf32> to vector<8x16xf32>
      %236 = arith.cmpf oeq, %235, %61 : vector<8x16xf32>
      %c14_i32 = arith.constant 14 : i32
      %237 = vector.broadcast %c14_i32 : i32 to vector<8x16xi32>
      %238 = arith.cmpi sgt, %62, %237 : vector<8x16xi32>
      %239 = arith.andi %236, %238 : vector<8x16xi1>
      %240 = arith.ori %234, %239 : vector<8x16xi1>
      %241 = arith.extui %240 : vector<8x16xi1> to vector<8x16xi32>
      %242 = arith.sitofp %241 : vector<8x16xi32> to vector<8x16xf32>
      %243 = arith.addf %231, %242 : vector<8x16xf32>
      %244 = vector.extract_strided_slice %61 {offsets = [0, 15], sizes = [8, 1], strides = [1, 1]} : vector<8x16xf32> to vector<8x1xf32>
      %245 = vector.broadcast %244 : vector<8x1xf32> to vector<8x16xf32>
      %246 = arith.cmpf ogt, %245, %61 : vector<8x16xf32>
      %247 = vector.broadcast %244 : vector<8x1xf32> to vector<8x16xf32>
      %248 = arith.cmpf oeq, %247, %61 : vector<8x16xf32>
      %c15_i32 = arith.constant 15 : i32
      %249 = vector.broadcast %c15_i32 : i32 to vector<8x16xi32>
      %250 = arith.cmpi sgt, %62, %249 : vector<8x16xi32>
      %251 = arith.andi %248, %250 : vector<8x16xi1>
      %252 = arith.ori %246, %251 : vector<8x16xi1>
      %253 = arith.extui %252 : vector<8x16xi1> to vector<8x16xi32>
      %254 = arith.sitofp %253 : vector<8x16xi32> to vector<8x16xf32>
      %255 = arith.addf %243, %254 : vector<8x16xf32>
      %cst_54 = arith.constant 4.000000e+00 : f32
      %256 = vector.broadcast %cst_54 : f32 to vector<8x16xf32>
      %257 = arith.cmpf olt, %255, %256 : vector<8x16xf32>
      %cst_55 = arith.constant 0xFF800000 : f32
      %258 = vector.broadcast %cst_55 : f32 to vector<8x16xf32>
      %259 = arith.select %257, %38, %258 : vector<8x16xi1>, vector<8x16xf32>
      %cst_56 = arith.constant dense<0xFF800000> : vector<8xf32>
      %260 = vector.multi_reduction <maximumf>, %259, %cst_56 [1] : vector<8x16xf32> to vector<8xf32>
      %261 = vector.shape_cast %260 : vector<8xf32> to vector<8x1xf32>
      %262 = vector.broadcast %261 : vector<8x1xf32> to vector<8x16xf32>
      %263 = arith.subf %259, %262 : vector<8x16xf32>
      %264 = math.exp %263 : vector<8x16xf32>
      %cst_57 = arith.constant dense<0.000000e+00> : vector<8xf32>
      %265 = vector.multi_reduction <add>, %264, %cst_57 [1] : vector<8x16xf32> to vector<8xf32>
      %266 = vector.shape_cast %265 : vector<8xf32> to vector<8x1xf32>
      %267 = vector.broadcast %266 : vector<8x1xf32> to vector<8x16xf32>
      %268 = arith.divf %264, %267 : vector<8x16xf32>
      %c0_58 = arith.constant 0 : index
      %c0_59 = arith.constant 0 : index
      %269 = vector.load %arg5[%c0_58, %c0_59] : memref<8x16xf32, #tpu.memory_space<vmem>>, vector<8x16xf32>
      tpu.vector_store %arg5[%c0_58, %c0_59], %268 {strides = array<i32>} : memref<8x16xf32, #tpu.memory_space<vmem>>, vector<8x16xf32>,
    } else {
    }
    return
  }
  func.func @transform_0(%arg0: i32, %arg1: i32) -> (i32, i32, i32) {
    %c0_i32 = arith.constant 0 : i32
    %c0_i32_0 = arith.constant 0 : i32
    return %arg0, %c0_i32, %arg1 : i32, i32, i32
  }
  func.func @transform_1(%arg0: i32, %arg1: i32) -> (i32, i32) {
    %c0_i32 = arith.constant 0 : i32
    %c0_i32_0 = arith.constant 0 : i32
    %c0_i32_1 = arith.constant 0 : i32
    return %c0_i32, %c0_i32_0 : i32, i32
  }
  func.func @transform_2(%arg0: i32, %arg1: i32) -> (i32, i32) {
    %c0_i32 = arith.constant 0 : i32
    %c0_i32_0 = arith.constant 0 : i32
    %c0_i32_1 = arith.constant 0 : i32
    return %c0_i32, %c0_i32_0 : i32, i32
  }
  func.func @transform_3(%arg0: i32, %arg1: i32) -> (i32, i32) {
    %c0_i32 = arith.constant 0 : i32
    %c0_i32_0 = arith.constant 0 : i32
    return %arg0, %c0_i32 : i32, i32
  }
}

</mosaic_0001>

<llo_original>
// kernel: tpu_custom_call.1
$region0: #{tpu_custom_call.1}
  #allocation0 [shape = 'u32[]', space=smem, size = 0x4, offset = 0x4, fixed_abs, tag = 'smem constant byte address 0x4 - core index']
  #allocation1 [shape = 'u32[144,128]{1,0:T(1,128)}', space=vmem, size = 0x12000, scoped, tag = 'internal scratch']
  #allocation2 [shape = 'f32[8,64,128]{2,1,0:T(8,128)}', space=vmem, size = 0x40000, scoped, tag = 'scratch operand']
  #allocation3 [shape = 'f32[8,64,128]{2,1,0:T(8,128)}', space=vmem, size = 0x40000, scoped, tag = 'scratch operand']
  %s0 = inlined_call_operand.hbm [shape: f32[16,64,256], index: 0, kind: input, shape index: {}]
  %s1 = inlined_call_operand.vmem [shape: f32[64,32], index: 1, kind: input, shape index: {}]
  %s2 = inlined_call_operand.vmem [shape: f32[1,32], index: 2, kind: input, shape index: {}]
  %s3 = inlined_call_operand.hbm [shape: f32[16,16], index: 3, kind: output, shape index: {}]
  %s4 = sld [smem:[#allocation0]]
  $region57: #{tpu_custom_call.1} parent=0
    _
  %s6 = ssub.s32 1, %s4
  %s7 = scalar_select 0, %s6, %s4
  $region1: #{tpu_custom_call.1} parent=0
    #allocation4 [shape = 'u8[1048576]{0}', space=vmem, size = 0x100000, scoped, tag = 'input window, operand 0']
    #allocation5 [shape = 's32[2]{0}', space=sflag, size = 0x8, scoped, tag = 'scoped memory for tpu_custom_call.1']
    #allocation6 [shape = 's32[2]{0}', space=sflag, size = 0x8, scoped, tag = 'scoped memory for tpu_custom_call.1']
    #allocation7 [shape = 'u8[8192]{0}', space=vmem, size = 0x2000, scoped, tag = 'output window, operand 0']
    %8 = vsyncpa [#allocation5], 0
    %s9 = scalar_lea.sflag [#allocation5], 1
    %10 = vsyncpa %s9, 0
    %11 = vsyncpa [#allocation6], 0
    %s12 = scalar_lea.sflag [#allocation6], 1
    %13 = vsyncpa %s12, 0
    loop: start=0, step=1, limit=4
    $region2: #{tpu_custom_call.1} parent=1 // loop_pre_header
      _
    $region3: #{tpu_custom_call.1} parent=1 // loop_header
      %s15 = sphi 0, %s19
      %p16 = scmp.ge.s32.totalorder %s15, 4
      %s22 = sphi 0, %s34
      %s23 = sphi 0, %s30
      %s24 = sphi 0, %s22
      %s25 = sphi 0, %s23
      %s26 = sphi 0, %s24
      %s27 = sphi 0, %s25
      %s39 = sphi 0, %s41
      %s42 = sphi 0, %s39
      %s43 = sphi 0, %s42
      %s59 = sphi 0, %s43
      %s63 = sphi 0, %s63
      %s65 = sphi 0, %s63
      %s66 = sphi 0, %s65
      %s80 = sphi 0, %s66
      %s84 = sphi 0, %s84
      %s86 = sphi 0, %s84
      %s87 = sphi 0, %s86
      %s101 = sphi 0, %s87
      %s107 = sphi 0, %s109
      %s110 = sphi 0, %s107
      %s111 = sphi 0, %s110
      %s127 = sphi 0, %s111
    $region4: #{tpu_custom_call.1} parent=1 // loop_header_branch
      %18 = sbr.rel (%p16) target = $region8
    $region5: #{tpu_custom_call.1} parent=1 // loop_body
      %s20 = ssub.s32 %s15, 1
      %s21 = ssub.s32 %s15, 2
      %s28 = sadd.s32 1, %s23
      %p29 = scmp.ge.s32.totalorder %s28, 1
      %s30 = scalar_select %p29, 0, %s28
      %s31 = sadd.s32 1, %s22
      %s32 = scalar_select %p29, %s31, %s22
      %p33 = scmp.ge.s32.totalorder %s32, 2
      %s34 = scalar_select %p33, 0, %s32
      %s35 = ssub.s32 %s22, %s34
      %s36 = ssub.s32 %s23, %s30
      %s37 = sor.u32 %s35, %s36
      %p38 = scmp.eq.s32.totalorder %s37, 0
      %s40 = sadd.s32 %s39, 1
      %s41 = scalar_select %p38, %s39, %s40
      %p44 = pneg %p38
      %p45 = scmp.eq.s32.totalorder %s15, 1
      %p46 = por %p44, %p45
      %p47 = scmp.ne.s32.totalorder %s39, %s42
      %p48 = scmp.eq.s32.totalorder %s15, 0
      %p49 = por %p47, %p48
      %p50 = scmp.ne.s32.totalorder %s39, %s42
      %p51 = scmp.eq.s32.totalorder %s20, 1
      %p52 = por %p50, %p51
      %p53 = scmp.ne.s32.totalorder %s42, %s43
      %p54 = scmp.eq.s32.totalorder %s20, 0
      %p55 = por %p53, %p54
      %p56 = scmp.ne.s32.totalorder %s42, %s43
      %p57 = scmp.eq.s32.totalorder %s21, 1
      %p58 = por %p56, %p57
      %p60 = scmp.ne.s32.totalorder %s43, %s59
      %p61 = scmp.eq.s32.totalorder %s21, 0
      %p62 = por %p60, %p61
      %s64 = sadd.s32 %s63, 1
      %p67 = scmp.eq.s32.totalorder %s15, 1
      %p68 = scmp.ne.s32.totalorder %s63, %s65
      %p69 = scmp.eq.s32.totalorder %s15, 0
      %p70 = por %p68, %p69
      %p71 = scmp.ne.s32.totalorder %s63, %s65
      %p72 = scmp.eq.s32.totalorder %s20, 1
      %p73 = por %p71, %p72
      %p74 = scmp.ne.s32.totalorder %s65, %s66
      %p75 = scmp.eq.s32.totalorder %s20, 0
      %p76 = por %p74, %p75
      %p77 = scmp.ne.s32.totalorder %s65, %s66
      %p78 = scmp.eq.s32.totalorder %s21, 1
      %p79 = por %p77, %p78
      %p81 = scmp.ne.s32.totalorder %s66, %s80
      %p82 = scmp.eq.s32.totalorder %s21, 0
      %p83 = por %p81, %p82
      %s85 = sadd.s32 %s84, 1
      %p88 = scmp.eq.s32.totalorder %s15, 1
      %p89 = scmp.ne.s32.totalorder %s84, %s86
      %p90 = scmp.eq.s32.totalorder %s15, 0
      %p91 = por %p89, %p90
      %p92 = scmp.ne.s32.totalorder %s84, %s86
      %p93 = scmp.eq.s32.totalorder %s20, 1
      %p94 = por %p92, %p93
      %p95 = scmp.ne.s32.totalorder %s86, %s87
      %p96 = scmp.eq.s32.totalorder %s20, 0
      %p97 = por %p95, %p96
      %p98 = scmp.ne.s32.totalorder %s86, %s87
      %p99 = scmp.eq.s32.totalorder %s21, 1
      %p100 = por %p98, %p99
      %p102 = scmp.ne.s32.totalorder %s87, %s101
      %p103 = scmp.eq.s32.totalorder %s21, 0
      %p104 = por %p102, %p103
      %s105 = ssub.s32 %s22, %s34
      %p106 = scmp.eq.s32.totalorder %s105, 0
      %s108 = sadd.s32 %s107, 1
      %s109 = scalar_select %p106, %s107, %s108
      %p112 = pneg %p106
      %p113 = scmp.eq.s32.totalorder %s15, 1
      %p114 = por %p112, %p113
      %p115 = scmp.ne.s32.totalorder %s107, %s110
      %p116 = scmp.eq.s32.totalorder %s15, 0
      %p117 = por %p115, %p116
      %p118 = scmp.ne.s32.totalorder %s107, %s110
      %p119 = scmp.eq.s32.totalorder %s20, 1
      %p120 = por %p118, %p119
      %p121 = scmp.ne.s32.totalorder %s110, %s111
      %p122 = scmp.eq.s32.totalorder %s20, 0
      %p123 = por %p121, %p122
      %p124 = scmp.ne.s32.totalorder %s110, %s111
      %p125 = scmp.eq.s32.totalorder %s21, 1
      %p126 = por %p124, %p125
      %p128 = scmp.ne.s32.totalorder %s111, %s127
      %p129 = scmp.eq.s32.totalorder %s21, 0
      %p130 = por %p128, %p129
      %p131 = scmp.le.s32.totalorder 1, %s15
      %p132 = scmp.lt.s32.totalorder %s15, 3
      %p133 = pnand %p131, %p132
      %p134 = pneg %p133
      // Predicated region
      $region9: #{tpu_custom_call.1} parent=5 // pred_check
        _
      $region10: #{tpu_custom_call.1} parent=5 // pred_check_branch
        %136 = sbr.rel (%p133) target = $region12
      $region11: #{tpu_custom_call.1} parent=5 // pred_region
        %s137 = ssub.s32 %s15, 1
        // Predicated region
        $region13: #{tpu_custom_call.1} parent=11 // pred_check
          %p138 = pneg %p76
        $region14: #{tpu_custom_call.1} parent=11 // pred_check_branch
          %140 = sbr.rel (%p138) target = $region16
        $region15: #{tpu_custom_call.1} parent=11 // pred_region
          _
        $region16: #{tpu_custom_call.1} parent=11 // pred_fallthru
          _
        // Predicated region
        $region17: #{tpu_custom_call.1} parent=11 // pred_check
          %p141 = pneg %p97
        $region18: #{tpu_custom_call.1} parent=11 // pred_check_branch
          %143 = sbr.rel (%p141) target = $region20
        $region19: #{tpu_custom_call.1} parent=11 // pred_region
          _
        $region20: #{tpu_custom_call.1} parent=11 // pred_fallthru
          _
      $region12: #{tpu_custom_call.1} parent=5 // pred_fallthru
        _
      %p144 = scmp.lt.s32.totalorder %s15, 2
      // Predicated region
      $region21: #{tpu_custom_call.1} parent=5 // pred_check
        %p145 = pneg %p144
      $region22: #{tpu_custom_call.1} parent=5 // pred_check_branch
        %147 = sbr.rel (%p145) target = $region24
      $region23: #{tpu_custom_call.1} parent=5 // pred_region
        // Predicated region
        $region25: #{tpu_custom_call.1} parent=23 // pred_check
          %p148 = pneg %p49
        $region26: #{tpu_custom_call.1} parent=23 // pred_check_branch
          %150 = sbr.rel (%p148) target = $region28
        $region27: #{tpu_custom_call.1} parent=23 // pred_region
          %s151 = sand.u32 %s39, 1
          %s152 = scalar_lea.sflag [#allocation5], %s151
          %s153 = sand.u32 %s39, 1
          %s154 = smul.addr %s153, 1024
          %s155 = scalar_lea.vmem [#allocation4], %s154
          %s156 = smul.u32 8, %s22
          %s157 = smul.u32 2, %s23
          %s159 = ssub.s32 16384, 16384
          %160 = vsyncadd %s152, %s159
          %s161 = smul.addr %s156, 16
          %s162 = sadd.s32 %s157, %s161
          %s163 = smul.addr %s162, 128
          %s164 = scalar_lea.hbm %s0, %s163
          %s165 = sshll.u32 %s155, 4
          %s166 = int_to_ptr.vmem [resolvable:$true] %s165
          %171 = dma.hbm_to_vmem [thread:$0]  %s164, 16384, %s166, %s152, 256, 256, 16
        $region28: #{tpu_custom_call.1} parent=23 // pred_fallthru
          _
      $region24: #{tpu_custom_call.1} parent=5 // pred_fallthru
        _
      %p172 = scmp.le.s32.totalorder 1, %s15
      %p173 = scmp.lt.s32.totalorder %s15, 3
      %p174 = pnand %p172, %p173
      %p175 = pneg %p174
      // Predicated region
      $region29: #{tpu_custom_call.1} parent=5 // pred_check
        _
      $region30: #{tpu_custom_call.1} parent=5 // pred_check_branch
        %177 = sbr.rel (%p174) target = $region32
      $region31: #{tpu_custom_call.1} parent=5 // pred_region
        %s178 = ssub.s32 %s15, 1
        %s179 = sand.u32 %s42, 1
        %s180 = scalar_lea.sflag [#allocation5], %s179
        %s181 = sand.u32 %s42, 1
        %s182 = smul.addr %s181, 1024
        %s183 = scalar_lea.vmem [#allocation4], %s182
        // Predicated region
        $region33: #{tpu_custom_call.1} parent=31 // pred_check
          %p184 = pneg %p55
        $region34: #{tpu_custom_call.1} parent=31 // pred_check_branch
          %186 = sbr.rel (%p184) target = $region36
        $region35: #{tpu_custom_call.1} parent=31 // pred_region
          %187 = dma.done %s180, 16384
        $region36: #{tpu_custom_call.1} parent=31 // pred_fallthru
          _
        %s188 = sand.u32 %s42, 1
        %s189 = scalar_lea.sflag [#allocation5], %s188
        %s190 = sand.u32 %s42, 1
        %s191 = smul.addr %s190, 1024
        %s192 = scalar_lea.vmem [#allocation4], %s191
        %p193 = pneg %p55
        %p194 = pneg %p52
        %p195 = pneg %p76
        %p196 = pneg %p73
        %p197 = pneg %p97
        %p198 = pneg %p94
        %p199 = pneg %p123
        %p200 = pneg %p120
        %s201 = sand.u32 %s110, 1
        %s202 = scalar_lea.sflag [#allocation6], %s201
        %s203 = sand.u32 %s110, 1
        %s204 = smul.addr %s203, 8
        %s205 = scalar_lea.vmem [#allocation7], %s204
        %s206 = smul.u32 8, %s24
        %s207 = smul.u32 2, %s25
        %p208 = scmp.eq.s32.totalorder %s25, 0
        // Predicated region
        $region37: #{tpu_custom_call.1} parent=31 // pred_check
          %p209 = pneg %p208
        $region38: #{tpu_custom_call.1} parent=31 // pred_check_branch
          %211 = sbr.rel (%p209) target = $region40
        $region39: #{tpu_custom_call.1} parent=31 // pred_region
          %212 = vst [vmem:[#allocation2] sm:$0xff] -inf
          %213 = vst [vmem:[#allocation2 + $0x8] sm:$0xff] -inf
          %214 = vst [vmem:[#allocation2 + $0x10] sm:$0xff] -inf
          %215 = vst [vmem:[#allocation2 + $0x18] sm:$0xff] -inf
          %216 = vst [vmem:[#allocation2 + $0x20] sm:$0xff] -inf
          %217 = vst [vmem:[#allocation2 + $0x28] sm:$0xff] -inf
          %218 = vst [vmem:[#allocation2 + $0x30] sm:$0xff] -inf
          %219 = vst [vmem:[#allocation2 + $0x38] sm:$0xff] -inf
          %220 = vst [vmem:[#allocation2 + $0x40] sm:$0xff] -inf
          %221 = vst [vmem:[#allocation2 + $0x48] sm:$0xff] -inf
          %222 = vst [vmem:[#allocation2 + $0x50] sm:$0xff] -inf
          %223 = vst [vmem:[#allocation2 + $0x58] sm:$0xff] -inf
          %224 = vst [vmem:[#allocation2 + $0x60] sm:$0xff] -inf
          %225 = vst [vmem:[#allocation2 + $0x68] sm:$0xff] -inf
          %226 = vst [vmem:[#allocation2 + $0x70] sm:$0xff] -inf
          %227 = vst [vmem:[#allocation2 + $0x78] sm:$0xff] -inf
          %228 = vst [vmem:[#allocation2 + $0x80] sm:$0xff] -inf
          %229 = vst [vmem:[#allocation2 + $0x88] sm:$0xff] -inf
          %230 = vst [vmem:[#allocation2 + $0x90] sm:$0xff] -inf
          %231 = vst [vmem:[#allocation2 + $0x98] sm:$0xff] -inf
          %232 = vst [vmem:[#allocation2 + $0xa0] sm:$0xff] -inf
          %233 = vst [vmem:[#allocation2 + $0xa8] sm:$0xff] -inf
          %234 = vst [vmem:[#allocation2 + $0xb0] sm:$0xff] -inf
          %235 = vst [vmem:[#allocation2 + $0xb8] sm:$0xff] -inf
          %236 = vst [vmem:[#allocation2 + $0xc0] sm:$0xff] -inf
          %237 = vst [vmem:[#allocation2 + $0xc8] sm:$0xff] -inf
          %238 = vst [vmem:[#allocation2 + $0xd0] sm:$0xff] -inf
          %239 = vst [vmem:[#allocation2 + $0xd8] sm:$0xff] -inf
          %240 = vst [vmem:[#allocation2 + $0xe0] sm:$0xff] -inf
          %241 = vst [vmem:[#allocation2 + $0xe8] sm:$0xff] -inf
          %242 = vst [vmem:[#allocation2 + $0xf0] sm:$0xff] -inf
          %243 = vst [vmem:[#allocation2 + $0xf8] sm:$0xff] -inf
          %244 = vst [vmem:[#allocation2 + $0x100] sm:$0xff] -inf
          %245 = vst [vmem:[#allocation2 + $0x108] sm:$0xff] -inf
          %246 = vst [vmem:[#allocation2 + $0x110] sm:$0xff] -inf
          %247 = vst [vmem:[#allocation2 + $0x118] sm:$0xff] -inf
          %248 = vst [vmem:[#allocation2 + $0x120] sm:$0xff] -inf
          %249 = vst [vmem:[#allocation2 + $0x128] sm:$0xff] -inf
          %250 = vst [vmem:[#allocation2 + $0x130] sm:$0xff] -inf
          %251 = vst [vmem:[#allocation2 + $0x138] sm:$0xff] -inf
          %252 = vst [vmem:[#allocation2 + $0x140] sm:$0xff] -inf
          %253 = vst [vmem:[#allocation2 + $0x148] sm:$0xff] -inf
          %254 = vst [vmem:[#allocation2 + $0x150] sm:$0xff] -inf
          %255 = vst [vmem:[#allocation2 + $0x158] sm:$0xff] -inf
          %256 = vst [vmem:[#allocation2 + $0x160] sm:$0xff] -inf
          %257 = vst [vmem:[#allocation2 + $0x168] sm:$0xff] -inf
          %258 = vst [vmem:[#allocation2 + $0x170] sm:$0xff] -inf
          %259 = vst [vmem:[#allocation2 + $0x178] sm:$0xff] -inf
          %260 = vst [vmem:[#allocation2 + $0x180] sm:$0xff] -inf
          %261 = vst [vmem:[#allocation2 + $0x188] sm:$0xff] -inf
          %262 = vst [vmem:[#allocation2 + $0x190] sm:$0xff] -inf
          %263 = vst [vmem:[#allocation2 + $0x198] sm:$0xff] -inf
          %264 = vst [vmem:[#allocation2 + $0x1a0] sm:$0xff] -inf
          %265 = vst [vmem:[#allocation2 + $0x1a8] sm:$0xff] -inf
          %266 = vst [vmem:[#allocation2 + $0x1b0] sm:$0xff] -inf
          %267 = vst [vmem:[#allocation2 + $0x1b8] sm:$0xff] -inf
          %268 = vst [vmem:[#allocation2 + $0x1c0] sm:$0xff] -inf
          %269 = vst [vmem:[#allocation2 + $0x1c8] sm:$0xff] -inf
          %270 = vst [vmem:[#allocation2 + $0x1d0] sm:$0xff] -inf
          %271 = vst [vmem:[#allocation2 + $0x1d8] sm:$0xff] -inf
          %272 = vst [vmem:[#allocation2 + $0x1e0] sm:$0xff] -inf
          %273 = vst [vmem:[#allocation2 + $0x1e8] sm:$0xff] -inf
          %274 = vst [vmem:[#allocation2 + $0x1f0] sm:$0xff] -inf
          %275 = vst [vmem:[#allocation2 + $0x1f8] sm:$0xff] -inf
          %276 = vst [vmem:[#allocation3] sm:$0xff] 0.0
          %277 = vst [vmem:[#allocation3 + $0x8] sm:$0xff] 0.0
          %278 = vst [vmem:[#allocation3 + $0x10] sm:$0xff] 0.0
          %279 = vst [vmem:[#allocation3 + $0x18] sm:$0xff] 0.0
          %280 = vst [vmem:[#allocation3 + $0x20] sm:$0xff] 0.0
          %281 = vst [vmem:[#allocation3 + $0x28] sm:$0xff] 0.0
          %282 = vst [vmem:[#allocation3 + $0x30] sm:$0xff] 0.0
          %283 = vst [vmem:[#allocation3 + $0x38] sm:$0xff] 0.0
          %284 = vst [vmem:[#allocation3 + $0x40] sm:$0xff] 0.0
          %285 = vst [vmem:[#allocation3 + $0x48] sm:$0xff] 0.0
          %286 = vst [vmem:[#allocation3 + $0x50] sm:$0xff] 0.0
          %287 = vst [vmem:[#allocation3 + $0x58] sm:$0xff] 0.0
          %288 = vst [vmem:[#allocation3 + $0x60] sm:$0xff] 0.0
          %289 = vst [vmem:[#allocation3 + $0x68] sm:$0xff] 0.0
          %290 = vst [vmem:[#allocation3 + $0x70] sm:$0xff] 0.0
          %291 = vst [vmem:[#allocation3 + $0x78] sm:$0xff] 0.0
          %292 = vst [vmem:[#allocation3 + $0x80] sm:$0xff] 0.0
          %293 = vst [vmem:[#allocation3 + $0x88] sm:$0xff] 0.0
          %294 = vst [vmem:[#allocation3 + $0x90] sm:$0xff] 0.0
          %295 = vst [vmem:[#allocation3 + $0x98] sm:$0xff] 0.0
          %296 = vst [vmem:[#allocation3 + $0xa0] sm:$0xff] 0.0
          %297 = vst [vmem:[#allocation3 + $0xa8] sm:$0xff] 0.0
          %298 = vst [vmem:[#allocation3 + $0xb0] sm:$0xff] 0.0
          %299 = vst [vmem:[#allocation3 + $0xb8] sm:$0xff] 0.0
          %300 = vst [vmem:[#allocation3 + $0xc0] sm:$0xff] 0.0
          %301 = vst [vmem:[#allocation3 + $0xc8] sm:$0xff] 0.0
          %302 = vst [vmem:[#allocation3 + $0xd0] sm:$0xff] 0.0
          %303 = vst [vmem:[#allocation3 + $0xd8] sm:$0xff] 0.0
          %304 = vst [vmem:[#allocation3 + $0xe0] sm:$0xff] 0.0
          %305 = vst [vmem:[#allocation3 + $0xe8] sm:$0xff] 0.0
          %306 = vst [vmem:[#allocation3 + $0xf0] sm:$0xff] 0.0
          %307 = vst [vmem:[#allocation3 + $0xf8] sm:$0xff] 0.0
          %308 = vst [vmem:[#allocation3 + $0x100] sm:$0xff] 0.0
          %309 = vst [vmem:[#allocation3 + $0x108] sm:$0xff] 0.0
          %310 = vst [vmem:[#allocation3 + $0x110] sm:$0xff] 0.0
          %311 = vst [vmem:[#allocation3 + $0x118] sm:$0xff] 0.0
          %312 = vst [vmem:[#allocation3 + $0x120] sm:$0xff] 0.0
          %313 = vst [vmem:[#allocation3 + $0x128] sm:$0xff] 0.0
          %314 = vst [vmem:[#allocation3 + $0x130] sm:$0xff] 0.0
          %315 = vst [vmem:[#allocation3 + $0x138] sm:$0xff] 0.0
          %316 = vst [vmem:[#allocation3 + $0x140] sm:$0xff] 0.0
          %317 = vst [vmem:[#allocation3 + $0x148] sm:$0xff] 0.0
          %318 = vst [vmem:[#allocation3 + $0x150] sm:$0xff] 0.0
          %319 = vst [vmem:[#allocation3 + $0x158] sm:$0xff] 0.0
          %320 = vst [vmem:[#allocation3 + $0x160] sm:$0xff] 0.0
          %321 = vst [vmem:[#allocation3 + $0x168] sm:$0xff] 0.0
          %322 = vst [vmem:[#allocation3 + $0x170] sm:$0xff] 0.0
          %323 = vst [vmem:[#allocation3 + $0x178] sm:$0xff] 0.0
          %324 = vst [vmem:[#allocation3 + $0x180] sm:$0xff] 0.0
          %325 = vst [vmem:[#allocation3 + $0x188] sm:$0xff] 0.0
          %326 = vst [vmem:[#allocation3 + $0x190] sm:$0xff] 0.0
          %327 = vst [vmem:[#allocation3 + $0x198] sm:$0xff] 0.0
          %328 = vst [vmem:[#allocation3 + $0x1a0] sm:$0xff] 0.0
          %329 = vst [vmem:[#allocation3 + $0x1a8] sm:$0xff] 0.0
          %330 = vst [vmem:[#allocation3 + $0x1b0] sm:$0xff] 0.0
          %331 = vst [vmem:[#allocation3 + $0x1b8] sm:$0xff] 0.0
          %332 = vst [vmem:[#allocation3 + $0x1c0] sm:$0xff] 0.0
          %333 = vst [vmem:[#allocation3 + $0x1c8] sm:$0xff] 0.0
          %334 = vst [vmem:[#allocation3 + $0x1d0] sm:$0xff] 0.0
          %335 = vst [vmem:[#allocation3 + $0x1d8] sm:$0xff] 0.0
          %336 = vst [vmem:[#allocation3 + $0x1e0] sm:$0xff] 0.0
          %337 = vst [vmem:[#allocation3 + $0x1e8] sm:$0xff] 0.0
          %338 = vst [vmem:[#allocation3 + $0x1f0] sm:$0xff] 0.0
          %339 = vst [vmem:[#allocation3 + $0x1f8] sm:$0xff] 0.0
        $region40: #{tpu_custom_call.1} parent=31 // pred_fallthru
          _
        %v340 = vld [vmem:[%s183] sm:$0xff]
        %v341 = vld [vmem:[%s183 + $0x10] sm:$0xff]
        %v342 = vld [vmem:[%s183 + $0x20] sm:$0xff]
        %v343 = vld [vmem:[%s183 + $0x30] sm:$0xff]
        %v344 = vld [vmem:[%s183 + $0x40] sm:$0xff]
        %v345 = vld [vmem:[%s183 + $0x50] sm:$0xff]
        %v346 = vld [vmem:[%s183 + $0x60] sm:$0xff]
        %v347 = vld [vmem:[%s183 + $0x70] sm:$0xff]
        %v348 = vld [vmem:[%s183 + $0x80] sm:$0xff]
        %v349 = vld [vmem:[%s183 + $0x90] sm:$0xff]
        %v350 = vld [vmem:[%s183 + $0xa0] sm:$0xff]
        %v351 = vld [vmem:[%s183 + $0xb0] sm:$0xff]
        %v352 = vld [vmem:[%s183 + $0xc0] sm:$0xff]
        %v353 = vld [vmem:[%s183 + $0xd0] sm:$0xff]
        %v354 = vld [vmem:[%s183 + $0xe0] sm:$0xff]
        %v355 = vld [vmem:[%s183 + $0xf0] sm:$0xff]
        %v356 = vld [vmem:[%s183 + $0x100] sm:$0xff]
        %v357 = vld [vmem:[%s183 + $0x110] sm:$0xff]
        %v358 = vld [vmem:[%s183 + $0x120] sm:$0xff]
        %v359 = vld [vmem:[%s183 + $0x130] sm:$0xff]
        %v360 = vld [vmem:[%s183 + $0x140] sm:$0xff]
        %v361 = vld [vmem:[%s183 + $0x150] sm:$0xff]
        %v362 = vld [vmem:[%s183 + $0x160] sm:$0xff]
        %v363 = vld [vmem:[%s183 + $0x170] sm:$0xff]
        %v364 = vld [vmem:[%s183 + $0x180] sm:$0xff]
        %v365 = vld [vmem:[%s183 + $0x190] sm:$0xff]
        %v366 = vld [vmem:[%s183 + $0x1a0] sm:$0xff]
        %v367 = vld [vmem:[%s183 + $0x1b0] sm:$0xff]
        %v368 = vld [vmem:[%s183 + $0x1c0] sm:$0xff]
        %v369 = vld [vmem:[%s183 + $0x1d0] sm:$0xff]
        %v370 = vld [vmem:[%s183 + $0x1e0] sm:$0xff]
        %v371 = vld [vmem:[%s183 + $0x1f0] sm:$0xff]
        %v372 = vld [vmem:[%s183 + $0x200] sm:$0xff]
        %v373 = vld [vmem:[%s183 + $0x210] sm:$0xff]
        %v374 = vld [vmem:[%s183 + $0x220] sm:$0xff]
        %v375 = vld [vmem:[%s183 + $0x230] sm:$0xff]
        %v376 = vld [vmem:[%s183 + $0x240] sm:$0xff]
        %v377 = vld [vmem:[%s183 + $0x250] sm:$0xff]
        %v378 = vld [vmem:[%s183 + $0x260] sm:$0xff]
        %v379 = vld [vmem:[%s183 + $0x270] sm:$0xff]
        %v380 = vld [vmem:[%s183 + $0x280] sm:$0xff]
        %v381 = vld [vmem:[%s183 + $0x290] sm:$0xff]
        %v382 = vld [vmem:[%s183 + $0x2a0] sm:$0xff]
        %v383 = vld [vmem:[%s183 + $0x2b0] sm:$0xff]
        %v384 = vld [vmem:[%s183 + $0x2c0] sm:$0xff]
        %v385 = vld [vmem:[%s183 + $0x2d0] sm:$0xff]
        %v386 = vld [vmem:[%s183 + $0x2e0] sm:$0xff]
        %v387 = vld [vmem:[%s183 + $0x2f0] sm:$0xff]
        %v388 = vld [vmem:[%s183 + $0x300] sm:$0xff]
        %v389 = vld [vmem:[%s183 + $0x310] sm:$0xff]
        %v390 = vld [vmem:[%s183 + $0x320] sm:$0xff]
        %v391 = vld [vmem:[%s183 + $0x330] sm:$0xff]
        %v392 = vld [vmem:[%s183 + $0x340] sm:$0xff]
        %v393 = vld [vmem:[%s183 + $0x350] sm:$0xff]
        %v394 = vld [vmem:[%s183 + $0x360] sm:$0xff]
        %v395 = vld [vmem:[%s183 + $0x370] sm:$0xff]
        %v396 = vld [vmem:[%s183 + $0x380] sm:$0xff]
        %v397 = vld [vmem:[%s183 + $0x390] sm:$0xff]
        %v398 = vld [vmem:[%s183 + $0x3a0] sm:$0xff]
        %v399 = vld [vmem:[%s183 + $0x3b0] sm:$0xff]
        %v400 = vld [vmem:[%s183 + $0x3c0] sm:$0xff]
        %v401 = vld [vmem:[%s183 + $0x3d0] sm:$0xff]
        %v402 = vld [vmem:[%s183 + $0x3e0] sm:$0xff]
        %v403 = vld [vmem:[%s183 + $0x3f0] sm:$0xff]
        %v404 = vld [vmem:[#allocation2] sm:$0xff]
        %v405 = vld [vmem:[#allocation2 + $0x8] sm:$0xff]
        %v406 = vld [vmem:[#allocation2 + $0x10] sm:$0xff]
        %v407 = vld [vmem:[#allocation2 + $0x18] sm:$0xff]
        %v408 = vld [vmem:[#allocation2 + $0x20] sm:$0xff]
        %v409 = vld [vmem:[#allocation2 + $0x28] sm:$0xff]
        %v410 = vld [vmem:[#allocation2 + $0x30] sm:$0xff]
        %v411 = vld [vmem:[#allocation2 + $0x38] sm:$0xff]
        %v412 = vld [vmem:[#allocation2 + $0x40] sm:$0xff]
        %v413 = vld [vmem:[#allocation2 + $0x48] sm:$0xff]
        %v414 = vld [vmem:[#allocation2 + $0x50] sm:$0xff]
        %v415 = vld [vmem:[#allocation2 + $0x58] sm:$0xff]
        %v416 = vld [vmem:[#allocation2 + $0x60] sm:$0xff]
        %v417 = vld [vmem:[#allocation2 + $0x68] sm:$0xff]
        %v418 = vld [vmem:[#allocation2 + $0x70] sm:$0xff]
        %v419 = vld [vmem:[#allocation2 + $0x78] sm:$0xff]
        %v420 = vld [vmem:[#allocation2 + $0x80] sm:$0xff]
        %v421 = vld [vmem:[#allocation2 + $0x88] sm:$0xff]
        %v422 = vld [vmem:[#allocation2 + $0x90] sm:$0xff]
        %v423 = vld [vmem:[#allocation2 + $0x98] sm:$0xff]
        %v424 = vld [vmem:[#allocation2 + $0xa0] sm:$0xff]
        %v425 = vld [vmem:[#allocation2 + $0xa8] sm:$0xff]
        %v426 = vld [vmem:[#allocation2 + $0xb0] sm:$0xff]
        %v427 = vld [vmem:[#allocation2 + $0xb8] sm:$0xff]
        %v428 = vld [vmem:[#allocation2 + $0xc0] sm:$0xff]
        %v429 = vld [vmem:[#allocation2 + $0xc8] sm:$0xff]
        %v430 = vld [vmem:[#allocation2 + $0xd0] sm:$0xff]
        %v431 = vld [vmem:[#allocation2 + $0xd8] sm:$0xff]
        %v432 = vld [vmem:[#allocation2 + $0xe0] sm:$0xff]
        %v433 = vld [vmem:[#allocation2 + $0xe8] sm:$0xff]
        %v434 = vld [vmem:[#allocation2 + $0xf0] sm:$0xff]
        %v435 = vld [vmem:[#allocation2 + $0xf8] sm:$0xff]
        %v436 = vld [vmem:[#allocation2 + $0x100] sm:$0xff]
        %v437 = vld [vmem:[#allocation2 + $0x108] sm:$0xff]
        %v438 = vld [vmem:[#allocation2 + $0x110] sm:$0xff]
        %v439 = vld [vmem:[#allocation2 + $0x118] sm:$0xff]
        %v440 = vld [vmem:[#allocation2 + $0x120] sm:$0xff]
        %v441 = vld [vmem:[#allocation2 + $0x128] sm:$0xff]
        %v442 = vld [vmem:[#allocation2 + $0x130] sm:$0xff]
        %v443 = vld [vmem:[#allocation2 + $0x138] sm:$0xff]
        %v444 = vld [vmem:[#allocation2 + $0x140] sm:$0xff]
        %v445 = vld [vmem:[#allocation2 + $0x148] sm:$0xff]
        %v446 = vld [vmem:[#allocation2 + $0x150] sm:$0xff]
        %v447 = vld [vmem:[#allocation2 + $0x158] sm:$0xff]
        %v448 = vld [vmem:[#allocation2 + $0x160] sm:$0xff]
        %v449 = vld [vmem:[#allocation2 + $0x168] sm:$0xff]
        %v450 = vld [vmem:[#allocation2 + $0x170] sm:$0xff]
        %v451 = vld [vmem:[#allocation2 + $0x178] sm:$0xff]
        %v452 = vld [vmem:[#allocation2 + $0x180] sm:$0xff]
        %v453 = vld [vmem:[#allocation2 + $0x188] sm:$0xff]
        %v454 = vld [vmem:[#allocation2 + $0x190] sm:$0xff]
        %v455 = vld [vmem:[#allocation2 + $0x198] sm:$0xff]
        %v456 = vld [vmem:[#allocation2 + $0x1a0] sm:$0xff]
        %v457 = vld [vmem:[#allocation2 + $0x1a8] sm:$0xff]
        %v458 = vld [vmem:[#allocation2 + $0x1b0] sm:$0xff]
        %v459 = vld [vmem:[#allocation2 + $0x1b8] sm:$0xff]
        %v460 = vld [vmem:[#allocation2 + $0x1c0] sm:$0xff]
        %v461 = vld [vmem:[#allocation2 + $0x1c8] sm:$0xff]
        %v462 = vld [vmem:[#allocation2 + $0x1d0] sm:$0xff]
        %v463 = vld [vmem:[#allocation2 + $0x1d8] sm:$0xff]
        %v464 = vld [vmem:[#allocation2 + $0x1e0] sm:$0xff]
        %v465 = vld [vmem:[#allocation2 + $0x1e8] sm:$0xff]
        %v466 = vld [vmem:[#allocation2 + $0x1f0] sm:$0xff]
        %v467 = vld [vmem:[#allocation2 + $0x1f8] sm:$0xff]
        %v468 = vmax.f32 %v404, %v340
        %v469 = vmax.f32 %v405, %v341
        %v470 = vmax.f32 %v406, %v342
        %v471 = vmax.f32 %v407, %v343
        %v472 = vmax.f32 %v408, %v344
        %v473 = vmax.f32 %v409, %v345
        %v474 = vmax.f32 %v410, %v346
        %v475 = vmax.f32 %v411, %v347
        %v476 = vmax.f32 %v412, %v348
        %v477 = vmax.f32 %v413, %v349
        %v478 = vmax.f32 %v414, %v350
        %v479 = vmax.f32 %v415, %v351
        %v480 = vmax.f32 %v416, %v352
        %v481 = vmax.f32 %v417, %v353
        %v482 = vmax.f32 %v418, %v354
        %v483 = vmax.f32 %v419, %v355
        %v484 = vmax.f32 %v420, %v356
        %v485 = vmax.f32 %v421, %v357
        %v486 = vmax.f32 %v422, %v358
        %v487 = vmax.f32 %v423, %v359
        %v488 = vmax.f32 %v424, %v360
        %v489 = vmax.f32 %v425, %v361
        %v490 = vmax.f32 %v426, %v362
        %v491 = vmax.f32 %v427, %v363
        %v492 = vmax.f32 %v428, %v364
        %v493 = vmax.f32 %v429, %v365
        %v494 = vmax.f32 %v430, %v366
        %v495 = vmax.f32 %v431, %v367
        %v496 = vmax.f32 %v432, %v368
        %v497 = vmax.f32 %v433, %v369
        %v498 = vmax.f32 %v434, %v370
        %v499 = vmax.f32 %v435, %v371
        %v500 = vmax.f32 %v436, %v372
        %v501 = vmax.f32 %v437, %v373
        %v502 = vmax.f32 %v438, %v374
        %v503 = vmax.f32 %v439, %v375
        %v504 = vmax.f32 %v440, %v376
        %v505 = vmax.f32 %v441, %v377
        %v506 = vmax.f32 %v442, %v378
        %v507 = vmax.f32 %v443, %v379
        %v508 = vmax.f32 %v444, %v380
        %v509 = vmax.f32 %v445, %v381
        %v510 = vmax.f32 %v446, %v382
        %v511 = vmax.f32 %v447, %v383
        %v512 = vmax.f32 %v448, %v384
        %v513 = vmax.f32 %v449, %v385
        %v514 = vmax.f32 %v450, %v386
        %v515 = vmax.f32 %v451, %v387
        %v516 = vmax.f32 %v452, %v388
        %v517 = vmax.f32 %v453, %v389
        %v518 = vmax.f32 %v454, %v390
        %v519 = vmax.f32 %v455, %v391
        %v520 = vmax.f32 %v456, %v392
        %v521 = vmax.f32 %v457, %v393
        %v522 = vmax.f32 %v458, %v394
        %v523 = vmax.f32 %v459, %v395
        %v524 = vmax.f32 %v460, %v396
        %v525 = vmax.f32 %v461, %v397
        %v526 = vmax.f32 %v462, %v398
        %v527 = vmax.f32 %v463, %v399
        %v528 = vmax.f32 %v464, %v400
        %v529 = vmax.f32 %v465, %v401
        %v530 = vmax.f32 %v466, %v402
        %v531 = vmax.f32 %v467, %v403
        %532 = vst [vmem:[#allocation2] sm:$0xff] %v468
        %533 = vst [vmem:[#allocation2 + $0x8] sm:$0xff] %v469
        %534 = vst [vmem:[#allocation2 + $0x10] sm:$0xff] %v470
        %535 = vst [vmem:[#allocation2 + $0x18] sm:$0xff] %v471
        %536 = vst [vmem:[#allocation2 + $0x20] sm:$0xff] %v472
        %537 = vst [vmem:[#allocation2 + $0x28] sm:$0xff] %v473
        %538 = vst [vmem:[#allocation2 + $0x30] sm:$0xff] %v474
        %539 = vst [vmem:[#allocation2 + $0x38] sm:$0xff] %v475
        %540 = vst [vmem:[#allocation2 + $0x40] sm:$0xff] %v476
        %541 = vst [vmem:[#allocation2 + $0x48] sm:$0xff] %v477
        %542 = vst [vmem:[#allocation2 + $0x50] sm:$0xff] %v478
        %543 = vst [vmem:[#allocation2 + $0x58] sm:$0xff] %v479
        %544 = vst [vmem:[#allocation2 + $0x60] sm:$0xff] %v480
        %545 = vst [vmem:[#allocation2 + $0x68] sm:$0xff] %v481
        %546 = vst [vmem:[#allocation2 + $0x70] sm:$0xff] %v482
        %547 = vst [vmem:[#allocation2 + $0x78] sm:$0xff] %v483
        %548 = vst [vmem:[#allocation2 + $0x80] sm:$0xff] %v484
        %549 = vst [vmem:[#allocation2 + $0x88] sm:$0xff] %v485
        %550 = vst [vmem:[#allocation2 + $0x90] sm:$0xff] %v486
        %551 = vst [vmem:[#allocation2 + $0x98] sm:$0xff] %v487
        %552 = vst [vmem:[#allocation2 + $0xa0] sm:$0xff] %v488
        %553 = vst [vmem:[#allocation2 + $0xa8] sm:$0xff] %v489
        %554 = vst [vmem:[#allocation2 + $0xb0] sm:$0xff] %v490
        %555 = vst [vmem:[#allocation2 + $0xb8] sm:$0xff] %v491
        %556 = vst [vmem:[#allocation2 + $0xc0] sm:$0xff] %v492
        %557 = vst [vmem:[#allocation2 + $0xc8] sm:$0xff] %v493
        %558 = vst [vmem:[#allocation2 + $0xd0] sm:$0xff] %v494
        %559 = vst [vmem:[#allocation2 + $0xd8] sm:$0xff] %v495
        %560 = vst [vmem:[#allocation2 + $0xe0] sm:$0xff] %v496
        %561 = vst [vmem:[#allocation2 + $0xe8] sm:$0xff] %v497
        %562 = vst [vmem:[#allocation2 + $0xf0] sm:$0xff] %v498
        %563 = vst [vmem:[#allocation2 + $0xf8] sm:$0xff] %v499
        %564 = vst [vmem:[#allocation2 + $0x100] sm:$0xff] %v500
        %565 = vst [vmem:[#allocation2 + $0x108] sm:$0xff] %v501
        %566 = vst [vmem:[#allocation2 + $0x110] sm:$0xff] %v502
        %567 = vst [vmem:[#allocation2 + $0x118] sm:$0xff] %v503
        %568 = vst [vmem:[#allocation2 + $0x120] sm:$0xff] %v504
        %569 = vst [vmem:[#allocation2 + $0x128] sm:$0xff] %v505
        %570 = vst [vmem:[#allocation2 + $0x130] sm:$0xff] %v506
        %571 = vst [vmem:[#allocation2 + $0x138] sm:$0xff] %v507
        %572 = vst [vmem:[#allocation2 + $0x140] sm:$0xff] %v508
        %573 = vst [vmem:[#allocation2 + $0x148] sm:$0xff] %v509
        %574 = vst [vmem:[#allocation2 + $0x150] sm:$0xff] %v510
        %575 = vst [vmem:[#allocation2 + $0x158] sm:$0xff] %v511
        %576 = vst [vmem:[#allocation2 + $0x160] sm:$0xff] %v512
        %577 = vst [vmem:[#allocation2 + $0x168] sm:$0xff] %v513
        %578 = vst [vmem:[#allocation2 + $0x170] sm:$0xff] %v514
        %579 = vst [vmem:[#allocation2 + $0x178] sm:$0xff] %v515
        %580 = vst [vmem:[#allocation2 + $0x180] sm:$0xff] %v516
        %581 = vst [vmem:[#allocation2 + $0x188] sm:$0xff] %v517
        %582 = vst [vmem:[#allocation2 + $0x190] sm:$0xff] %v518
        %583 = vst [vmem:[#allocation2 + $0x198] sm:$0xff] %v519
        %584 = vst [vmem:[#allocation2 + $0x1a0] sm:$0xff] %v520
        %585 = vst [vmem:[#allocation2 + $0x1a8] sm:$0xff] %v521
        %586 = vst [vmem:[#allocation2 + $0x1b0] sm:$0xff] %v522
        %587 = vst [vmem:[#allocation2 + $0x1b8] sm:$0xff] %v523
        %588 = vst [vmem:[#allocation2 + $0x1c0] sm:$0xff] %v524
        %589 = vst [vmem:[#allocation2 + $0x1c8] sm:$0xff] %v525
        %590 = vst [vmem:[#allocation2 + $0x1d0] sm:$0xff] %v526
        %591 = vst [vmem:[#allocation2 + $0x1d8] sm:$0xff] %v527
        %592 = vst [vmem:[#allocation2 + $0x1e0] sm:$0xff] %v528
        %593 = vst [vmem:[#allocation2 + $0x1e8] sm:$0xff] %v529
        %594 = vst [vmem:[#allocation2 + $0x1f0] sm:$0xff] %v530
        %595 = vst [vmem:[#allocation2 + $0x1f8] sm:$0xff] %v531
        %v596 = vld [vmem:[#allocation3] sm:$0xff]
        %v597 = vld [vmem:[#allocation3 + $0x8] sm:$0xff]
        %v598 = vld [vmem:[#allocation3 + $0x10] sm:$0xff]
        %v599 = vld [vmem:[#allocation3 + $0x18] sm:$0xff]
        %v600 = vld [vmem:[#allocation3 + $0x20] sm:$0xff]
        %v601 = vld [vmem:[#allocation3 + $0x28] sm:$0xff]
        %v602 = vld [vmem:[#allocation3 + $0x30] sm:$0xff]
        %v603 = vld [vmem:[#allocation3 + $0x38] sm:$0xff]
        %v604 = vld [vmem:[#allocation3 + $0x40] sm:$0xff]
        %v605 = vld [vmem:[#allocation3 + $0x48] sm:$0xff]
        %v606 = vld [vmem:[#allocation3 + $0x50] sm:$0xff]
        %v607 = vld [vmem:[#allocation3 + $0x58] sm:$0xff]
        %v608 = vld [vmem:[#allocation3 + $0x60] sm:$0xff]
        %v609 = vld [vmem:[#allocation3 + $0x68] sm:$0xff]
        %v610 = vld [vmem:[#allocation3 + $0x70] sm:$0xff]
        %v611 = vld [vmem:[#allocation3 + $0x78] sm:$0xff]
        %v612 = vld [vmem:[#allocation3 + $0x80] sm:$0xff]
        %v613 = vld [vmem:[#allocation3 + $0x88] sm:$0xff]
        %v614 = vld [vmem:[#allocation3 + $0x90] sm:$0xff]
        %v615 = vld [vmem:[#allocation3 + $0x98] sm:$0xff]
        %v616 = vld [vmem:[#allocation3 + $0xa0] sm:$0xff]
        %v617 = vld [vmem:[#allocation3 + $0xa8] sm:$0xff]
        %v618 = vld [vmem:[#allocation3 + $0xb0] sm:$0xff]
        %v619 = vld [vmem:[#allocation3 + $0xb8] sm:$0xff]
        %v620 = vld [vmem:[#allocation3 + $0xc0] sm:$0xff]
        %v621 = vld [vmem:[#allocation3 + $0xc8] sm:$0xff]
        %v622 = vld [vmem:[#allocation3 + $0xd0] sm:$0xff]
        %v623 = vld [vmem:[#allocation3 + $0xd8] sm:$0xff]
        %v624 = vld [vmem:[#allocation3 + $0xe0] sm:$0xff]
        %v625 = vld [vmem:[#allocation3 + $0xe8] sm:$0xff]
        %v626 = vld [vmem:[#allocation3 + $0xf0] sm:$0xff]
        %v627 = vld [vmem:[#allocation3 + $0xf8] sm:$0xff]
        %v628 = vld [vmem:[#allocation3 + $0x100] sm:$0xff]
        %v629 = vld [vmem:[#allocation3 + $0x108] sm:$0xff]
        %v630 = vld [vmem:[#allocation3 + $0x110] sm:$0xff]
        %v631 = vld [vmem:[#allocation3 + $0x118] sm:$0xff]
        %v632 = vld [vmem:[#allocation3 + $0x120] sm:$0xff]
        %v633 = vld [vmem:[#allocation3 + $0x128] sm:$0xff]
        %v634 = vld [vmem:[#allocation3 + $0x130] sm:$0xff]
        %v635 = vld [vmem:[#allocation3 + $0x138] sm:$0xff]
        %v636 = vld [vmem:[#allocation3 + $0x140] sm:$0xff]
        %v637 = vld [vmem:[#allocation3 + $0x148] sm:$0xff]
        %v638 = vld [vmem:[#allocation3 + $0x150] sm:$0xff]
        %v639 = vld [vmem:[#allocation3 + $0x158] sm:$0xff]
        %v640 = vld [vmem:[#allocation3 + $0x160] sm:$0xff]
        %v641 = vld [vmem:[#allocation3 + $0x168] sm:$0xff]
        %v642 = vld [vmem:[#allocation3 + $0x170] sm:$0xff]
        %v643 = vld [vmem:[#allocation3 + $0x178] sm:$0xff]
        %v644 = vld [vmem:[#allocation3 + $0x180] sm:$0xff]
        %v645 = vld [vmem:[#allocation3 + $0x188] sm:$0xff]
        %v646 = vld [vmem:[#allocation3 + $0x190] sm:$0xff]
        %v647 = vld [vmem:[#allocation3 + $0x198] sm:$0xff]
        %v648 = vld [vmem:[#allocation3 + $0x1a0] sm:$0xff]
        %v649 = vld [vmem:[#allocation3 + $0x1a8] sm:$0xff]
        %v650 = vld [vmem:[#allocation3 + $0x1b0] sm:$0xff]
        %v651 = vld [vmem:[#allocation3 + $0x1b8] sm:$0xff]
        %v652 = vld [vmem:[#allocation3 + $0x1c0] sm:$0xff]
        %v653 = vld [vmem:[#allocation3 + $0x1c8] sm:$0xff]
        %v654 = vld [vmem:[#allocation3 + $0x1d0] sm:$0xff]
        %v655 = vld [vmem:[#allocation3 + $0x1d8] sm:$0xff]
        %v656 = vld [vmem:[#allocation3 + $0x1e0] sm:$0xff]
        %v657 = vld [vmem:[#allocation3 + $0x1e8] sm:$0xff]
        %v658 = vld [vmem:[#allocation3 + $0x1f0] sm:$0xff]
        %v659 = vld [vmem:[#allocation3 + $0x1f8] sm:$0xff]
        %v660 = vadd.f32 %v596, %v340
        %v661 = vadd.f32 %v597, %v341
        %v662 = vadd.f32 %v598, %v342
        %v663 = vadd.f32 %v599, %v343
        %v664 = vadd.f32 %v600, %v344
        %v665 = vadd.f32 %v601, %v345
        %v666 = vadd.f32 %v602, %v346
        %v667 = vadd.f32 %v603, %v347
        %v668 = vadd.f32 %v604, %v348
        %v669 = vadd.f32 %v605, %v349
        %v670 = vadd.f32 %v606, %v350
        %v671 = vadd.f32 %v607, %v351
        %v672 = vadd.f32 %v608, %v352
        %v673 = vadd.f32 %v609, %v353
        %v674 = vadd.f32 %v610, %v354
        %v675 = vadd.f32 %v611, %v355
        %v676 = vadd.f32 %v612, %v356
        %v677 = vadd.f32 %v613, %v357
        %v678 = vadd.f32 %v614, %v358
        %v679 = vadd.f32 %v615, %v359
        %v680 = vadd.f32 %v616, %v360
        %v681 = vadd.f32 %v617, %v361
        %v682 = vadd.f32 %v618, %v362
        %v683 = vadd.f32 %v619, %v363
        %v684 = vadd.f32 %v620, %v364
        %v685 = vadd.f32 %v621, %v365
        %v686 = vadd.f32 %v622, %v366
        %v687 = vadd.f32 %v623, %v367
        %v688 = vadd.f32 %v624, %v368
        %v689 = vadd.f32 %v625, %v369
        %v690 = vadd.f32 %v626, %v370
        %v691 = vadd.f32 %v627, %v371
        %v692 = vadd.f32 %v628, %v372
        %v693 = vadd.f32 %v629, %v373
        %v694 = vadd.f32 %v630, %v374
        %v695 = vadd.f32 %v631, %v375
        %v696 = vadd.f32 %v632, %v376
        %v697 = vadd.f32 %v633, %v377
        %v698 = vadd.f32 %v634, %v378
        %v699 = vadd.f32 %v635, %v379
        %v700 = vadd.f32 %v636, %v380
        %v701 = vadd.f32 %v637, %v381
        %v702 = vadd.f32 %v638, %v382
        %v703 = vadd.f32 %v639, %v383
        %v704 = vadd.f32 %v640, %v384
        %v705 = vadd.f32 %v641, %v385
        %v706 = vadd.f32 %v642, %v386
        %v707 = vadd.f32 %v643, %v387
        %v708 = vadd.f32 %v644, %v388
        %v709 = vadd.f32 %v645, %v389
        %v710 = vadd.f32 %v646, %v390
        %v711 = vadd.f32 %v647, %v391
        %v712 = vadd.f32 %v648, %v392
        %v713 = vadd.f32 %v649, %v393
        %v714 = vadd.f32 %v650, %v394
        %v715 = vadd.f32 %v651, %v395
        %v716 = vadd.f32 %v652, %v396
        %v717 = vadd.f32 %v653, %v397
        %v718 = vadd.f32 %v654, %v398
        %v719 = vadd.f32 %v655, %v399
        %v720 = vadd.f32 %v656, %v400
        %v721 = vadd.f32 %v657, %v401
        %v722 = vadd.f32 %v658, %v402
        %v723 = vadd.f32 %v659, %v403
        %724 = vst [vmem:[#allocation3] sm:$0xff] %v660
        %725 = vst [vmem:[#allocation3 + $0x8] sm:$0xff] %v661
        %726 = vst [vmem:[#allocation3 + $0x10] sm:$0xff] %v662
        %727 = vst [vmem:[#allocation3 + $0x18] sm:$0xff] %v663
        %728 = vst [vmem:[#allocation3 + $0x20] sm:$0xff] %v664
        %729 = vst [vmem:[#allocation3 + $0x28] sm:$0xff] %v665
        %730 = vst [vmem:[#allocation3 + $0x30] sm:$0xff] %v666
        %731 = vst [vmem:[#allocation3 + $0x38] sm:$0xff] %v667
        %732 = vst [vmem:[#allocation3 + $0x40] sm:$0xff] %v668
        %733 = vst [vmem:[#allocation3 + $0x48] sm:$0xff] %v669
        %734 = vst [vmem:[#allocation3 + $0x50] sm:$0xff] %v670
        %735 = vst [vmem:[#allocation3 + $0x58] sm:$0xff] %v671
        %736 = vst [vmem:[#allocation3 + $0x60] sm:$0xff] %v672
        %737 = vst [vmem:[#allocation3 + $0x68] sm:$0xff] %v673
        %738 = vst [vmem:[#allocation3 + $0x70] sm:$0xff] %v674
        %739 = vst [vmem:[#allocation3 + $0x78] sm:$0xff] %v675
        %740 = vst [vmem:[#allocation3 + $0x80] sm:$0xff] %v676
        %741 = vst [vmem:[#allocation3 + $0x88] sm:$0xff] %v677
        %742 = vst [vmem:[#allocation3 + $0x90] sm:$0xff] %v678
        %743 = vst [vmem:[#allocation3 + $0x98] sm:$0xff] %v679
        %744 = vst [vmem:[#allocation3 + $0xa0] sm:$0xff] %v680
        %745 = vst [vmem:[#allocation3 + $0xa8] sm:$0xff] %v681
        %746 = vst [vmem:[#allocation3 + $0xb0] sm:$0xff] %v682
        %747 = vst [vmem:[#allocation3 + $0xb8] sm:$0xff] %v683
        %748 = vst [vmem:[#allocation3 + $0xc0] sm:$0xff] %v684
        %749 = vst [vmem:[#allocation3 + $0xc8] sm:$0xff] %v685
        %750 = vst [vmem:[#allocation3 + $0xd0] sm:$0xff] %v686
        %751 = vst [vmem:[#allocation3 + $0xd8] sm:$0xff] %v687
        %752 = vst [vmem:[#allocation3 + $0xe0] sm:$0xff] %v688
        %753 = vst [vmem:[#allocation3 + $0xe8] sm:$0xff] %v689
        %754 = vst [vmem:[#allocation3 + $0xf0] sm:$0xff] %v690
        %755 = vst [vmem:[#allocation3 + $0xf8] sm:$0xff] %v691
        %756 = vst [vmem:[#allocation3 + $0x100] sm:$0xff] %v692
        %757 = vst [vmem:[#allocation3 + $0x108] sm:$0xff] %v693
        %758 = vst [vmem:[#allocation3 + $0x110] sm:$0xff] %v694
        %759 = vst [vmem:[#allocation3 + $0x118] sm:$0xff] %v695
        %760 = vst [vmem:[#allocation3 + $0x120] sm:$0xff] %v696
        %761 = vst [vmem:[#allocation3 + $0x128] sm:$0xff] %v697
        %762 = vst [vmem:[#allocation3 + $0x130] sm:$0xff] %v698
        %763 = vst [vmem:[#allocation3 + $0x138] sm:$0xff] %v699
        %764 = vst [vmem:[#allocation3 + $0x140] sm:$0xff] %v700
        %765 = vst [vmem:[#allocation3 + $0x148] sm:$0xff] %v701
        %766 = vst [vmem:[#allocation3 + $0x150] sm:$0xff] %v702
        %767 = vst [vmem:[#allocation3 + $0x158] sm:$0xff] %v703
        %768 = vst [vmem:[#allocation3 + $0x160] sm:$0xff] %v704
        %769 = vst [vmem:[#allocation3 + $0x168] sm:$0xff] %v705
        %770 = vst [vmem:[#allocation3 + $0x170] sm:$0xff] %v706
        %771 = vst [vmem:[#allocation3 + $0x178] sm:$0xff] %v707
        %772 = vst [vmem:[#allocation3 + $0x180] sm:$0xff] %v708
        %773 = vst [vmem:[#allocation3 + $0x188] sm:$0xff] %v709
        %774 = vst [vmem:[#allocation3 + $0x190] sm:$0xff] %v710
        %775 = vst [vmem:[#allocation3 + $0x198] sm:$0xff] %v711
        %776 = vst [vmem:[#allocation3 + $0x1a0] sm:$0xff] %v712
        %777 = vst [vmem:[#allocation3 + $0x1a8] sm:$0xff] %v713
        %778 = vst [vmem:[#allocation3 + $0x1b0] sm:$0xff] %v714
        %779 = vst [vmem:[#allocation3 + $0x1b8] sm:$0xff] %v715
        %780 = vst [vmem:[#allocation3 + $0x1c0] sm:$0xff] %v716
        %781 = vst [vmem:[#allocation3 + $0x1c8] sm:$0xff] %v717
        %782 = vst [vmem:[#allocation3 + $0x1d0] sm:$0xff] %v718
        %783 = vst [vmem:[#allocation3 + $0x1d8] sm:$0xff] %v719
        %784 = vst [vmem:[#allocation3 + $0x1e0] sm:$0xff] %v720
        %785 = vst [vmem:[#allocation3 + $0x1e8] sm:$0xff] %v721
        %786 = vst [vmem:[#allocation3 + $0x1f0] sm:$0xff] %v722
        %787 = vst [vmem:[#allocation3 + $0x1f8] sm:$0xff] %v723
        %v788 = vld [vmem:[%s183 + $0x8] sm:$0xff]
        %v789 = vld [vmem:[%s183 + $0x18] sm:$0xff]
        %v790 = vld [vmem:[%s183 + $0x28] sm:$0xff]
        %v791 = vld [vmem:[%s183 + $0x38] sm:$0xff]
        %v792 = vld [vmem:[%s183 + $0x48] sm:$0xff]
        %v793 = vld [vmem:[%s183 + $0x58] sm:$0xff]
        %v794 = vld [vmem:[%s183 + $0x68] sm:$0xff]
        %v795 = vld [vmem:[%s183 + $0x78] sm:$0xff]
        %v796 = vld [vmem:[%s183 + $0x88] sm:$0xff]
        %v797 = vld [vmem:[%s183 + $0x98] sm:$0xff]
        %v798 = vld [vmem:[%s183 + $0xa8] sm:$0xff]
        %v799 = vld [vmem:[%s183 + $0xb8] sm:$0xff]
        %v800 = vld [vmem:[%s183 + $0xc8] sm:$0xff]
        %v801 = vld [vmem:[%s183 + $0xd8] sm:$0xff]
        %v802 = vld [vmem:[%s183 + $0xe8] sm:$0xff]
        %v803 = vld [vmem:[%s183 + $0xf8] sm:$0xff]
        %v804 = vld [vmem:[%s183 + $0x108] sm:$0xff]
        %v805 = vld [vmem:[%s183 + $0x118] sm:$0xff]
        %v806 = vld [vmem:[%s183 + $0x128] sm:$0xff]
        %v807 = vld [vmem:[%s183 + $0x138] sm:$0xff]
        %v808 = vld [vmem:[%s183 + $0x148] sm:$0xff]
        %v809 = vld [vmem:[%s183 + $0x158] sm:$0xff]
        %v810 = vld [vmem:[%s183 + $0x168] sm:$0xff]
        %v811 = vld [vmem:[%s183 + $0x178] sm:$0xff]
        %v812 = vld [vmem:[%s183 + $0x188] sm:$0xff]
        %v813 = vld [vmem:[%s183 + $0x198] sm:$0xff]
        %v814 = vld [vmem:[%s183 + $0x1a8] sm:$0xff]
        %v815 = vld [vmem:[%s183 + $0x1b8] sm:$0xff]
        %v816 = vld [vmem:[%s183 + $0x1c8] sm:$0xff]
        %v817 = vld [vmem:[%s183 + $0x1d8] sm:$0xff]
        %v818 = vld [vmem:[%s183 + $0x1e8] sm:$0xff]
        %v819 = vld [vmem:[%s183 + $0x1f8] sm:$0xff]
        %v820 = vld [vmem:[%s183 + $0x208] sm:$0xff]
        %v821 = vld [vmem:[%s183 + $0x218] sm:$0xff]
        %v822 = vld [vmem:[%s183 + $0x228] sm:$0xff]
        %v823 = vld [vmem:[%s183 + $0x238] sm:$0xff]
        %v824 = vld [vmem:[%s183 + $0x248] sm:$0xff]
        %v825 = vld [vmem:[%s183 + $0x258] sm:$0xff]
        %v826 = vld [vmem:[%s183 + $0x268] sm:$0xff]
        %v827 = vld [vmem:[%s183 + $0x278] sm:$0xff]
        %v828 = vld [vmem:[%s183 + $0x288] sm:$0xff]
        %v829 = vld [vmem:[%s183 + $0x298] sm:$0xff]
        %v830 = vld [vmem:[%s183 + $0x2a8] sm:$0xff]
        %v831 = vld [vmem:[%s183 + $0x2b8] sm:$0xff]
        %v832 = vld [vmem:[%s183 + $0x2c8] sm:$0xff]
        %v833 = vld [vmem:[%s183 + $0x2d8] sm:$0xff]
        %v834 = vld [vmem:[%s183 + $0x2e8] sm:$0xff]
        %v835 = vld [vmem:[%s183 + $0x2f8] sm:$0xff]
        %v836 = vld [vmem:[%s183 + $0x308] sm:$0xff]
        %v837 = vld [vmem:[%s183 + $0x318] sm:$0xff]
        %v838 = vld [vmem:[%s183 + $0x328] sm:$0xff]
        %v839 = vld [vmem:[%s183 + $0x338] sm:$0xff]
        %v840 = vld [vmem:[%s183 + $0x348] sm:$0xff]
        %v841 = vld [vmem:[%s183 + $0x358] sm:$0xff]
        %v842 = vld [vmem:[%s183 + $0x368] sm:$0xff]
        %v843 = vld [vmem:[%s183 + $0x378] sm:$0xff]
        %v844 = vld [vmem:[%s183 + $0x388] sm:$0xff]
        %v845 = vld [vmem:[%s183 + $0x398] sm:$0xff]
        %v846 = vld [vmem:[%s183 + $0x3a8] sm:$0xff]
        %v847 = vld [vmem:[%s183 + $0x3b8] sm:$0xff]
        %v848 = vld [vmem:[%s183 + $0x3c8] sm:$0xff]
        %v849 = vld [vmem:[%s183 + $0x3d8] sm:$0xff]
        %v850 = vld [vmem:[%s183 + $0x3e8] sm:$0xff]
        %v851 = vld [vmem:[%s183 + $0x3f8] sm:$0xff]
        %v852 = vld [vmem:[#allocation2] sm:$0xff]
        %v853 = vld [vmem:[#allocation2 + $0x8] sm:$0xff]
        %v854 = vld [vmem:[#allocation2 + $0x10] sm:$0xff]
        %v855 = vld [vmem:[#allocation2 + $0x18] sm:$0xff]
        %v856 = vld [vmem:[#allocation2 + $0x20] sm:$0xff]
        %v857 = vld [vmem:[#allocation2 + $0x28] sm:$0xff]
        %v858 = vld [vmem:[#allocation2 + $0x30] sm:$0xff]
        %v859 = vld [vmem:[#allocation2 + $0x38] sm:$0xff]
        %v860 = vld [vmem:[#allocation2 + $0x40] sm:$0xff]
        %v861 = vld [vmem:[#allocation2 + $0x48] sm:$0xff]
        %v862 = vld [vmem:[#allocation2 + $0x50] sm:$0xff]
        %v863 = vld [vmem:[#allocation2 + $0x58] sm:$0xff]
        %v864 = vld [vmem:[#allocation2 + $0x60] sm:$0xff]
        %v865 = vld [vmem:[#allocation2 + $0x68] sm:$0xff]
        %v866 = vld [vmem:[#allocation2 + $0x70] sm:$0xff]
        %v867 = vld [vmem:[#allocation2 + $0x78] sm:$0xff]
        %v868 = vld [vmem:[#allocation2 + $0x80] sm:$0xff]
        %v869 = vld [vmem:[#allocation2 + $0x88] sm:$0xff]
        %v870 = vld [vmem:[#allocation2 + $0x90] sm:$0xff]
        %v871 = vld [vmem:[#allocation2 + $0x98] sm:$0xff]
        %v872 = vld [vmem:[#allocation2 + $0xa0] sm:$0xff]
        %v873 = vld [vmem:[#allocation2 + $0xa8] sm:$0xff]
        %v874 = vld [vmem:[#allocation2 + $0xb0] sm:$0xff]
        %v875 = vld [vmem:[#allocation2 + $0xb8] sm:$0xff]
        %v876 = vld [vmem:[#allocation2 + $0xc0] sm:$0xff]
        %v877 = vld [vmem:[#allocation2 + $0xc8] sm:$0xff]
        %v878 = vld [vmem:[#allocation2 + $0xd0] sm:$0xff]
        %v879 = vld [vmem:[#allocation2 + $0xd8] sm:$0xff]
        %v880 = vld [vmem:[#allocation2 + $0xe0] sm:$0xff]
        %v881 = vld [vmem:[#allocation2 + $0xe8] sm:$0xff]
        %v882 = vld [vmem:[#allocation2 + $0xf0] sm:$0xff]
        %v883 = vld [vmem:[#allocation2 + $0xf8] sm:$0xff]
        %v884 = vld [vmem:[#allocation2 + $0x100] sm:$0xff]
        %v885 = vld [vmem:[#allocation2 + $0x108] sm:$0xff]
        %v886 = vld [vmem:[#allocation2 + $0x110] sm:$0xff]
        %v887 = vld [vmem:[#allocation2 + $0x118] sm:$0xff]
        %v888 = vld [vmem:[#allocation2 + $0x120] sm:$0xff]
        %v889 = vld [vmem:[#allocation2 + $0x128] sm:$0xff]
        %v890 = vld [vmem:[#allocation2 + $0x130] sm:$0xff]
        %v891 = vld [vmem:[#allocation2 + $0x138] sm:$0xff]
        %v892 = vld [vmem:[#allocation2 + $0x140] sm:$0xff]
        %v893 = vld [vmem:[#allocation2 + $0x148] sm:$0xff]
        %v894 = vld [vmem:[#allocation2 + $0x150] sm:$0xff]
        %v895 = vld [vmem:[#allocation2 + $0x158] sm:$0xff]
        %v896 = vld [vmem:[#allocation2 + $0x160] sm:$0xff]
        %v897 = vld [vmem:[#allocation2 + $0x168] sm:$0xff]
        %v898 = vld [vmem:[#allocation2 + $0x170] sm:$0xff]
        %v899 = vld [vmem:[#allocation2 + $0x178] sm:$0xff]
        %v900 = vld [vmem:[#allocation2 + $0x180] sm:$0xff]
        %v901 = vld [vmem:[#allocation2 + $0x188] sm:$0xff]
        %v902 = vld [vmem:[#allocation2 + $0x190] sm:$0xff]
        %v903 = vld [vmem:[#allocation2 + $0x198] sm:$0xff]
        %v904 = vld [vmem:[#allocation2 + $0x1a0] sm:$0xff]
        %v905 = vld [vmem:[#allocation2 + $0x1a8] sm:$0xff]
        %v906 = vld [vmem:[#allocation2 + $0x1b0] sm:$0xff]
        %v907 = vld [vmem:[#allocation2 + $0x1b8] sm:$0xff]
        %v908 = vld [vmem:[#allocation2 + $0x1c0] sm:$0xff]
        %v909 = vld [vmem:[#allocation2 + $0x1c8] sm:$0xff]
        %v910 = vld [vmem:[#allocation2 + $0x1d0] sm:$0xff]
        %v911 = vld [vmem:[#allocation2 + $0x1d8] sm:$0xff]
        %v912 = vld [vmem:[#allocation2 + $0x1e0] sm:$0xff]
        %v913 = vld [vmem:[#allocation2 + $0x1e8] sm:$0xff]
        %v914 = vld [vmem:[#allocation2 + $0x1f0] sm:$0xff]
        %v915 = vld [vmem:[#allocation2 + $0x1f8] sm:$0xff]
        %v916 = vmax.f32 %v852, %v788
        %v917 = vmax.f32 %v853, %v789
        %v918 = vmax.f32 %v854, %v790
        %v919 = vmax.f32 %v855, %v791
        %v920 = vmax.f32 %v856, %v792
        %v921 = vmax.f32 %v857, %v793
        %v922 = vmax.f32 %v858, %v794
        %v923 = vmax.f32 %v859, %v795
        %v924 = vmax.f32 %v860, %v796
        %v925 = vmax.f32 %v861, %v797
        %v926 = vmax.f32 %v862, %v798
        %v927 = vmax.f32 %v863, %v799
        %v928 = vmax.f32 %v864, %v800
        %v929 = vmax.f32 %v865, %v801
        %v930 = vmax.f32 %v866, %v802
        %v931 = vmax.f32 %v867, %v803
        %v932 = vmax.f32 %v868, %v804
        %v933 = vmax.f32 %v869, %v805
        %v934 = vmax.f32 %v870, %v806
        %v935 = vmax.f32 %v871, %v807
        %v936 = vmax.f32 %v872, %v808
        %v937 = vmax.f32 %v873, %v809
        %v938 = vmax.f32 %v874, %v810
        %v939 = vmax.f32 %v875, %v811
        %v940 = vmax.f32 %v876, %v812
        %v941 = vmax.f32 %v877, %v813
        %v942 = vmax.f32 %v878, %v814
        %v943 = vmax.f32 %v879, %v815
        %v944 = vmax.f32 %v880, %v816
        %v945 = vmax.f32 %v881, %v817
        %v946 = vmax.f32 %v882, %v818
        %v947 = vmax.f32 %v883, %v819
        %v948 = vmax.f32 %v884, %v820
        %v949 = vmax.f32 %v885, %v821
        %v950 = vmax.f32 %v886, %v822
        %v951 = vmax.f32 %v887, %v823
        %v952 = vmax.f32 %v888, %v824
        %v953 = vmax.f32 %v889, %v825
        %v954 = vmax.f32 %v890, %v826
        %v955 = vmax.f32 %v891, %v827
        %v956 = vmax.f32 %v892, %v828
        %v957 = vmax.f32 %v893, %v829
        %v958 = vmax.f32 %v894, %v830
        %v959 = vmax.f32 %v895, %v831
        %v960 = vmax.f32 %v896, %v832
        %v961 = vmax.f32 %v897, %v833
        %v962 = vmax.f32 %v898, %v834
        %v963 = vmax.f32 %v899, %v835
        %v964 = vmax.f32 %v900, %v836
        %v965 = vmax.f32 %v901, %v837
        %v966 = vmax.f32 %v902, %v838
        %v967 = vmax.f32 %v903, %v839
        %v968 = vmax.f32 %v904, %v840
        %v969 = vmax.f32 %v905, %v841
        %v970 = vmax.f32 %v906, %v842
        %v971 = vmax.f32 %v907, %v843
        %v972 = vmax.f32 %v908, %v844
        %v973 = vmax.f32 %v909, %v845
        %v974 = vmax.f32 %v910, %v846
        %v975 = vmax.f32 %v911, %v847
        %v976 = vmax.f32 %v912, %v848
        %v977 = vmax.f32 %v913, %v849
        %v978 = vmax.f32 %v914, %v850
        %v979 = vmax.f32 %v915, %v851
        %980 = vst [vmem:[#allocation2] sm:$0xff] %v916
        %981 = vst [vmem:[#allocation2 + $0x8] sm:$0xff] %v917
        %982 = vst [vmem:[#allocation2 + $0x10] sm:$0xff] %v918
        %983 = vst [vmem:[#allocation2 + $0x18] sm:$0xff] %v919
        %984 = vst [vmem:[#allocation2 + $0x20] sm:$0xff] %v920
        %985 = vst [vmem:[#allocation2 + $0x28] sm:$0xff] %v921
        %986 = vst [vmem:[#allocation2 + $0x30] sm:$0xff] %v922
        %987 = vst [vmem:[#allocation2 + $0x38] sm:$0xff] %v923
        %988 = vst [vmem:[#allocation2 + $0x40] sm:$0xff] %v924
        %989 = vst [vmem:[#allocation2 + $0x48] sm:$0xff] %v925
        %990 = vst [vmem:[#allocation2 + $0x50] sm:$0xff] %v926
        %991 = vst [vmem:[#allocation2 + $0x58] sm:$0xff] %v927
        %992 = vst [vmem:[#allocation2 + $0x60] sm:$0xff] %v928
        %993 = vst [vmem:[#allocation2 + $0x68] sm:$0xff] %v929
        %994 = vst [vmem:[#allocation2 + $0x70] sm:$0xff] %v930
        %995 = vst [vmem:[#allocation2 + $0x78] sm:$0xff] %v931
        %996 = vst [vmem:[#allocation2 + $0x80] sm:$0xff] %v932
        %997 = vst [vmem:[#allocation2 + $0x88] sm:$0xff] %v933
        %998 = vst [vmem:[#allocation2 + $0x90] sm:$0xff] %v934
        %999 = vst [vmem:[#allocation2 + $0x98] sm:$0xff] %v935
        %1000 = vst [vmem:[#allocation2 + $0xa0] sm:$0xff] %v936
        %1001 = vst [vmem:[#allocation2 + $0xa8] sm:$0xff] %v937
        %1002 = vst [vmem:[#allocation2 + $0xb0] sm:$0xff] %v938
        %1003 = vst [vmem:[#allocation2 + $0xb8] sm:$0xff] %v939
        %1004 = vst [vmem:[#allocation2 + $0xc0] sm:$0xff] %v940
        %1005 = vst [vmem:[#allocation2 + $0xc8] sm:$0xff] %v941
        %1006 = vst [vmem:[#allocation2 + $0xd0] sm:$0xff] %v942
        %1007 = vst [vmem:[#allocation2 + $0xd8] sm:$0xff] %v943
        %1008 = vst [vmem:[#allocation2 + $0xe0] sm:$0xff] %v944
        %1009 = vst [vmem:[#allocation2 + $0xe8] sm:$0xff] %v945
        %1010 = vst [vmem:[#allocation2 + $0xf0] sm:$0xff] %v946
        %1011 = vst [vmem:[#allocation2 + $0xf8] sm:$0xff] %v947
        %1012 = vst [vmem:[#allocation2 + $0x100] sm:$0xff] %v948
        %1013 = vst [vmem:[#allocation2 + $0x108] sm:$0xff] %v949
        %1014 = vst [vmem:[#allocation2 + $0x110] sm:$0xff] %v950
        %1015 = vst [vmem:[#allocation2 + $0x118] sm:$0xff] %v951
        %1016 = vst [vmem:[#allocation2 + $0x120] sm:$0xff] %v952
        %1017 = vst [vmem:[#allocation2 + $0x128] sm:$0xff] %v953
        %1018 = vst [vmem:[#allocation2 + $0x130] sm:$0xff] %v954
        %1019 = vst [vmem:[#allocation2 + $0x138] sm:$0xff] %v955
        %1020 = vst [vmem:[#allocation2 + $0x140] sm:$0xff] %v956
        %1021 = vst [vmem:[#allocation2 + $0x148] sm:$0xff] %v957
        %1022 = vst [vmem:[#allocation2 + $0x150] sm:$0xff] %v958
        %1023 = vst [vmem:[#allocation2 + $0x158] sm:$0xff] %v959
        %1024 = vst [vmem:[#allocation2 + $0x160] sm:$0xff] %v960
        %1025 = vst [vmem:[#allocation2 + $0x168] sm:$0xff] %v961
        %1026 = vst [vmem:[#allocation2 + $0x170] sm:$0xff] %v962
        %1027 = vst [vmem:[#allocation2 + $0x178] sm:$0xff] %v963
        %1028 = vst [vmem:[#allocation2 + $0x180] sm:$0xff] %v964
        %1029 = vst [vmem:[#allocation2 + $0x188] sm:$0xff] %v965
        %1030 = vst [vmem:[#allocation2 + $0x190] sm:$0xff] %v966
        %1031 = vst [vmem:[#allocation2 + $0x198] sm:$0xff] %v967
        %1032 = vst [vmem:[#allocation2 + $0x1a0] sm:$0xff] %v968
        %1033 = vst [vmem:[#allocation2 + $0x1a8] sm:$0xff] %v969
        %1034 = vst [vmem:[#allocation2 + $0x1b0] sm:$0xff] %v970
        %1035 = vst [vmem:[#allocation2 + $0x1b8] sm:$0xff] %v971
        %1036 = vst [vmem:[#allocation2 + $0x1c0] sm:$0xff] %v972
        %1037 = vst [vmem:[#allocation2 + $0x1c8] sm:$0xff] %v973
        %1038 = vst [vmem:[#allocation2 + $0x1d0] sm:$0xff] %v974
        %1039 = vst [vmem:[#allocation2 + $0x1d8] sm:$0xff] %v975
        %1040 = vst [vmem:[#allocation2 + $0x1e0] sm:$0xff] %v976
        %1041 = vst [vmem:[#allocation2 + $0x1e8] sm:$0xff] %v977
        %1042 = vst [vmem:[#allocation2 + $0x1f0] sm:$0xff] %v978
        %1043 = vst [vmem:[#allocation2 + $0x1f8] sm:$0xff] %v979
        %v1044 = vld [vmem:[#allocation3] sm:$0xff]
        %v1045 = vld [vmem:[#allocation3 + $0x8] sm:$0xff]
        %v1046 = vld [vmem:[#allocation3 + $0x10] sm:$0xff]
        %v1047 = vld [vmem:[#allocation3 + $0x18] sm:$0xff]
        %v1048 = vld [vmem:[#allocation3 + $0x20] sm:$0xff]
        %v1049 = vld [vmem:[#allocation3 + $0x28] sm:$0xff]
        %v1050 = vld [vmem:[#allocation3 + $0x30] sm:$0xff]
        %v1051 = vld [vmem:[#allocation3 + $0x38] sm:$0xff]
        %v1052 = vld [vmem:[#allocation3 + $0x40] sm:$0xff]
        %v1053 = vld [vmem:[#allocation3 + $0x48] sm:$0xff]
        %v1054 = vld [vmem:[#allocation3 + $0x50] sm:$0xff]
        %v1055 = vld [vmem:[#allocation3 + $0x58] sm:$0xff]
        %v1056 = vld [vmem:[#allocation3 + $0x60] sm:$0xff]
        %v1057 = vld [vmem:[#allocation3 + $0x68] sm:$0xff]
        %v1058 = vld [vmem:[#allocation3 + $0x70] sm:$0xff]
        %v1059 = vld [vmem:[#allocation3 + $0x78] sm:$0xff]
        %v1060 = vld [vmem:[#allocation3 + $0x80] sm:$0xff]
        %v1061 = vld [vmem:[#allocation3 + $0x88] sm:$0xff]
        %v1062 = vld [vmem:[#allocation3 + $0x90] sm:$0xff]
        %v1063 = vld [vmem:[#allocation3 + $0x98] sm:$0xff]
        %v1064 = vld [vmem:[#allocation3 + $0xa0] sm:$0xff]
        %v1065 = vld [vmem:[#allocation3 + $0xa8] sm:$0xff]
        %v1066 = vld [vmem:[#allocation3 + $0xb0] sm:$0xff]
        %v1067 = vld [vmem:[#allocation3 + $0xb8] sm:$0xff]
        %v1068 = vld [vmem:[#allocation3 + $0xc0] sm:$0xff]
        %v1069 = vld [vmem:[#allocation3 + $0xc8] sm:$0xff]
        %v1070 = vld [vmem:[#allocation3 + $0xd0] sm:$0xff]
        %v1071 = vld [vmem:[#allocation3 + $0xd8] sm:$0xff]
        %v1072 = vld [vmem:[#allocation3 + $0xe0] sm:$0xff]
        %v1073 = vld [vmem:[#allocation3 + $0xe8] sm:$0xff]
        %v1074 = vld [vmem:[#allocation3 + $0xf0] sm:$0xff]
        %v1075 = vld [vmem:[#allocation3 + $0xf8] sm:$0xff]
        %v1076 = vld [vmem:[#allocation3 + $0x100] sm:$0xff]
        %v1077 = vld [vmem:[#allocation3 + $0x108] sm:$0xff]
        %v1078 = vld [vmem:[#allocation3 + $0x110] sm:$0xff]
        %v1079 = vld [vmem:[#allocation3 + $0x118] sm:$0xff]
        %v1080 = vld [vmem:[#allocation3 + $0x120] sm:$0xff]
        %v1081 = vld [vmem:[#allocation3 + $0x128] sm:$0xff]
        %v1082 = vld [vmem:[#allocation3 + $0x130] sm:$0xff]
        %v1083 = vld [vmem:[#allocation3 + $0x138] sm:$0xff]
        %v1084 = vld [vmem:[#allocation3 + $0x140] sm:$0xff]
        %v1085 = vld [vmem:[#allocation3 + $0x148] sm:$0xff]
        %v1086 = vld [vmem:[#allocation3 + $0x150] sm:$0xff]
        %v1087 = vld [vmem:[#allocation3 + $0x158] sm:$0xff]
        %v1088 = vld [vmem:[#allocation3 + $0x160] sm:$0xff]
        %v1089 = vld [vmem:[#allocation3 + $0x168] sm:$0xff]
        %v1090 = vld [vmem:[#allocation3 + $0x170] sm:$0xff]
        %v1091 = vld [vmem:[#allocation3 + $0x178] sm:$0xff]
        %v1092 = vld [vmem:[#allocation3 + $0x180] sm:$0xff]
        %v1093 = vld [vmem:[#allocation3 + $0x188] sm:$0xff]
        %v1094 = vld [vmem:[#allocation3 + $0x190] sm:$0xff]
        %v1095 = vld [vmem:[#allocation3 + $0x198] sm:$0xff]
        %v1096 = vld [vmem:[#allocation3 + $0x1a0] sm:$0xff]
        %v1097 = vld [vmem:[#allocation3 + $0x1a8] sm:$0xff]
        %v1098 = vld [vmem:[#allocation3 + $0x1b0] sm:$0xff]
        %v1099 = vld [vmem:[#allocation3 + $0x1b8] sm:$0xff]
        %v1100 = vld [vmem:[#allocation3 + $0x1c0] sm:$0xff]
        %v1101 = vld [vmem:[#allocation3 + $0x1c8] sm:$0xff]
        %v1102 = vld [vmem:[#allocation3 + $0x1d0] sm:$0xff]
        %v1103 = vld [vmem:[#allocation3 + $0x1d8] sm:$0xff]
        %v1104 = vld [vmem:[#allocation3 + $0x1e0] sm:$0xff]
        %v1105 = vld [vmem:[#allocation3 + $0x1e8] sm:$0xff]
        %v1106 = vld [vmem:[#allocation3 + $0x1f0] sm:$0xff]
        %v1107 = vld [vmem:[#allocation3 + $0x1f8] sm:$0xff]
        %v1108 = vadd.f32 %v1044, %v788
        %v1109 = vadd.f32 %v1045, %v789
        %v1110 = vadd.f32 %v1046, %v790
        %v1111 = vadd.f32 %v1047, %v791
        %v1112 = vadd.f32 %v1048, %v792
        %v1113 = vadd.f32 %v1049, %v793
        %v1114 = vadd.f32 %v1050, %v794
        %v1115 = vadd.f32 %v1051, %v795
        %v1116 = vadd.f32 %v1052, %v796
        %v1117 = vadd.f32 %v1053, %v797
        %v1118 = vadd.f32 %v1054, %v798
        %v1119 = vadd.f32 %v1055, %v799
        %v1120 = vadd.f32 %v1056, %v800
        %v1121 = vadd.f32 %v1057, %v801
        %v1122 = vadd.f32 %v1058, %v802
        %v1123 = vadd.f32 %v1059, %v803
        %v1124 = vadd.f32 %v1060, %v804
        %v1125 = vadd.f32 %v1061, %v805
        %v1126 = vadd.f32 %v1062, %v806
        %v1127 = vadd.f32 %v1063, %v807
        %v1128 = vadd.f32 %v1064, %v808
        %v1129 = vadd.f32 %v1065, %v809
        %v1130 = vadd.f32 %v1066, %v810
        %v1131 = vadd.f32 %v1067, %v811
        %v1132 = vadd.f32 %v1068, %v812
        %v1133 = vadd.f32 %v1069, %v813
        %v1134 = vadd.f32 %v1070, %v814
        %v1135 = vadd.f32 %v1071, %v815
        %v1136 = vadd.f32 %v1072, %v816
        %v1137 = vadd.f32 %v1073, %v817
        %v1138 = vadd.f32 %v1074, %v818
        %v1139 = vadd.f32 %v1075, %v819
        %v1140 = vadd.f32 %v1076, %v820
        %v1141 = vadd.f32 %v1077, %v821
        %v1142 = vadd.f32 %v1078, %v822
        %v1143 = vadd.f32 %v1079, %v823
        %v1144 = vadd.f32 %v1080, %v824
        %v1145 = vadd.f32 %v1081, %v825
        %v1146 = vadd.f32 %v1082, %v826
        %v1147 = vadd.f32 %v1083, %v827
        %v1148 = vadd.f32 %v1084, %v828
        %v1149 = vadd.f32 %v1085, %v829
        %v1150 = vadd.f32 %v1086, %v830
        %v1151 = vadd.f32 %v1087, %v831
        %v1152 = vadd.f32 %v1088, %v832
        %v1153 = vadd.f32 %v1089, %v833
        %v1154 = vadd.f32 %v1090, %v834
        %v1155 = vadd.f32 %v1091, %v835
        %v1156 = vadd.f32 %v1092, %v836
        %v1157 = vadd.f32 %v1093, %v837
        %v1158 = vadd.f32 %v1094, %v838
        %v1159 = vadd.f32 %v1095, %v839
        %v1160 = vadd.f32 %v1096, %v840
        %v1161 = vadd.f32 %v1097, %v841
        %v1162 = vadd.f32 %v1098, %v842
        %v1163 = vadd.f32 %v1099, %v843
        %v1164 = vadd.f32 %v1100, %v844
        %v1165 = vadd.f32 %v1101, %v845
        %v1166 = vadd.f32 %v1102, %v846
        %v1167 = vadd.f32 %v1103, %v847
        %v1168 = vadd.f32 %v1104, %v848
        %v1169 = vadd.f32 %v1105, %v849
        %v1170 = vadd.f32 %v1106, %v850
        %v1171 = vadd.f32 %v1107, %v851
        %1172 = vst [vmem:[#allocation3] sm:$0xff] %v1108
        %1173 = vst [vmem:[#allocation3 + $0x8] sm:$0xff] %v1109
        %1174 = vst [vmem:[#allocation3 + $0x10] sm:$0xff] %v1110
        %1175 = vst [vmem:[#allocation3 + $0x18] sm:$0xff] %v1111
        %1176 = vst [vmem:[#allocation3 + $0x20] sm:$0xff] %v1112
        %1177 = vst [vmem:[#allocation3 + $0x28] sm:$0xff] %v1113
        %1178 = vst [vmem:[#allocation3 + $0x30] sm:$0xff] %v1114
        %1179 = vst [vmem:[#allocation3 + $0x38] sm:$0xff] %v1115
        %1180 = vst [vmem:[#allocation3 + $0x40] sm:$0xff] %v1116
        %1181 = vst [vmem:[#allocation3 + $0x48] sm:$0xff] %v1117
        %1182 = vst [vmem:[#allocation3 + $0x50] sm:$0xff] %v1118
        %1183 = vst [vmem:[#allocation3 + $0x58] sm:$0xff] %v1119
        %1184 = vst [vmem:[#allocation3 + $0x60] sm:$0xff] %v1120
        %1185 = vst [vmem:[#allocation3 + $0x68] sm:$0xff] %v1121
        %1186 = vst [vmem:[#allocation3 + $0x70] sm:$0xff] %v1122
        %1187 = vst [vmem:[#allocation3 + $0x78] sm:$0xff] %v1123
        %1188 = vst [vmem:[#allocation3 + $0x80] sm:$0xff] %v1124
        %1189 = vst [vmem:[#allocation3 + $0x88] sm:$0xff] %v1125
        %1190 = vst [vmem:[#allocation3 + $0x90] sm:$0xff] %v1126
        %1191 = vst [vmem:[#allocation3 + $0x98] sm:$0xff] %v1127
        %1192 = vst [vmem:[#allocation3 + $0xa0] sm:$0xff] %v1128
        %1193 = vst [vmem:[#allocation3 + $0xa8] sm:$0xff] %v1129
        %1194 = vst [vmem:[#allocation3 + $0xb0] sm:$0xff] %v1130
        %1195 = vst [vmem:[#allocation3 + $0xb8] sm:$0xff] %v1131
        %1196 = vst [vmem:[#allocation3 + $0xc0] sm:$0xff] %v1132
        %1197 = vst [vmem:[#allocation3 + $0xc8] sm:$0xff] %v1133
        %1198 = vst [vmem:[#allocation3 + $0xd0] sm:$0xff] %v1134
        %1199 = vst [vmem:[#allocation3 + $0xd8] sm:$0xff] %v1135
        %1200 = vst [vmem:[#allocation3 + $0xe0] sm:$0xff] %v1136
        %1201 = vst [vmem:[#allocation3 + $0xe8] sm:$0xff] %v1137
        %1202 = vst [vmem:[#allocation3 + $0xf0] sm:$0xff] %v1138
        %1203 = vst [vmem:[#allocation3 + $0xf8] sm:$0xff] %v1139
        %1204 = vst [vmem:[#allocation3 + $0x100] sm:$0xff] %v1140
        %1205 = vst [vmem:[#allocation3 + $0x108] sm:$0xff] %v1141
        %1206 = vst [vmem:[#allocation3 + $0x110] sm:$0xff] %v1142
        %1207 = vst [vmem:[#allocation3 + $0x118] sm:$0xff] %v1143
        %1208 = vst [vmem:[#allocation3 + $0x120] sm:$0xff] %v1144
        %1209 = vst [vmem:[#allocation3 + $0x128] sm:$0xff] %v1145
        %1210 = vst [vmem:[#allocation3 + $0x130] sm:$0xff] %v1146
        %1211 = vst [vmem:[#allocation3 + $0x138] sm:$0xff] %v1147
        %1212 = vst [vmem:[#allocation3 + $0x140] sm:$0xff] %v1148
        %1213 = vst [vmem:[#allocation3 + $0x148] sm:$0xff] %v1149
        %1214 = vst [vmem:[#allocation3 + $0x150] sm:$0xff] %v1150
        %1215 = vst [vmem:[#allocation3 + $0x158] sm:$0xff] %v1151
        %1216 = vst [vmem:[#allocation3 + $0x160] sm:$0xff] %v1152
        %1217 = vst [vmem:[#allocation3 + $0x168] sm:$0xff] %v1153
        %1218 = vst [vmem:[#allocation3 + $0x170] sm:$0xff] %v1154
        %1219 = vst [vmem:[#allocation3 + $0x178] sm:$0xff] %v1155
        %1220 = vst [vmem:[#allocation3 + $0x180] sm:$0xff] %v1156
        %1221 = vst [vmem:[#allocation3 + $0x188] sm:$0xff] %v1157
        %1222 = vst [vmem:[#allocation3 + $0x190] sm:$0xff] %v1158
        %1223 = vst [vmem:[#allocation3 + $0x198] sm:$0xff] %v1159
        %1224 = vst [vmem:[#allocation3 + $0x1a0] sm:$0xff] %v1160
        %1225 = vst [vmem:[#allocation3 + $0x1a8] sm:$0xff] %v1161
        %1226 = vst [vmem:[#allocation3 + $0x1b0] sm:$0xff] %v1162
        %1227 = vst [vmem:[#allocation3 + $0x1b8] sm:$0xff] %v1163
        %1228 = vst [vmem:[#allocation3 + $0x1c0] sm:$0xff] %v1164
        %1229 = vst [vmem:[#allocation3 + $0x1c8] sm:$0xff] %v1165
        %1230 = vst [vmem:[#allocation3 + $0x1d0] sm:$0xff] %v1166
        %1231 = vst [vmem:[#allocation3 + $0x1d8] sm:$0xff] %v1167
        %1232 = vst [vmem:[#allocation3 + $0x1e0] sm:$0xff] %v1168
        %1233 = vst [vmem:[#allocation3 + $0x1e8] sm:$0xff] %v1169
        %1234 = vst [vmem:[#allocation3 + $0x1f0] sm:$0xff] %v1170
        %1235 = vst [vmem:[#allocation3 + $0x1f8] sm:$0xff] %v1171
        // Predicated region
        $region41: #{tpu_custom_call.1} parent=31 // pred_check
          %p1236 = pneg %p208
        $region42: #{tpu_custom_call.1} parent=31 // pred_check_branch
          %1238 = sbr.rel (%p1236) target = $region44
        $region43: #{tpu_custom_call.1} parent=31 // pred_region
          %v1239 = vld [vmem:[#allocation2] sm:$0xff]
          %v1240 = vld [vmem:[#allocation2 + $0x8] sm:$0xff]
          %v1241 = vld [vmem:[#allocation2 + $0x10] sm:$0xff]
          %v1242 = vld [vmem:[#allocation2 + $0x18] sm:$0xff]
          %v1243 = vld [vmem:[#allocation2 + $0x20] sm:$0xff]
          %v1244 = vld [vmem:[#allocation2 + $0x28] sm:$0xff]
          %v1245 = vld [vmem:[#allocation2 + $0x30] sm:$0xff]
          %v1246 = vld [vmem:[#allocation2 + $0x38] sm:$0xff]
          %v1247 = vld [vmem:[#allocation2 + $0x40] sm:$0xff]
          %v1248 = vld [vmem:[#allocation2 + $0x48] sm:$0xff]
          %v1249 = vld [vmem:[#allocation2 + $0x50] sm:$0xff]
          %v1250 = vld [vmem:[#allocation2 + $0x58] sm:$0xff]
          %v1251 = vld [vmem:[#allocation2 + $0x60] sm:$0xff]
          %v1252 = vld [vmem:[#allocation2 + $0x68] sm:$0xff]
          %v1253 = vld [vmem:[#allocation2 + $0x70] sm:$0xff]
          %v1254 = vld [vmem:[#allocation2 + $0x78] sm:$0xff]
          %v1255 = vld [vmem:[#allocation2 + $0x80] sm:$0xff]
          %v1256 = vld [vmem:[#allocation2 + $0x88] sm:$0xff]
          %v1257 = vld [vmem:[#allocation2 + $0x90] sm:$0xff]
          %v1258 = vld [vmem:[#allocation2 + $0x98] sm:$0xff]
          %v1259 = vld [vmem:[#allocation2 + $0xa0] sm:$0xff]
          %v1260 = vld [vmem:[#allocation2 + $0xa8] sm:$0xff]
          %v1261 = vld [vmem:[#allocation2 + $0xb0] sm:$0xff]
          %v1262 = vld [vmem:[#allocation2 + $0xb8] sm:$0xff]
          %v1263 = vld [vmem:[#allocation2 + $0xc0] sm:$0xff]
          %v1264 = vld [vmem:[#allocation2 + $0xc8] sm:$0xff]
          %v1265 = vld [vmem:[#allocation2 + $0xd0] sm:$0xff]
          %v1266 = vld [vmem:[#allocation2 + $0xd8] sm:$0xff]
          %v1267 = vld [vmem:[#allocation2 + $0xe0] sm:$0xff]
          %v1268 = vld [vmem:[#allocation2 + $0xe8] sm:$0xff]
          %v1269 = vld [vmem:[#allocation2 + $0xf0] sm:$0xff]
          %v1270 = vld [vmem:[#allocation2 + $0xf8] sm:$0xff]
          %v1271 = vld [vmem:[#allocation2 + $0x100] sm:$0xff]
          %v1272 = vld [vmem:[#allocation2 + $0x108] sm:$0xff]
          %v1273 = vld [vmem:[#allocation2 + $0x110] sm:$0xff]
          %v1274 = vld [vmem:[#allocation2 + $0x118] sm:$0xff]
          %v1275 = vld [vmem:[#allocation2 + $0x120] sm:$0xff]
          %v1276 = vld [vmem:[#allocation2 + $0x128] sm:$0xff]
          %v1277 = vld [vmem:[#allocation2 + $0x130] sm:$0xff]
          %v1278 = vld [vmem:[#allocation2 + $0x138] sm:$0xff]
          %v1279 = vld [vmem:[#allocation2 + $0x140] sm:$0xff]
          %v1280 = vld [vmem:[#allocation2 + $0x148] sm:$0xff]
          %v1281 = vld [vmem:[#allocation2 + $0x150] sm:$0xff]
          %v1282 = vld [vmem:[#allocation2 + $0x158] sm:$0xff]
          %v1283 = vld [vmem:[#allocation2 + $0x160] sm:$0xff]
          %v1284 = vld [vmem:[#allocation2 + $0x168] sm:$0xff]
          %v1285 = vld [vmem:[#allocation2 + $0x170] sm:$0xff]
          %v1286 = vld [vmem:[#allocation2 + $0x178] sm:$0xff]
          %v1287 = vld [vmem:[#allocation2 + $0x180] sm:$0xff]
          %v1288 = vld [vmem:[#allocation2 + $0x188] sm:$0xff]
          %v1289 = vld [vmem:[#allocation2 + $0x190] sm:$0xff]
          %v1290 = vld [vmem:[#allocation2 + $0x198] sm:$0xff]
          %v1291 = vld [vmem:[#allocation2 + $0x1a0] sm:$0xff]
          %v1292 = vld [vmem:[#allocation2 + $0x1a8] sm:$0xff]
          %v1293 = vld [vmem:[#allocation2 + $0x1b0] sm:$0xff]
          %v1294 = vld [vmem:[#allocation2 + $0x1b8] sm:$0xff]
          %v1295 = vld [vmem:[#allocation2 + $0x1c0] sm:$0xff]
          %v1296 = vld [vmem:[#allocation2 + $0x1c8] sm:$0xff]
          %v1297 = vld [vmem:[#allocation2 + $0x1d0] sm:$0xff]
          %v1298 = vld [vmem:[#allocation2 + $0x1d8] sm:$0xff]
          %v1299 = vld [vmem:[#allocation2 + $0x1e0] sm:$0xff]
          %v1300 = vld [vmem:[#allocation2 + $0x1e8] sm:$0xff]
          %v1301 = vld [vmem:[#allocation2 + $0x1f0] sm:$0xff]
          %v1302 = vld [vmem:[#allocation2 + $0x1f8] sm:$0xff]
          %1303 = vmax.xlane.f32.xlu0 %v1239
          %v1304 = vpop.xlane.xlu0 %1303
          %1305 = vmax.xlane.f32.xlu0 %v1240
          %v1306 = vpop.xlane.xlu0 %1305
          %1307 = vmax.xlane.f32.xlu0 %v1241
          %v1308 = vpop.xlane.xlu0 %1307
          %1309 = vmax.xlane.f32.xlu0 %v1242
          %v1310 = vpop.xlane.xlu0 %1309
          %1311 = vmax.xlane.f32.xlu0 %v1243
          %v1312 = vpop.xlane.xlu0 %1311
          %1313 = vmax.xlane.f32.xlu0 %v1244
          %v1314 = vpop.xlane.xlu0 %1313
          %1315 = vmax.xlane.f32.xlu0 %v1245
          %v1316 = vpop.xlane.xlu0 %1315
          %1317 = vmax.xlane.f32.xlu0 %v1246
          %v1318 = vpop.xlane.xlu0 %1317
          %1319 = vmax.xlane.f32.xlu0 %v1247
          %v1320 = vpop.xlane.xlu0 %1319
          %1321 = vmax.xlane.f32.xlu0 %v1248
          %v1322 = vpop.xlane.xlu0 %1321
          %1323 = vmax.xlane.f32.xlu0 %v1249
          %v1324 = vpop.xlane.xlu0 %1323
          %1325 = vmax.xlane.f32.xlu0 %v1250
          %v1326 = vpop.xlane.xlu0 %1325
          %1327 = vmax.xlane.f32.xlu0 %v1251
          %v1328 = vpop.xlane.xlu0 %1327
          %1329 = vmax.xlane.f32.xlu0 %v1252
          %v1330 = vpop.xlane.xlu0 %1329
          %1331 = vmax.xlane.f32.xlu0 %v1253
          %v1332 = vpop.xlane.xlu0 %1331
          %1333 = vmax.xlane.f32.xlu0 %v1254
          %v1334 = vpop.xlane.xlu0 %1333
          %1335 = vmax.xlane.f32.xlu0 %v1255
          %v1336 = vpop.xlane.xlu0 %1335
          %1337 = vmax.xlane.f32.xlu0 %v1256
          %v1338 = vpop.xlane.xlu0 %1337
          %1339 = vmax.xlane.f32.xlu0 %v1257
          %v1340 = vpop.xlane.xlu0 %1339
          %1341 = vmax.xlane.f32.xlu0 %v1258
          %v1342 = vpop.xlane.xlu0 %1341
          %1343 = vmax.xlane.f32.xlu0 %v1259
          %v1344 = vpop.xlane.xlu0 %1343
          %1345 = vmax.xlane.f32.xlu0 %v1260
          %v1346 = vpop.xlane.xlu0 %1345
          %1347 = vmax.xlane.f32.xlu0 %v1261
          %v1348 = vpop.xlane.xlu0 %1347
          %1349 = vmax.xlane.f32.xlu0 %v1262
          %v1350 = vpop.xlane.xlu0 %1349
          %1351 = vmax.xlane.f32.xlu0 %v1263
          %v1352 = vpop.xlane.xlu0 %1351
          %1353 = vmax.xlane.f32.xlu0 %v1264
          %v1354 = vpop.xlane.xlu0 %1353
          %1355 = vmax.xlane.f32.xlu0 %v1265
          %v1356 = vpop.xlane.xlu0 %1355
          %1357 = vmax.xlane.f32.xlu0 %v1266
          %v1358 = vpop.xlane.xlu0 %1357
          %1359 = vmax.xlane.f32.xlu0 %v1267
          %v1360 = vpop.xlane.xlu0 %1359
          %1361 = vmax.xlane.f32.xlu0 %v1268
          %v1362 = vpop.xlane.xlu0 %1361
          %1363 = vmax.xlane.f32.xlu0 %v1269
          %v1364 = vpop.xlane.xlu0 %1363
          %1365 = vmax.xlane.f32.xlu0 %v1270
          %v1366 = vpop.xlane.xlu0 %1365
          %1367 = vmax.xlane.f32.xlu0 %v1271
          %v1368 = vpop.xlane.xlu0 %1367
          %1369 = vmax.xlane.f32.xlu0 %v1272
          %v1370 = vpop.xlane.xlu0 %1369
          %1371 = vmax.xlane.f32.xlu0 %v1273
          %v1372 = vpop.xlane.xlu0 %1371
          %1373 = vmax.xlane.f32.xlu0 %v1274
          %v1374 = vpop.xlane.xlu0 %1373
          %1375 = vmax.xlane.f32.xlu0 %v1275
          %v1376 = vpop.xlane.xlu0 %1375
          %1377 = vmax.xlane.f32.xlu0 %v1276
          %v1378 = vpop.xlane.xlu0 %1377
          %1379 = vmax.xlane.f32.xlu0 %v1277
          %v1380 = vpop.xlane.xlu0 %1379
          %1381 = vmax.xlane.f32.xlu0 %v1278
          %v1382 = vpop.xlane.xlu0 %1381
          %1383 = vmax.xlane.f32.xlu0 %v1279
          %v1384 = vpop.xlane.xlu0 %1383
          %1385 = vmax.xlane.f32.xlu0 %v1280
          %v1386 = vpop.xlane.xlu0 %1385
          %1387 = vmax.xlane.f32.xlu0 %v1281
          %v1388 = vpop.xlane.xlu0 %1387
          %1389 = vmax.xlane.f32.xlu0 %v1282
          %v1390 = vpop.xlane.xlu0 %1389
          %1391 = vmax.xlane.f32.xlu0 %v1283
          %v1392 = vpop.xlane.xlu0 %1391
          %1393 = vmax.xlane.f32.xlu0 %v1284
          %v1394 = vpop.xlane.xlu0 %1393
          %1395 = vmax.xlane.f32.xlu0 %v1285
          %v1396 = vpop.xlane.xlu0 %1395
          %1397 = vmax.xlane.f32.xlu0 %v1286
          %v1398 = vpop.xlane.xlu0 %1397
          %1399 = vmax.xlane.f32.xlu0 %v1287
          %v1400 = vpop.xlane.xlu0 %1399
          %1401 = vmax.xlane.f32.xlu0 %v1288
          %v1402 = vpop.xlane.xlu0 %1401
          %1403 = vmax.xlane.f32.xlu0 %v1289
          %v1404 = vpop.xlane.xlu0 %1403
          %1405 = vmax.xlane.f32.xlu0 %v1290
          %v1406 = vpop.xlane.xlu0 %1405
          %1407 = vmax.xlane.f32.xlu0 %v1291
          %v1408 = vpop.xlane.xlu0 %1407
          %1409 = vmax.xlane.f32.xlu0 %v1292
          %v1410 = vpop.xlane.xlu0 %1409
          %1411 = vmax.xlane.f32.xlu0 %v1293
          %v1412 = vpop.xlane.xlu0 %1411
          %1413 = vmax.xlane.f32.xlu0 %v1294
          %v1414 = vpop.xlane.xlu0 %1413
          %1415 = vmax.xlane.f32.xlu0 %v1295
          %v1416 = vpop.xlane.xlu0 %1415
          %1417 = vmax.xlane.f32.xlu0 %v1296
          %v1418 = vpop.xlane.xlu0 %1417
          %1419 = vmax.xlane.f32.xlu0 %v1297
          %v1420 = vpop.xlane.xlu0 %1419
          %1421 = vmax.xlane.f32.xlu0 %v1298
          %v1422 = vpop.xlane.xlu0 %1421
          %1423 = vmax.xlane.f32.xlu0 %v1299
          %v1424 = vpop.xlane.xlu0 %1423
          %1425 = vmax.xlane.f32.xlu0 %v1300
          %v1426 = vpop.xlane.xlu0 %1425
          %1427 = vmax.xlane.f32.xlu0 %v1301
          %v1428 = vpop.xlane.xlu0 %1427
          %1429 = vmax.xlane.f32.xlu0 %v1302
          %v1430 = vpop.xlane.xlu0 %1429
          %v1431 = vld [vmem:[#allocation3] sm:$0xff]
          %v1432 = vld [vmem:[#allocation3 + $0x8] sm:$0xff]
          %v1433 = vld [vmem:[#allocation3 + $0x10] sm:$0xff]
          %v1434 = vld [vmem:[#allocation3 + $0x18] sm:$0xff]
          %v1435 = vld [vmem:[#allocation3 + $0x20] sm:$0xff]
          %v1436 = vld [vmem:[#allocation3 + $0x28] sm:$0xff]
          %v1437 = vld [vmem:[#allocation3 + $0x30] sm:$0xff]
          %v1438 = vld [vmem:[#allocation3 + $0x38] sm:$0xff]
          %v1439 = vld [vmem:[#allocation3 + $0x40] sm:$0xff]
          %v1440 = vld [vmem:[#allocation3 + $0x48] sm:$0xff]
          %v1441 = vld [vmem:[#allocation3 + $0x50] sm:$0xff]
          %v1442 = vld [vmem:[#allocation3 + $0x58] sm:$0xff]
          %v1443 = vld [vmem:[#allocation3 + $0x60] sm:$0xff]
          %v1444 = vld [vmem:[#allocation3 + $0x68] sm:$0xff]
          %v1445 = vld [vmem:[#allocation3 + $0x70] sm:$0xff]
          %v1446 = vld [vmem:[#allocation3 + $0x78] sm:$0xff]
          %v1447 = vld [vmem:[#allocation3 + $0x80] sm:$0xff]
          %v1448 = vld [vmem:[#allocation3 + $0x88] sm:$0xff]
          %v1449 = vld [vmem:[#allocation3 + $0x90] sm:$0xff]
          %v1450 = vld [vmem:[#allocation3 + $0x98] sm:$0xff]
          %v1451 = vld [vmem:[#allocation3 + $0xa0] sm:$0xff]
          %v1452 = vld [vmem:[#allocation3 + $0xa8] sm:$0xff]
          %v1453 = vld [vmem:[#allocation3 + $0xb0] sm:$0xff]
          %v1454 = vld [vmem:[#allocation3 + $0xb8] sm:$0xff]
          %v1455 = vld [vmem:[#allocation3 + $0xc0] sm:$0xff]
          %v1456 = vld [vmem:[#allocation3 + $0xc8] sm:$0xff]
          %v1457 = vld [vmem:[#allocation3 + $0xd0] sm:$0xff]
          %v1458 = vld [vmem:[#allocation3 + $0xd8] sm:$0xff]
          %v1459 = vld [vmem:[#allocation3 + $0xe0] sm:$0xff]
          %v1460 = vld [vmem:[#allocation3 + $0xe8] sm:$0xff]
          %v1461 = vld [vmem:[#allocation3 + $0xf0] sm:$0xff]
          %v1462 = vld [vmem:[#allocation3 + $0xf8] sm:$0xff]
          %v1463 = vld [vmem:[#allocation3 + $0x100] sm:$0xff]
          %v1464 = vld [vmem:[#allocation3 + $0x108] sm:$0xff]
          %v1465 = vld [vmem:[#allocation3 + $0x110] sm:$0xff]
          %v1466 = vld [vmem:[#allocation3 + $0x118] sm:$0xff]
          %v1467 = vld [vmem:[#allocation3 + $0x120] sm:$0xff]
          %v1468 = vld [vmem:[#allocation3 + $0x128] sm:$0xff]
          %v1469 = vld [vmem:[#allocation3 + $0x130] sm:$0xff]
          %v1470 = vld [vmem:[#allocation3 + $0x138] sm:$0xff]
          %v1471 = vld [vmem:[#allocation3 + $0x140] sm:$0xff]
          %v1472 = vld [vmem:[#allocation3 + $0x148] sm:$0xff]
          %v1473 = vld [vmem:[#allocation3 + $0x150] sm:$0xff]
          %v1474 = vld [vmem:[#allocation3 + $0x158] sm:$0xff]
          %v1475 = vld [vmem:[#allocation3 + $0x160] sm:$0xff]
          %v1476 = vld [vmem:[#allocation3 + $0x168] sm:$0xff]
          %v1477 = vld [vmem:[#allocation3 + $0x170] sm:$0xff]
          %v1478 = vld [vmem:[#allocation3 + $0x178] sm:$0xff]
          %v1479 = vld [vmem:[#allocation3 + $0x180] sm:$0xff]
          %v1480 = vld [vmem:[#allocation3 + $0x188] sm:$0xff]
          %v1481 = vld [vmem:[#allocation3 + $0x190] sm:$0xff]
          %v1482 = vld [vmem:[#allocation3 + $0x198] sm:$0xff]
          %v1483 = vld [vmem:[#allocation3 + $0x1a0] sm:$0xff]
          %v1484 = vld [vmem:[#allocation3 + $0x1a8] sm:$0xff]
          %v1485 = vld [vmem:[#allocation3 + $0x1b0] sm:$0xff]
          %v1486 = vld [vmem:[#allocation3 + $0x1b8] sm:$0xff]
          %v1487 = vld [vmem:[#allocation3 + $0x1c0] sm:$0xff]
          %v1488 = vld [vmem:[#allocation3 + $0x1c8] sm:$0xff]
          %v1489 = vld [vmem:[#allocation3 + $0x1d0] sm:$0xff]
          %v1490 = vld [vmem:[#allocation3 + $0x1d8] sm:$0xff]
          %v1491 = vld [vmem:[#allocation3 + $0x1e0] sm:$0xff]
          %v1492 = vld [vmem:[#allocation3 + $0x1e8] sm:$0xff]
          %v1493 = vld [vmem:[#allocation3 + $0x1f0] sm:$0xff]
          %v1494 = vld [vmem:[#allocation3 + $0x1f8] sm:$0xff]
          %1495 = vadd.xlane.f32.xlu0 %v1431
          %v1496 = vpop.xlane.xlu0 %1495
          %1497 = vadd.xlane.f32.xlu0 %v1432
          %v1498 = vpop.xlane.xlu0 %1497
          %1499 = vadd.xlane.f32.xlu0 %v1433
          %v1500 = vpop.xlane.xlu0 %1499
          %1501 = vadd.xlane.f32.xlu0 %v1434
          %v1502 = vpop.xlane.xlu0 %1501
          %1503 = vadd.xlane.f32.xlu0 %v1435
          %v1504 = vpop.xlane.xlu0 %1503
          %1505 = vadd.xlane.f32.xlu0 %v1436
          %v1506 = vpop.xlane.xlu0 %1505
          %1507 = vadd.xlane.f32.xlu0 %v1437
          %v1508 = vpop.xlane.xlu0 %1507
          %1509 = vadd.xlane.f32.xlu0 %v1438
          %v1510 = vpop.xlane.xlu0 %1509
          %1511 = vadd.xlane.f32.xlu0 %v1439
          %v1512 = vpop.xlane.xlu0 %1511
          %1513 = vadd.xlane.f32.xlu0 %v1440
          %v1514 = vpop.xlane.xlu0 %1513
          %1515 = vadd.xlane.f32.xlu0 %v1441
          %v1516 = vpop.xlane.xlu0 %1515
          %1517 = vadd.xlane.f32.xlu0 %v1442
          %v1518 = vpop.xlane.xlu0 %1517
          %1519 = vadd.xlane.f32.xlu0 %v1443
          %v1520 = vpop.xlane.xlu0 %1519
          %1521 = vadd.xlane.f32.xlu0 %v1444
          %v1522 = vpop.xlane.xlu0 %1521
          %1523 = vadd.xlane.f32.xlu0 %v1445
          %v1524 = vpop.xlane.xlu0 %1523
          %1525 = vadd.xlane.f32.xlu0 %v1446
          %v1526 = vpop.xlane.xlu0 %1525
          %1527 = vadd.xlane.f32.xlu0 %v1447
          %v1528 = vpop.xlane.xlu0 %1527
          %1529 = vadd.xlane.f32.xlu0 %v1448
          %v1530 = vpop.xlane.xlu0 %1529
          %1531 = vadd.xlane.f32.xlu0 %v1449
          %v1532 = vpop.xlane.xlu0 %1531
          %1533 = vadd.xlane.f32.xlu0 %v1450
          %v1534 = vpop.xlane.xlu0 %1533
          %1535 = vadd.xlane.f32.xlu0 %v1451
          %v1536 = vpop.xlane.xlu0 %1535
          %1537 = vadd.xlane.f32.xlu0 %v1452
          %v1538 = vpop.xlane.xlu0 %1537
          %1539 = vadd.xlane.f32.xlu0 %v1453
          %v1540 = vpop.xlane.xlu0 %1539
          %1541 = vadd.xlane.f32.xlu0 %v1454
          %v1542 = vpop.xlane.xlu0 %1541
          %1543 = vadd.xlane.f32.xlu0 %v1455
          %v1544 = vpop.xlane.xlu0 %1543
          %1545 = vadd.xlane.f32.xlu0 %v1456
          %v1546 = vpop.xlane.xlu0 %1545
          %1547 = vadd.xlane.f32.xlu0 %v1457
          %v1548 = vpop.xlane.xlu0 %1547
          %1549 = vadd.xlane.f32.xlu0 %v1458
          %v1550 = vpop.xlane.xlu0 %1549
          %1551 = vadd.xlane.f32.xlu0 %v1459
          %v1552 = vpop.xlane.xlu0 %1551
          %1553 = vadd.xlane.f32.xlu0 %v1460
          %v1554 = vpop.xlane.xlu0 %1553
          %1555 = vadd.xlane.f32.xlu0 %v1461
          %v1556 = vpop.xlane.xlu0 %1555
          %1557 = vadd.xlane.f32.xlu0 %v1462
          %v1558 = vpop.xlane.xlu0 %1557
          %1559 = vadd.xlane.f32.xlu0 %v1463
          %v1560 = vpop.xlane.xlu0 %1559
          %1561 = vadd.xlane.f32.xlu0 %v1464
          %v1562 = vpop.xlane.xlu0 %1561
          %1563 = vadd.xlane.f32.xlu0 %v1465
          %v1564 = vpop.xlane.xlu0 %1563
          %1565 = vadd.xlane.f32.xlu0 %v1466
          %v1566 = vpop.xlane.xlu0 %1565
          %1567 = vadd.xlane.f32.xlu0 %v1467
          %v1568 = vpop.xlane.xlu0 %1567
          %1569 = vadd.xlane.f32.xlu0 %v1468
          %v1570 = vpop.xlane.xlu0 %1569
          %1571 = vadd.xlane.f32.xlu0 %v1469
          %v1572 = vpop.xlane.xlu0 %1571
          %1573 = vadd.xlane.f32.xlu0 %v1470
          %v1574 = vpop.xlane.xlu0 %1573
          %1575 = vadd.xlane.f32.xlu0 %v1471
          %v1576 = vpop.xlane.xlu0 %1575
          %1577 = vadd.xlane.f32.xlu0 %v1472
          %v1578 = vpop.xlane.xlu0 %1577
          %1579 = vadd.xlane.f32.xlu0 %v1473
          %v1580 = vpop.xlane.xlu0 %1579
          %1581 = vadd.xlane.f32.xlu0 %v1474
          %v1582 = vpop.xlane.xlu0 %1581
          %1583 = vadd.xlane.f32.xlu0 %v1475
          %v1584 = vpop.xlane.xlu0 %1583
          %1585 = vadd.xlane.f32.xlu0 %v1476
          %v1586 = vpop.xlane.xlu0 %1585
          %1587 = vadd.xlane.f32.xlu0 %v1477
          %v1588 = vpop.xlane.xlu0 %1587
          %1589 = vadd.xlane.f32.xlu0 %v1478
          %v1590 = vpop.xlane.xlu0 %1589
          %1591 = vadd.xlane.f32.xlu0 %v1479
          %v1592 = vpop.xlane.xlu0 %1591
          %1593 = vadd.xlane.f32.xlu0 %v1480
          %v1594 = vpop.xlane.xlu0 %1593
          %1595 = vadd.xlane.f32.xlu0 %v1481
          %v1596 = vpop.xlane.xlu0 %1595
          %1597 = vadd.xlane.f32.xlu0 %v1482
          %v1598 = vpop.xlane.xlu0 %1597
          %1599 = vadd.xlane.f32.xlu0 %v1483
          %v1600 = vpop.xlane.xlu0 %1599
          %1601 = vadd.xlane.f32.xlu0 %v1484
          %v1602 = vpop.xlane.xlu0 %1601
          %1603 = vadd.xlane.f32.xlu0 %v1485
          %v1604 = vpop.xlane.xlu0 %1603
          %1605 = vadd.xlane.f32.xlu0 %v1486
          %v1606 = vpop.xlane.xlu0 %1605
          %1607 = vadd.xlane.f32.xlu0 %v1487
          %v1608 = vpop.xlane.xlu0 %1607
          %1609 = vadd.xlane.f32.xlu0 %v1488
          %v1610 = vpop.xlane.xlu0 %1609
          %1611 = vadd.xlane.f32.xlu0 %v1489
          %v1612 = vpop.xlane.xlu0 %1611
          %1613 = vadd.xlane.f32.xlu0 %v1490
          %v1614 = vpop.xlane.xlu0 %1613
          %1615 = vadd.xlane.f32.xlu0 %v1491
          %v1616 = vpop.xlane.xlu0 %1615
          %1617 = vadd.xlane.f32.xlu0 %v1492
          %v1618 = vpop.xlane.xlu0 %1617
          %1619 = vadd.xlane.f32.xlu0 %v1493
          %v1620 = vpop.xlane.xlu0 %1619
          %1621 = vadd.xlane.f32.xlu0 %v1494
          %v1622 = vpop.xlane.xlu0 %1621
          %v1623 = vmul.f32 %v1496, 0.00390625
          %v1624 = vmul.f32 %v1498, 0.00390625
          %v1625 = vmul.f32 %v1500, 0.00390625
          %v1626 = vmul.f32 %v1502, 0.00390625
          %v1627 = vmul.f32 %v1504, 0.00390625
          %v1628 = vmul.f32 %v1506, 0.00390625
          %v1629 = vmul.f32 %v1508, 0.00390625
          %v1630 = vmul.f32 %v1510, 0.00390625
          %v1631 = vmul.f32 %v1512, 0.00390625
          %v1632 = vmul.f32 %v1514, 0.00390625
          %v1633 = vmul.f32 %v1516, 0.00390625
          %v1634 = vmul.f32 %v1518, 0.00390625
          %v1635 = vmul.f32 %v1520, 0.00390625
          %v1636 = vmul.f32 %v1522, 0.00390625
          %v1637 = vmul.f32 %v1524, 0.00390625
          %v1638 = vmul.f32 %v1526, 0.00390625
          %v1639 = vmul.f32 %v1528, 0.00390625
          %v1640 = vmul.f32 %v1530, 0.00390625
          %v1641 = vmul.f32 %v1532, 0.00390625
          %v1642 = vmul.f32 %v1534, 0.00390625
          %v1643 = vmul.f32 %v1536, 0.00390625
          %v1644 = vmul.f32 %v1538, 0.00390625
          %v1645 = vmul.f32 %v1540, 0.00390625
          %v1646 = vmul.f32 %v1542, 0.00390625
          %v1647 = vmul.f32 %v1544, 0.00390625
          %v1648 = vmul.f32 %v1546, 0.00390625
          %v1649 = vmul.f32 %v1548, 0.00390625
          %v1650 = vmul.f32 %v1550, 0.00390625
          %v1651 = vmul.f32 %v1552, 0.00390625
          %v1652 = vmul.f32 %v1554, 0.00390625
          %v1653 = vmul.f32 %v1556, 0.00390625
          %v1654 = vmul.f32 %v1558, 0.00390625
          %v1655 = vmul.f32 %v1560, 0.00390625
          %v1656 = vmul.f32 %v1562, 0.00390625
          %v1657 = vmul.f32 %v1564, 0.00390625
          %v1658 = vmul.f32 %v1566, 0.00390625
          %v1659 = vmul.f32 %v1568, 0.00390625
          %v1660 = vmul.f32 %v1570, 0.00390625
          %v1661 = vmul.f32 %v1572, 0.00390625
          %v1662 = vmul.f32 %v1574, 0.00390625
          %v1663 = vmul.f32 %v1576, 0.00390625
          %v1664 = vmul.f32 %v1578, 0.00390625
          %v1665 = vmul.f32 %v1580, 0.00390625
          %v1666 = vmul.f32 %v1582, 0.00390625
          %v1667 = vmul.f32 %v1584, 0.00390625
          %v1668 = vmul.f32 %v1586, 0.00390625
          %v1669 = vmul.f32 %v1588, 0.00390625
          %v1670 = vmul.f32 %v1590, 0.00390625
          %v1671 = vmul.f32 %v1592, 0.00390625
          %v1672 = vmul.f32 %v1594, 0.00390625
          %v1673 = vmul.f32 %v1596, 0.00390625
          %v1674 = vmul.f32 %v1598, 0.00390625
          %v1675 = vmul.f32 %v1600, 0.00390625
          %v1676 = vmul.f32 %v1602, 0.00390625
          %v1677 = vmul.f32 %v1604, 0.00390625
          %v1678 = vmul.f32 %v1606, 0.00390625
          %v1679 = vmul.f32 %v1608, 0.00390625
          %v1680 = vmul.f32 %v1610, 0.00390625
          %v1681 = vmul.f32 %v1612, 0.00390625
          %v1682 = vmul.f32 %v1614, 0.00390625
          %v1683 = vmul.f32 %v1616, 0.00390625
          %v1684 = vmul.f32 %v1618, 0.00390625
          %v1685 = vmul.f32 %v1620, 0.00390625
          %v1686 = vmul.f32 %v1622, 0.00390625
          %v1687 = vadd.f32 %v1304, %v1623
          %v1688 = vadd.f32 %v1306, %v1624
          %v1689 = vadd.f32 %v1308, %v1625
          %v1690 = vadd.f32 %v1310, %v1626
          %v1691 = vadd.f32 %v1312, %v1627
          %v1692 = vadd.f32 %v1314, %v1628
          %v1693 = vadd.f32 %v1316, %v1629
          %v1694 = vadd.f32 %v1318, %v1630
          %v1695 = vadd.f32 %v1320, %v1631
          %v1696 = vadd.f32 %v1322, %v1632
          %v1697 = vadd.f32 %v1324, %v1633
          %v1698 = vadd.f32 %v1326, %v1634
          %v1699 = vadd.f32 %v1328, %v1635
          %v1700 = vadd.f32 %v1330, %v1636
          %v1701 = vadd.f32 %v1332, %v1637
          %v1702 = vadd.f32 %v1334, %v1638
          %v1703 = vadd.f32 %v1336, %v1639
          %v1704 = vadd.f32 %v1338, %v1640
          %v1705 = vadd.f32 %v1340, %v1641
          %v1706 = vadd.f32 %v1342, %v1642
          %v1707 = vadd.f32 %v1344, %v1643
          %v1708 = vadd.f32 %v1346, %v1644
          %v1709 = vadd.f32 %v1348, %v1645
          %v1710 = vadd.f32 %v1350, %v1646
          %v1711 = vadd.f32 %v1352, %v1647
          %v1712 = vadd.f32 %v1354, %v1648
          %v1713 = vadd.f32 %v1356, %v1649
          %v1714 = vadd.f32 %v1358, %v1650
          %v1715 = vadd.f32 %v1360, %v1651
          %v1716 = vadd.f32 %v1362, %v1652
          %v1717 = vadd.f32 %v1364, %v1653
          %v1718 = vadd.f32 %v1366, %v1654
          %v1719 = vadd.f32 %v1368, %v1655
          %v1720 = vadd.f32 %v1370, %v1656
          %v1721 = vadd.f32 %v1372, %v1657
          %v1722 = vadd.f32 %v1374, %v1658
          %v1723 = vadd.f32 %v1376, %v1659
          %v1724 = vadd.f32 %v1378, %v1660
          %v1725 = vadd.f32 %v1380, %v1661
          %v1726 = vadd.f32 %v1382, %v1662
          %v1727 = vadd.f32 %v1384, %v1663
          %v1728 = vadd.f32 %v1386, %v1664
          %v1729 = vadd.f32 %v1388, %v1665
          %v1730 = vadd.f32 %v1390, %v1666
          %v1731 = vadd.f32 %v1392, %v1667
          %v1732 = vadd.f32 %v1394, %v1668
          %v1733 = vadd.f32 %v1396, %v1669
          %v1734 = vadd.f32 %v1398, %v1670
          %v1735 = vadd.f32 %v1400, %v1671
          %v1736 = vadd.f32 %v1402, %v1672
          %v1737 = vadd.f32 %v1404, %v1673
          %v1738 = vadd.f32 %v1406, %v1674
          %v1739 = vadd.f32 %v1408, %v1675
          %v1740 = vadd.f32 %v1410, %v1676
          %v1741 = vadd.f32 %v1412, %v1677
          %v1742 = vadd.f32 %v1414, %v1678
          %v1743 = vadd.f32 %v1416, %v1679
          %v1744 = vadd.f32 %v1418, %v1680
          %v1745 = vadd.f32 %v1420, %v1681
          %v1746 = vadd.f32 %v1422, %v1682
          %v1747 = vadd.f32 %v1424, %v1683
          %v1748 = vadd.f32 %v1426, %v1684
          %v1749 = vadd.f32 %v1428, %v1685
          %v1750 = vadd.f32 %v1430, %v1686
          %v1751 = vld [vmem:[%s1] sm:$0xff]
          %v1752 = vld [vmem:[%s1 + $0x8] sm:$0xff]
          %v1753 = vld [vmem:[%s1 + $0x10] sm:$0xff]
          %v1754 = vld [vmem:[%s1 + $0x18] sm:$0xff]
          %v1755 = vld [vmem:[%s1 + $0x20] sm:$0xff]
          %v1756 = vld [vmem:[%s1 + $0x28] sm:$0xff]
          %v1757 = vld [vmem:[%s1 + $0x30] sm:$0xff]
          %v1758 = vld [vmem:[%s1 + $0x38] sm:$0xff]
          %v1759 = vld [vmem:[%s2] sm:$0x1]
          %v1761 = vlaneseq
          %v1762 = vshrl.u32 %v1761, 7
          %v1763 = vsub.s32 0, %v1762
          %v1764 = vrot.slane %v1759, %v1763
          %v1830 = vlaneseq
          %v1831 = vand.u32 %v1830, 127
          %v1832 = vlaneseq
          %v1833 = vshrl.u32 %v1832, 7
          %v1834 = vsub.s32 %v1831, %v1833
          %v1835 = vrot.slane %v1687, %v1834
          %v1836 = vadd.s32 %v1831, 4294967288
          %v1837 = vlaneseq
          %v1838 = vshrl.u32 %v1837, 7
          %v1839 = vsub.s32 %v1836, %v1838
          %v1840 = vrot.slane %v1688, %v1839
          %vm1841 = vcmask 130112
          %v1842 = vsel %vm1841, %v1840, %v1835
          %v1843 = vadd.s32 %v1831, 4294967280
          %v1844 = vlaneseq
          %v1845 = vshrl.u32 %v1844, 7
          %v1846 = vsub.s32 %v1843, %v1845
          %v1847 = vrot.slane %v1689, %v1846
          %vm1848 = vcmask 195712
          %v1849 = vsel %vm1848, %v1847, %v1842
          %v1850 = vadd.s32 %v1831, 4294967272
          %v1851 = vlaneseq
          %v1852 = vshrl.u32 %v1851, 7
          %v1853 = vsub.s32 %v1850, %v1852
          %v1854 = vrot.slane %v1690, %v1853
          %vm1855 = vcmask 261312
          %v1856 = vsel %vm1855, %v1854, %v1849
          %v1857 = vadd.s32 %v1831, 4294967264
          %v1858 = vlaneseq
          %v1859 = vshrl.u32 %v1858, 7
          %v1860 = vsub.s32 %v1857, %v1859
          %v1861 = vrot.slane %v1691, %v1860
          %vm1862 = vcmask 326912
          %v1863 = vsel %vm1862, %v1861, %v1856
          %v1864 = vadd.s32 %v1831, 4294967256
          %v1865 = vlaneseq
          %v1866 = vshrl.u32 %v1865, 7
          %v1867 = vsub.s32 %v1864, %v1866
          %v1868 = vrot.slane %v1692, %v1867
          %vm1869 = vcmask 392512
          %v1870 = vsel %vm1869, %v1868, %v1863
          %v1871 = vadd.s32 %v1831, 4294967248
          %v1872 = vlaneseq
          %v1873 = vshrl.u32 %v1872, 7
          %v1874 = vsub.s32 %v1871, %v1873
          %v1875 = vrot.slane %v1693, %v1874
          %vm1876 = vcmask 458112
          %v1877 = vsel %vm1876, %v1875, %v1870
          %v1878 = vadd.s32 %v1831, 4294967240
          %v1879 = vlaneseq
          %v1880 = vshrl.u32 %v1879, 7
          %v1881 = vsub.s32 %v1878, %v1880
          %v1882 = vrot.slane %v1694, %v1881
          %vm1883 = vcmask 523712
          %v1884 = vsel %vm1883, %v1882, %v1877
          %v1885 = vlaneseq
          %v1886 = vshrl.u32 %v1885, 7
          %v1887 = vsub.s32 %v1831, %v1886
          %v1888 = vrot.slane %v1695, %v1887
          %v1889 = vlaneseq
          %v1890 = vshrl.u32 %v1889, 7
          %v1891 = vsub.s32 %v1836, %v1890
          %v1892 = vrot.slane %v1696, %v1891
          %v1893 = vsel %vm1841, %v1892, %v1888
          %v1894 = vlaneseq
          %v1895 = vshrl.u32 %v1894, 7
          %v1896 = vsub.s32 %v1843, %v1895
          %v1897 = vrot.slane %v1697, %v1896
          %v1898 = vsel %vm1848, %v1897, %v1893
          %v1899 = vlaneseq
          %v1900 = vshrl.u32 %v1899, 7
          %v1901 = vsub.s32 %v1850, %v1900
          %v1902 = vrot.slane %v1698, %v1901
          %v1903 = vsel %vm1855, %v1902, %v1898
          %v1904 = vlaneseq
          %v1905 = vshrl.u32 %v1904, 7
          %v1906 = vsub.s32 %v1857, %v1905
          %v1907 = vrot.slane %v1699, %v1906
          %v1908 = vsel %vm1862, %v1907, %v1903
          %v1909 = vlaneseq
          %v1910 = vshrl.u32 %v1909, 7
          %v1911 = vsub.s32 %v1864, %v1910
          %v1912 = vrot.slane %v1700, %v1911
          %v1913 = vsel %vm1869, %v1912, %v1908
          %v1914 = vlaneseq
          %v1915 = vshrl.u32 %v1914, 7
          %v1916 = vsub.s32 %v1871, %v1915
          %v1917 = vrot.slane %v1701, %v1916
          %v1918 = vsel %vm1876, %v1917, %v1913
          %v1919 = vlaneseq
          %v1920 = vshrl.u32 %v1919, 7
          %v1921 = vsub.s32 %v1878, %v1920
          %v1922 = vrot.slane %v1702, %v1921
          %v1923 = vsel %vm1883, %v1922, %v1918
          %v1924 = vlaneseq
          %v1925 = vshrl.u32 %v1924, 7
          %v1926 = vsub.s32 %v1831, %v1925
          %v1927 = vrot.slane %v1703, %v1926
          %v1928 = vlaneseq
          %v1929 = vshrl.u32 %v1928, 7
          %v1930 = vsub.s32 %v1836, %v1929
          %v1931 = vrot.slane %v1704, %v1930
          %v1932 = vsel %vm1841, %v1931, %v1927
          %v1933 = vlaneseq
          %v1934 = vshrl.u32 %v1933, 7
          %v1935 = vsub.s32 %v1843, %v1934
          %v1936 = vrot.slane %v1705, %v1935
          %v1937 = vsel %vm1848, %v1936, %v1932
          %v1938 = vlaneseq
          %v1939 = vshrl.u32 %v1938, 7
          %v1940 = vsub.s32 %v1850, %v1939
          %v1941 = vrot.slane %v1706, %v1940
          %v1942 = vsel %vm1855, %v1941, %v1937
          %v1943 = vlaneseq
          %v1944 = vshrl.u32 %v1943, 7
          %v1945 = vsub.s32 %v1857, %v1944
          %v1946 = vrot.slane %v1707, %v1945
          %v1947 = vsel %vm1862, %v1946, %v1942
          %v1948 = vlaneseq
          %v1949 = vshrl.u32 %v1948, 7
          %v1950 = vsub.s32 %v1864, %v1949
          %v1951 = vrot.slane %v1708, %v1950
          %v1952 = vsel %vm1869, %v1951, %v1947
          %v1953 = vlaneseq
          %v1954 = vshrl.u32 %v1953, 7
          %v1955 = vsub.s32 %v1871, %v1954
          %v1956 = vrot.slane %v1709, %v1955
          %v1957 = vsel %vm1876, %v1956, %v1952
          %v1958 = vlaneseq
          %v1959 = vshrl.u32 %v1958, 7
          %v1960 = vsub.s32 %v1878, %v1959
          %v1961 = vrot.slane %v1710, %v1960
          %v1962 = vsel %vm1883, %v1961, %v1957
          %v1963 = vlaneseq
          %v1964 = vshrl.u32 %v1963, 7
          %v1965 = vsub.s32 %v1831, %v1964
          %v1966 = vrot.slane %v1711, %v1965
          %v1967 = vlaneseq
          %v1968 = vshrl.u32 %v1967, 7
          %v1969 = vsub.s32 %v1836, %v1968
          %v1970 = vrot.slane %v1712, %v1969
          %v1971 = vsel %vm1841, %v1970, %v1966
          %v1972 = vlaneseq
          %v1973 = vshrl.u32 %v1972, 7
          %v1974 = vsub.s32 %v1843, %v1973
          %v1975 = vrot.slane %v1713, %v1974
          %v1976 = vsel %vm1848, %v1975, %v1971
          %v1977 = vlaneseq
          %v1978 = vshrl.u32 %v1977, 7
          %v1979 = vsub.s32 %v1850, %v1978
          %v1980 = vrot.slane %v1714, %v1979
          %v1981 = vsel %vm1855, %v1980, %v1976
          %v1982 = vlaneseq
          %v1983 = vshrl.u32 %v1982, 7
          %v1984 = vsub.s32 %v1857, %v1983
          %v1985 = vrot.slane %v1715, %v1984
          %v1986 = vsel %vm1862, %v1985, %v1981
          %v1987 = vlaneseq
          %v1988 = vshrl.u32 %v1987, 7
          %v1989 = vsub.s32 %v1864, %v1988
          %v1990 = vrot.slane %v1716, %v1989
          %v1991 = vsel %vm1869, %v1990, %v1986
          %v1992 = vlaneseq
          %v1993 = vshrl.u32 %v1992, 7
          %v1994 = vsub.s32 %v1871, %v1993
          %v1995 = vrot.slane %v1717, %v1994
          %v1996 = vsel %vm1876, %v1995, %v1991
          %v1997 = vlaneseq
          %v1998 = vshrl.u32 %v1997, 7
          %v1999 = vsub.s32 %v1878, %v1998
          %v2000 = vrot.slane %v1718, %v1999
          %v2001 = vsel %vm1883, %v2000, %v1996
          %v2002 = vlaneseq
          %v2003 = vshrl.u32 %v2002, 7
          %v2004 = vsub.s32 %v1831, %v2003
          %v2005 = vrot.slane %v1719, %v2004
          %v2006 = vlaneseq
          %v2007 = vshrl.u32 %v2006, 7
          %v2008 = vsub.s32 %v1836, %v2007
          %v2009 = vrot.slane %v1720, %v2008
          %v2010 = vsel %vm1841, %v2009, %v2005
          %v2011 = vlaneseq
          %v2012 = vshrl.u32 %v2011, 7
          %v2013 = vsub.s32 %v1843, %v2012
          %v2014 = vrot.slane %v1721, %v2013
          %v2015 = vsel %vm1848, %v2014, %v2010
          %v2016 = vlaneseq
          %v2017 = vshrl.u32 %v2016, 7
          %v2018 = vsub.s32 %v1850, %v2017
          %v2019 = vrot.slane %v1722, %v2018
          %v2020 = vsel %vm1855, %v2019, %v2015
          %v2021 = vlaneseq
          %v2022 = vshrl.u32 %v2021, 7
          %v2023 = vsub.s32 %v1857, %v2022
          %v2024 = vrot.slane %v1723, %v2023
          %v2025 = vsel %vm1862, %v2024, %v2020
          %v2026 = vlaneseq
          %v2027 = vshrl.u32 %v2026, 7
          %v2028 = vsub.s32 %v1864, %v2027
          %v2029 = vrot.slane %v1724, %v2028
          %v2030 = vsel %vm1869, %v2029, %v2025
          %v2031 = vlaneseq
          %v2032 = vshrl.u32 %v2031, 7
          %v2033 = vsub.s32 %v1871, %v2032
          %v2034 = vrot.slane %v1725, %v2033
          %v2035 = vsel %vm1876, %v2034, %v2030
          %v2036 = vlaneseq
          %v2037 = vshrl.u32 %v2036, 7
          %v2038 = vsub.s32 %v1878, %v2037
          %v2039 = vrot.slane %v1726, %v2038
          %v2040 = vsel %vm1883, %v2039, %v2035
          %v2041 = vlaneseq
          %v2042 = vshrl.u32 %v2041, 7
          %v2043 = vsub.s32 %v1831, %v2042
          %v2044 = vrot.slane %v1727, %v2043
          %v2045 = vlaneseq
          %v2046 = vshrl.u32 %v2045, 7
          %v2047 = vsub.s32 %v1836, %v2046
          %v2048 = vrot.slane %v1728, %v2047
          %v2049 = vsel %vm1841, %v2048, %v2044
          %v2050 = vlaneseq
          %v2051 = vshrl.u32 %v2050, 7
          %v2052 = vsub.s32 %v1843, %v2051
          %v2053 = vrot.slane %v1729, %v2052
          %v2054 = vsel %vm1848, %v2053, %v2049
          %v2055 = vlaneseq
          %v2056 = vshrl.u32 %v2055, 7
          %v2057 = vsub.s32 %v1850, %v2056
          %v2058 = vrot.slane %v1730, %v2057
          %v2059 = vsel %vm1855, %v2058, %v2054
          %v2060 = vlaneseq
          %v2061 = vshrl.u32 %v2060, 7
          %v2062 = vsub.s32 %v1857, %v2061
          %v2063 = vrot.slane %v1731, %v2062
          %v2064 = vsel %vm1862, %v2063, %v2059
          %v2065 = vlaneseq
          %v2066 = vshrl.u32 %v2065, 7
          %v2067 = vsub.s32 %v1864, %v2066
          %v2068 = vrot.slane %v1732, %v2067
          %v2069 = vsel %vm1869, %v2068, %v2064
          %v2070 = vlaneseq
          %v2071 = vshrl.u32 %v2070, 7
          %v2072 = vsub.s32 %v1871, %v2071
          %v2073 = vrot.slane %v1733, %v2072
          %v2074 = vsel %vm1876, %v2073, %v2069
          %v2075 = vlaneseq
          %v2076 = vshrl.u32 %v2075, 7
          %v2077 = vsub.s32 %v1878, %v2076
          %v2078 = vrot.slane %v1734, %v2077
          %v2079 = vsel %vm1883, %v2078, %v2074
          %v2080 = vlaneseq
          %v2081 = vshrl.u32 %v2080, 7
          %v2082 = vsub.s32 %v1831, %v2081
          %v2083 = vrot.slane %v1735, %v2082
          %v2084 = vlaneseq
          %v2085 = vshrl.u32 %v2084, 7
          %v2086 = vsub.s32 %v1836, %v2085
          %v2087 = vrot.slane %v1736, %v2086
          %v2088 = vsel %vm1841, %v2087, %v2083
          %v2089 = vlaneseq
          %v2090 = vshrl.u32 %v2089, 7
          %v2091 = vsub.s32 %v1843, %v2090
          %v2092 = vrot.slane %v1737, %v2091
          %v2093 = vsel %vm1848, %v2092, %v2088
          %v2094 = vlaneseq
          %v2095 = vshrl.u32 %v2094, 7
          %v2096 = vsub.s32 %v1850, %v2095
          %v2097 = vrot.slane %v1738, %v2096
          %v2098 = vsel %vm1855, %v2097, %v2093
          %v2099 = vlaneseq
          %v2100 = vshrl.u32 %v2099, 7
          %v2101 = vsub.s32 %v1857, %v2100
          %v2102 = vrot.slane %v1739, %v2101
          %v2103 = vsel %vm1862, %v2102, %v2098
          %v2104 = vlaneseq
          %v2105 = vshrl.u32 %v2104, 7
          %v2106 = vsub.s32 %v1864, %v2105
          %v2107 = vrot.slane %v1740, %v2106
          %v2108 = vsel %vm1869, %v2107, %v2103
          %v2109 = vlaneseq
          %v2110 = vshrl.u32 %v2109, 7
          %v2111 = vsub.s32 %v1871, %v2110
          %v2112 = vrot.slane %v1741, %v2111
          %v2113 = vsel %vm1876, %v2112, %v2108
          %v2114 = vlaneseq
          %v2115 = vshrl.u32 %v2114, 7
          %v2116 = vsub.s32 %v1878, %v2115
          %v2117 = vrot.slane %v1742, %v2116
          %v2118 = vsel %vm1883, %v2117, %v2113
          %v2119 = vlaneseq
          %v2120 = vshrl.u32 %v2119, 7
          %v2121 = vsub.s32 %v1831, %v2120
          %v2122 = vrot.slane %v1743, %v2121
          %v2123 = vlaneseq
          %v2124 = vshrl.u32 %v2123, 7
          %v2125 = vsub.s32 %v1836, %v2124
          %v2126 = vrot.slane %v1744, %v2125
          %v2127 = vsel %vm1841, %v2126, %v2122
          %v2128 = vlaneseq
          %v2129 = vshrl.u32 %v2128, 7
          %v2130 = vsub.s32 %v1843, %v2129
          %v2131 = vrot.slane %v1745, %v2130
          %v2132 = vsel %vm1848, %v2131, %v2127
          %v2133 = vlaneseq
          %v2134 = vshrl.u32 %v2133, 7
          %v2135 = vsub.s32 %v1850, %v2134
          %v2136 = vrot.slane %v1746, %v2135
          %v2137 = vsel %vm1855, %v2136, %v2132
          %v2138 = vlaneseq
          %v2139 = vshrl.u32 %v2138, 7
          %v2140 = vsub.s32 %v1857, %v2139
          %v2141 = vrot.slane %v1747, %v2140
          %v2142 = vsel %vm1862, %v2141, %v2137
          %v2143 = vlaneseq
          %v2144 = vshrl.u32 %v2143, 7
          %v2145 = vsub.s32 %v1864, %v2144
          %v2146 = vrot.slane %v1748, %v2145
          %v2147 = vsel %vm1869, %v2146, %v2142
          %v2148 = vlaneseq
          %v2149 = vshrl.u32 %v2148, 7
          %v2150 = vsub.s32 %v1871, %v2149
          %v2151 = vrot.slane %v1749, %v2150
          %v2152 = vsel %vm1876, %v2151, %v2147
          %v2153 = vlaneseq
          %v2154 = vshrl.u32 %v2153, 7
          %v2155 = vsub.s32 %v1878, %v2154
          %v2156 = vrot.slane %v1750, %v2155
          %v2157 = vsel %vm1883, %v2156, %v2152
          %vm2158 = vcmask 1041409
          %v2159 = vsel %vm2158, %v1923, %v1884
          %vm2160 = vcmask 1042434
          %v2161 = vsel %vm2160, %v1962, %v2159
          %vm2162 = vcmask 1043459
          %v2163 = vsel %vm2162, %v2001, %v2161
          %vm2164 = vcmask 1044484
          %v2165 = vsel %vm2164, %v2040, %v2163
          %vm2166 = vcmask 1045509
          %v2167 = vsel %vm2166, %v2079, %v2165
          %vm2168 = vcmask 1046534
          %v2169 = vsel %vm2168, %v2118, %v2167
          %vm2170 = vcmask 1047559
          %v2171 = vsel %vm2170, %v2157, %v2169
          %vm2172 = vcmask 523264
          %v2173 = vsel %vm2172, %v2171, 0
          %2175 = vmatprep.subr.mxu0 0.0
          %2176 = vmatpush1.msra.mxu0 %v1751
          %2177 = vmatprep.subr.mxu0 0.0
          %2178 = vmatpush1.msra.mxu0 %v1752
          %2179 = vmatprep.subr.mxu0 0.0
          %2180 = vmatpush1.msra.mxu0 %v1753
          %2181 = vmatprep.subr.mxu0 0.0
          %2182 = vmatpush1.msra.mxu0 %v1754
          %2183 = vmatprep.subr.mxu0 0.0
          %2184 = vmatpush1.msra.mxu0 %v1755
          %2185 = vmatprep.subr.mxu0 0.0
          %2186 = vmatpush1.msra.mxu0 %v1756
          %2187 = vmatprep.subr.mxu0 0.0
          %2188 = vmatpush1.msra.mxu0 %v1757
          %2189 = vmatprep.subr.mxu0 0.0
          %2190 = vmatpush1.msra.mxu0 %v1758
          %2191 = vmatprep.subr.mxu0 0.0
          %2192 = vmatpush1.msra.mxu0 0.0
          %2193 = vmatprep.subr.mxu0 0.0
          %2194 = vmatpush1.msra.mxu0 0.0
          %2195 = vmatprep.subr.mxu0 0.0
          %2196 = vmatpush1.msra.mxu0 0.0
          %2197 = vmatprep.subr.mxu0 0.0
          %2198 = vmatpush1.msra.mxu0 0.0
          %2199 = vmatprep.subr.mxu0 0.0
          %2200 = vmatpush1.msra.mxu0 0.0
          %2201 = vmatprep.subr.mxu0 0.0
          %2202 = vmatpush1.msra.mxu0 0.0
          %2203 = vmatprep.subr.mxu0 0.0
          %2204 = vmatpush1.msra.mxu0 0.0
          %2205 = vmatprep.subr.mxu0 0.0
          %2206 = vmatpush1.msra.mxu0 0.0
          %2207 = vmatprep.subr.mxu0 0.0
          %2208 = vmatpush1.msra.mxu0 0.0
          %2209 = vmatprep.subr.mxu0 0.0
          %2210 = vmatpush1.msra.mxu0 0.0
          %2211 = vmatprep.subr.mxu0 0.0
          %2212 = vmatpush1.msra.mxu0 0.0
          %2213 = vmatprep.subr.mxu0 0.0
          %2214 = vmatpush1.msra.mxu0 0.0
          %2215 = vmatprep.subr.mxu0 0.0
          %2216 = vmatpush1.msra.mxu0 0.0
          %2217 = vmatprep.subr.mxu0 0.0
          %2218 = vmatpush1.msra.mxu0 0.0
          %2219 = vmatprep.subr.mxu0 0.0
          %2220 = vmatpush1.msra.mxu0 0.0
          %2221 = vmatprep.subr.mxu0 0.0
          %2222 = vmatpush1.msra.mxu0 0.0
          %2223 = vmatprep.subr.mxu0 0.0
          %2224 = vmatpush1.msra.mxu0 0.0
          %2225 = vmatprep.subr.mxu0 0.0
          %2226 = vmatpush1.msra.mxu0 0.0
          %2227 = vmatprep.subr.mxu0 0.0
          %2228 = vmatpush1.msra.mxu0 0.0
          %2229 = vmatprep.subr.mxu0 0.0
          %2230 = vmatpush1.msra.mxu0 0.0
          %2231 = vmatprep.subr.mxu0 0.0
          %2232 = vmatpush1.msra.mxu0 0.0
          %2233 = vmatprep.subr.mxu0 0.0
          %2234 = vmatpush1.msra.mxu0 0.0
          %2235 = vmatprep.subr.mxu0 0.0
          %2236 = vmatpush1.msra.mxu0 0.0
          %2237 = vmatprep.subr.mxu0 0.0
          %2238 = vmatpush1.msra.mxu0 0.0
          %2239 = vmatprep.mubr.f32.mxu0 0.0
          %2240 = vmatmul.mubr.f32.gmra.mrb[0].mxu0 %v2173
          %v2241 = vpop.f32.mrb[0].mxu0
          %v2242 = vadd.f32 %v1764, %v2241
          %v2243 = vpop.f32.mrb[0].mxu0
          %2244 = vdwg.mxu0
          %vm2245 = vcmp.ge.f32.partialorder %v2242, 0.0
          %v2246 = vmul.f32 %v2242, 0.2
          %v2247 = vsel %vm2245, %v2242, %v2246
          %v2248 = vmax.f32 %v2242, 0.0
          %v2249 = vand.u32 2147483647, %v2242
          %v2250 = vsub.f32 0.0, %v2249
          %v2251 = vmul.f32 %v2250, 1.442695
          %v2252 = vpow.pop %v2251
          %v2253 = vadd.f32 %v2252, 1.0
          %v2254 = vlog2.pop %v2253
          %v2255 = vmul.f32 %v2254, 0.6931472
          %v2256 = vmul.f32 -0.5, %v2252
          %v2257 = vadd.f32 %v2256, 1.0
          %v2258 = vmul.f32 %v2257, %v2252
          %v2259 = vand.u32 2147483647, %v2252
          %vm2260 = vcmp.lt.f32.partialorder %v2259, 0.0004427343
          %v2261 = vsel %vm2260, %v2258, %v2255
          %v2262 = vadd.f32 %v2248, %v2261
          %2264 = vrot.lane.b32.xlu0 %v2262, 112
          %v2265 = vpop.permute.xlu0 %2264
          %vm2267 = vcmask 130048
          %v2268 = vsel %vm2267, %v2265, 0.0
          %2269 = vadd.xlane.f32.xlu0 %v2268
          %v2270 = vpop.xlane.xlu0 %2269
          %v2271 = vrcp.pop 16.0
          %v2272 = vmul.f32 %v2270, %v2271
          %v2273 = vsub.f32 %v2262, %v2272
          %v2274 = vmul.f32 %v2273, %v2273
          %2276 = vrot.lane.b32.xlu0 %v2274, 112
          %v2277 = vpop.permute.xlu0 %2276
          %v2279 = vsel %vm2267, %v2277, 0.0
          %2280 = vadd.xlane.f32.xlu0 %v2279
          %v2281 = vpop.xlane.xlu0 %2280
          %v2282 = vmul.f32 %v2281, 0.06666667
          %v2283 = vrsqrt.pop %v2282
          %v2284 = vmul.f32 %v2273, %v2283
          %2286 = vrot.lane.b32.xlu0 %v2284, 112
          %v2287 = vpop.permute.xlu0 %2286
          %v2289 = vadd.f32 %v2247, %v2287
          %2291 = vset.pattern.permute.xlu0 0
          %2292 = vperm.xlu0 %2291, %v2289
          %v2293 = vpop.permute.xlu0 %2292
          %vm2295 = vcmp.gt.f32.partialorder %v2293, %v2289
          %vm2296 = vcmp.eq.f32.partialorder %v2293, %v2289
          %vm2297 = vcmp.gt.s32.totalorder %v1831, 0
          %vm2298 = vmand %vm2296, %vm2297
          %vm2299 = vmor %vm2295, %vm2298
          %v2300 = vsel %vm2299, 1, 0
          %v2301 = vcvt.s32.f32 %v2300
          %v2302 = vadd.f32 %v2301, 0.0
          %2303 = vset.pattern.permute.xlu0 1
          %2304 = vperm.xlu0 %2303, %v2289
          %v2305 = vpop.permute.xlu0 %2304
          %vm2307 = vcmp.gt.f32.partialorder %v2305, %v2289
          %vm2308 = vcmp.eq.f32.partialorder %v2305, %v2289
          %vm2309 = vcmp.gt.s32.totalorder %v1831, 1
          %vm2310 = vmand %vm2308, %vm2309
          %vm2311 = vmor %vm2307, %vm2310
          %v2312 = vsel %vm2311, 1, 0
          %v2313 = vcvt.s32.f32 %v2312
          %v2314 = vadd.f32 %v2302, %v2313
          %2315 = vset.pattern.permute.xlu0 2
          %2316 = vperm.xlu0 %2315, %v2289
          %v2317 = vpop.permute.xlu0 %2316
          %vm2319 = vcmp.gt.f32.partialorder %v2317, %v2289
          %vm2320 = vcmp.eq.f32.partialorder %v2317, %v2289
          %vm2321 = vcmp.gt.s32.totalorder %v1831, 2
          %vm2322 = vmand %vm2320, %vm2321
          %vm2323 = vmor %vm2319, %vm2322
          %v2324 = vsel %vm2323, 1, 0
          %v2325 = vcvt.s32.f32 %v2324
          %v2326 = vadd.f32 %v2314, %v2325
          %2327 = vset.pattern.permute.xlu0 3
          %2328 = vperm.xlu0 %2327, %v2289
          %v2329 = vpop.permute.xlu0 %2328
          %vm2331 = vcmp.gt.f32.partialorder %v2329, %v2289
          %vm2332 = vcmp.eq.f32.partialorder %v2329, %v2289
          %vm2333 = vcmp.gt.s32.totalorder %v1831, 3
          %vm2334 = vmand %vm2332, %vm2333
          %vm2335 = vmor %vm2331, %vm2334
          %v2336 = vsel %vm2335, 1, 0
          %v2337 = vcvt.s32.f32 %v2336
          %v2338 = vadd.f32 %v2326, %v2337
          %2339 = vset.pattern.permute.xlu0 4
          %2340 = vperm.xlu0 %2339, %v2289
          %v2341 = vpop.permute.xlu0 %2340
          %vm2343 = vcmp.gt.f32.partialorder %v2341, %v2289
          %vm2344 = vcmp.eq.f32.partialorder %v2341, %v2289
          %vm2345 = vcmp.gt.s32.totalorder %v1831, 4
          %vm2346 = vmand %vm2344, %vm2345
          %vm2347 = vmor %vm2343, %vm2346
          %v2348 = vsel %vm2347, 1, 0
          %v2349 = vcvt.s32.f32 %v2348
          %v2350 = vadd.f32 %v2338, %v2349
          %2351 = vset.pattern.permute.xlu0 5
          %2352 = vperm.xlu0 %2351, %v2289
          %v2353 = vpop.permute.xlu0 %2352
          %vm2355 = vcmp.gt.f32.partialorder %v2353, %v2289
          %vm2356 = vcmp.eq.f32.partialorder %v2353, %v2289
          %vm2357 = vcmp.gt.s32.totalorder %v1831, 5
          %vm2358 = vmand %vm2356, %vm2357
          %vm2359 = vmor %vm2355, %vm2358
          %v2360 = vsel %vm2359, 1, 0
          %v2361 = vcvt.s32.f32 %v2360
          %v2362 = vadd.f32 %v2350, %v2361
          %2363 = vset.pattern.permute.xlu0 6
          %2364 = vperm.xlu0 %2363, %v2289
          %v2365 = vpop.permute.xlu0 %2364
          %vm2367 = vcmp.gt.f32.partialorder %v2365, %v2289
          %vm2368 = vcmp.eq.f32.partialorder %v2365, %v2289
          %vm2369 = vcmp.gt.s32.totalorder %v1831, 6
          %vm2370 = vmand %vm2368, %vm2369
          %vm2371 = vmor %vm2367, %vm2370
          %v2372 = vsel %vm2371, 1, 0
          %v2373 = vcvt.s32.f32 %v2372
          %v2374 = vadd.f32 %v2362, %v2373
          %2375 = vset.pattern.permute.xlu0 7
          %2376 = vperm.xlu0 %2375, %v2289
          %v2377 = vpop.permute.xlu0 %2376
          %vm2379 = vcmp.gt.f32.partialorder %v2377, %v2289
          %vm2380 = vcmp.eq.f32.partialorder %v2377, %v2289
          %vm2381 = vcmp.gt.s32.totalorder %v1831, 7
          %vm2382 = vmand %vm2380, %vm2381
          %vm2383 = vmor %vm2379, %vm2382
          %v2384 = vsel %vm2383, 1, 0
          %v2385 = vcvt.s32.f32 %v2384
          %v2386 = vadd.f32 %v2374, %v2385
          %2387 = vset.pattern.permute.xlu0 8
          %2388 = vperm.xlu0 %2387, %v2289
          %v2389 = vpop.permute.xlu0 %2388
          %vm2391 = vcmp.gt.f32.partialorder %v2389, %v2289
          %vm2392 = vcmp.eq.f32.partialorder %v2389, %v2289
          %vm2393 = vcmp.gt.s32.totalorder %v1831, 8
          %vm2394 = vmand %vm2392, %vm2393
          %vm2395 = vmor %vm2391, %vm2394
          %v2396 = vsel %vm2395, 1, 0
          %v2397 = vcvt.s32.f32 %v2396
          %v2398 = vadd.f32 %v2386, %v2397
          %2399 = vset.pattern.permute.xlu0 9
          %2400 = vperm.xlu0 %2399, %v2289
          %v2401 = vpop.permute.xlu0 %2400
          %vm2403 = vcmp.gt.f32.partialorder %v2401, %v2289
          %vm2404 = vcmp.eq.f32.partialorder %v2401, %v2289
          %vm2405 = vcmp.gt.s32.totalorder %v1831, 9
          %vm2406 = vmand %vm2404, %vm2405
          %vm2407 = vmor %vm2403, %vm2406
          %v2408 = vsel %vm2407, 1, 0
          %v2409 = vcvt.s32.f32 %v2408
          %v2410 = vadd.f32 %v2398, %v2409
          %2411 = vset.pattern.permute.xlu0 10
          %2412 = vperm.xlu0 %2411, %v2289
          %v2413 = vpop.permute.xlu0 %2412
          %vm2415 = vcmp.gt.f32.partialorder %v2413, %v2289
          %vm2416 = vcmp.eq.f32.partialorder %v2413, %v2289
          %vm2417 = vcmp.gt.s32.totalorder %v1831, 10
          %vm2418 = vmand %vm2416, %vm2417
          %vm2419 = vmor %vm2415, %vm2418
          %v2420 = vsel %vm2419, 1, 0
          %v2421 = vcvt.s32.f32 %v2420
          %v2422 = vadd.f32 %v2410, %v2421
          %2423 = vset.pattern.permute.xlu0 11
          %2424 = vperm.xlu0 %2423, %v2289
          %v2425 = vpop.permute.xlu0 %2424
          %vm2427 = vcmp.gt.f32.partialorder %v2425, %v2289
          %vm2428 = vcmp.eq.f32.partialorder %v2425, %v2289
          %vm2429 = vcmp.gt.s32.totalorder %v1831, 11
          %vm2430 = vmand %vm2428, %vm2429
          %vm2431 = vmor %vm2427, %vm2430
          %v2432 = vsel %vm2431, 1, 0
          %v2433 = vcvt.s32.f32 %v2432
          %v2434 = vadd.f32 %v2422, %v2433
          %2435 = vset.pattern.permute.xlu0 12
          %2436 = vperm.xlu0 %2435, %v2289
          %v2437 = vpop.permute.xlu0 %2436
          %vm2439 = vcmp.gt.f32.partialorder %v2437, %v2289
          %vm2440 = vcmp.eq.f32.partialorder %v2437, %v2289
          %vm2441 = vcmp.gt.s32.totalorder %v1831, 12
          %vm2442 = vmand %vm2440, %vm2441
          %vm2443 = vmor %vm2439, %vm2442
          %v2444 = vsel %vm2443, 1, 0
          %v2445 = vcvt.s32.f32 %v2444
          %v2446 = vadd.f32 %v2434, %v2445
          %2447 = vset.pattern.permute.xlu0 13
          %2448 = vperm.xlu0 %2447, %v2289
          %v2449 = vpop.permute.xlu0 %2448
          %vm2451 = vcmp.gt.f32.partialorder %v2449, %v2289
          %vm2452 = vcmp.eq.f32.partialorder %v2449, %v2289
          %vm2453 = vcmp.gt.s32.totalorder %v1831, 13
          %vm2454 = vmand %vm2452, %vm2453
          %vm2455 = vmor %vm2451, %vm2454
          %v2456 = vsel %vm2455, 1, 0
          %v2457 = vcvt.s32.f32 %v2456
          %v2458 = vadd.f32 %v2446, %v2457
          %2459 = vset.pattern.permute.xlu0 14
          %2460 = vperm.xlu0 %2459, %v2289
          %v2461 = vpop.permute.xlu0 %2460
          %vm2463 = vcmp.gt.f32.partialorder %v2461, %v2289
          %vm2464 = vcmp.eq.f32.partialorder %v2461, %v2289
          %vm2465 = vcmp.gt.s32.totalorder %v1831, 14
          %vm2466 = vmand %vm2464, %vm2465
          %vm2467 = vmor %vm2463, %vm2466
          %v2468 = vsel %vm2467, 1, 0
          %v2469 = vcvt.s32.f32 %v2468
          %v2470 = vadd.f32 %v2458, %v2469
          %2471 = vset.pattern.permute.xlu0 15
          %2472 = vperm.xlu0 %2471, %v2289
          %v2473 = vpop.permute.xlu0 %2472
          %vm2475 = vcmp.gt.f32.partialorder %v2473, %v2289
          %vm2476 = vcmp.eq.f32.partialorder %v2473, %v2289
          %vm2477 = vcmp.gt.s32.totalorder %v1831, 15
          %vm2478 = vmand %vm2476, %vm2477
          %vm2479 = vmor %vm2475, %vm2478
          %v2480 = vsel %vm2479, 1, 0
          %v2481 = vcvt.s32.f32 %v2480
          %v2482 = vadd.f32 %v2470, %v2481
          %vm2483 = vcmp.lt.f32.partialorder %v2482, 4.0
          %v2484 = vsel %vm2483, %v2247, -inf
          %v2485 = vsel %vm2267, %v2484, -inf
          %2486 = vmax.xlane.f32.xlu0 %v2485
          %v2487 = vpop.xlane.xlu0 %2486
          %v2488 = vsub.f32 %v2484, %v2487
          %v2489 = vmul.f32 %v2488, 1.442695
          %v2490 = vpow.pop %v2489
          %v2491 = vsel %vm2267, %v2490, 0.0
          %2492 = vadd.xlane.f32.xlu0 %v2491
          %v2493 = vpop.xlane.xlu0 %2492
          %v2494 = vrcp.pop %v2493
          %v2495 = vmul.f32 %v2490, %v2494
          %2496 = vst.msk [vmem:[%s205] sm:$0xff] %vm2267, %v2495
        $region44: #{tpu_custom_call.1} parent=31 // pred_fallthru
          _
        %s2497 = sand.u32 %s110, 1
        %s2498 = scalar_lea.sflag [#allocation6], %s2497
        %s2499 = sand.u32 %s110, 1
        %s2500 = smul.addr %s2499, 8
        %s2501 = scalar_lea.vmem [#allocation7], %s2500
        // Predicated region
        $region45: #{tpu_custom_call.1} parent=31 // pred_check
          %p2502 = pneg %p120
        $region46: #{tpu_custom_call.1} parent=31 // pred_check_branch
          %2504 = sbr.rel (%p2502) target = $region48
        $region47: #{tpu_custom_call.1} parent=31 // pred_region
          %s2506 = ssub.s32 128, 128
          %2507 = vsyncadd %s2498, %s2506
          %s2508 = smul.addr %s24, 128
          %s2509 = scalar_lea.hbm %s3, %s2508
          %s2511 = sshll.u32 %s2501, 4
          %s2512 = int_to_ptr.vmem [resolvable:$true] %s2511
          %2514 = dma.vmem_to_hbm [thread:$0]  %s2512, 128, %s2509, %s2498
        $region48: #{tpu_custom_call.1} parent=31 // pred_fallthru
          _
      $region32: #{tpu_custom_call.1} parent=5 // pred_fallthru
        _
      %p2515 = scmp.le.s32.totalorder 2, %s15
      // Predicated region
      $region49: #{tpu_custom_call.1} parent=5 // pred_check
        %p2516 = pneg %p2515
      $region50: #{tpu_custom_call.1} parent=5 // pred_check_branch
        %2518 = sbr.rel (%p2516) target = $region52
      $region51: #{tpu_custom_call.1} parent=5 // pred_region
        %s2519 = ssub.s32 %s15, 2
        // Predicated region
        $region53: #{tpu_custom_call.1} parent=51 // pred_check
          %p2520 = pneg %p126
        $region54: #{tpu_custom_call.1} parent=51 // pred_check_branch
          %2522 = sbr.rel (%p2520) target = $region56
        $region55: #{tpu_custom_call.1} parent=51 // pred_region
          %s2523 = sand.u32 %s111, 1
          %s2524 = scalar_lea.sflag [#allocation6], %s2523
          %s2525 = sand.u32 %s111, 1
          %s2526 = smul.addr %s2525, 8
          %s2527 = scalar_lea.vmem [#allocation7], %s2526
          %2528 = dma.done %s2524, 128
        $region56: #{tpu_custom_call.1} parent=51 // pred_fallthru
          _
      $region52: #{tpu_custom_call.1} parent=5 // pred_fallthru
        _
    $region6: #{tpu_custom_call.1} parent=1 // loop_footer
      %s19 = sadd.s32 1, %s15
    $region7: #{tpu_custom_call.1} parent=1 // loop_footer_branch
      %14 = sbr.rel target = $region3
    $region8: #{tpu_custom_call.1} parent=1 // loop_exit
      _
    %2529 = vsyncpa [#allocation5], 1
    %s2530 = scalar_lea.sflag [#allocation5], 1
    %2531 = vsyncpa %s2530, 1
    %2532 = vsyncpa [#allocation6], 1
    %s2533 = scalar_lea.sflag [#allocation6], 1
    %2534 = vsyncpa %s2533, 1

</llo_original>
